<compile_context>
chip_gen: v6e
topology: v6e:2x2x1
jax: 0.10.0
libtpu: 0.0.40
codegen_flags: <defaults>
</compile_context>

<pallas_src>
import jax
import jax.numpy as jnp
from jax.experimental import pallas as pl
from jax.experimental.pallas import tpu as pltpu


def _fused_nodeflow_kernel(a0_ref, inv0_ref, a1_ref, inv1_ref, x_ref,
                           h1_ref, h2_ref):
    """Both NodeFlow block_compute layers in one VMEM-resident step."""
    # Block 0: h = mailbox['m'].mean(dim=1) over sampled in-neighbors of 'features'.
    # int8 counts -> f32 on the VPU, MXU dot with f32 accumulation, exact 1/deg scale.
    h1 = jnp.dot(a0_ref[...].astype(jnp.float32), x_ref[...],
                 preferred_element_type=jnp.float32) * inv0_ref[...]
    h1_ref[...] = h1

    # Block 1: h2 = mailbox['m'].mean(dim=1) over sampled in-neighbors of 'h'.
    # H1 is consumed straight from VMEM -- no HBM round trip between the two blocks.
    h2_ref[...] = jnp.dot(a1_ref[...].astype(jnp.float32), h1,
                          preferred_element_type=jnp.float32) * inv1_ref[...]


@jax.jit
def nodeflow_forward(a0_counts, inv_deg0, a1_counts, inv_deg1, x):
    """Runs both nf.block_compute layers (copy_src + mailbox mean) fused.

    a0_counts: [N1, N0] int8 neighbor counts of block 0
    inv_deg0:  [N1, 1]  f32 inverse in-degree of block 0
    a1_counts: [N2, N1] int8 neighbor counts of block 1
    inv_deg1:  [N2, 1]  f32 inverse in-degree of block 1
    x:         [N0, F]  f32 layer-0 node 'features'
    returns:   (h [N1, F], h2 [N2, F]) float32
    """
    n1, n0 = a0_counts.shape
    n2, n1b = a1_counts.shape
    n0b, f = x.shape
    assert n0 == n0b and n1 == n1b
    assert inv_deg0.shape == (n1, 1) and inv_deg1.shape == (n2, 1)

    # VMEM budget derived from the real footprint (I/O double-buffered by the
    # pipeline + in-kernel f32 upcasts of the int8 adjacencies), capped for v7x.
    io_bytes = (a0_counts.size * a0_counts.dtype.itemsize
                + a1_counts.size * a1_counts.dtype.itemsize
                + inv_deg0.size * 4 + inv_deg1.size * 4
                + x.size * 4 + n1 * f * 4 + n2 * f * 4)
    upcast_bytes = (a0_counts.size + a1_counts.size) * 4
    footprint = io_bytes + upcast_bytes
    assert footprint < 24 * 1024 * 1024, (
        "working set too large for the fused whole-in-VMEM kernel; "
        "see TODO(synk) about the scalar-prefetched gather / tiled variant")
    vmem_budget = min(max(2 * io_bytes + upcast_bytes + (8 << 20), 16 << 20),
                      32 << 20)

    full = lambda shape: pl.BlockSpec(shape, lambda i, _s=shape: (0,) * len(_s))

    h1, h2 = pl.pallas_call(
        _fused_nodeflow_kernel,
        out_shape=(jax.ShapeDtypeStruct((n1, f), jnp.float32),
                   jax.ShapeDtypeStruct((n2, f), jnp.float32)),
        grid=(1,),
        in_specs=[full(a0_counts.shape), full(inv_deg0.shape),
                  full(a1_counts.shape), full(inv_deg1.shape),
                  full(x.shape)],
        out_specs=(full((n1, f)), full((n2, f))),
        compiler_params=pltpu.CompilerParams(
            dimension_semantics=("arbitrary",),
            vmem_limit_bytes=vmem_budget,
        ),
    )(a0_counts, inv_deg0, a1_counts, inv_deg1, x)
    return h1, h2


def _build_block_adjacency(key, num_dst, num_src, fanout):
    """Deterministic sampled-neighbor block (like a DGL NodeFlow block).

    Returns (int8 neighbor-count adjacency C, f32 inverse in-degree) so that
    (C.astype(f32) @ X) * inv_deg == mailbox['m'].mean(dim=1) exactly.
    """
    nbr = jax.random.randint(key, (num_dst, fanout), 0, num_src)
    counts = jnp.zeros((num_dst, num_src), jnp.int32)
    rows = jnp.repeat(jnp.arange(num_dst), fanout)
    counts = counts.at[rows, nbr.reshape(-1)].add(1)
    deg = jnp.maximum(counts.sum(axis=1, keepdims=True), 1)  # zero-in-degree guard
    inv_deg = (1.0 / deg).astype(jnp.float32)
    return counts.astype(jnp.int8), inv_deg


if __name__ == "__main__":
    # NodeFlow: 1024 layer-0 nodes -> 512 layer-1 nodes -> 256 layer-2 nodes.
    N0, N1, N2, F = 1024, 512, 256, 128
    FANOUT = 4

    key = jax.random.PRNGKey(0)
    k_x, k_a0, k_a1 = jax.random.split(key, 3)

    x = jax.random.normal(k_x, (N0, F), dtype=jnp.float32)          # 'features'
    a0_counts, inv_deg0 = _build_block_adjacency(k_a0, N1, N0, FANOUT)  # block 0
    a1_counts, inv_deg1 = _build_block_adjacency(k_a1, N2, N1, FANOUT)  # block 1

    h1, h2 = nodeflow_forward(a0_counts, inv_deg0, a1_counts, inv_deg1, x)
    jax.block_until_ready((h1, h2))
    assert h1.shape == (N1, F) and h2.shape == (N2, F)

    # Independent f32 reference for BOTH blocks (not fed from the kernel's h1).
    a0n = a0_counts.astype(jnp.float32) * inv_deg0
    a1n = a1_counts.astype(jnp.float32) * inv_deg1
    h1_ref = jnp.dot(a0n, x, precision=jax.lax.Precision.HIGHEST)
    h2_ref = jnp.dot(a1n, h1_ref, precision=jax.lax.Precision.HIGHEST)

    assert jnp.allclose(h1, h1_ref, atol=2e-2, rtol=2e-2), "h (block 0) mismatch"
    assert jnp.allclose(h2, h2_ref, atol=2e-2, rtol=2e-2), "h2 (block 1) mismatch"

    print("KERNEL_OK")
</pallas_src>

<mosaic_0001>
module attributes {stable_mosaic.version = 11 : i64} {
  func.func @_fused_nodeflow_kernel(%arg0: i32, %arg1: memref<512x1024xi8, #tpu.memory_space<vmem>>, %arg2: memref<512x1xf32, #tpu.memory_space<vmem>>, %arg3: memref<256x512xi8, #tpu.memory_space<vmem>>, %arg4: memref<256x1xf32, #tpu.memory_space<vmem>>, %arg5: memref<1024x128xf32, #tpu.memory_space<vmem>>, %arg6: memref<512x128xf32, #tpu.memory_space<vmem>>, %arg7: memref<256x128xf32, #tpu.memory_space<vmem>>) attributes {dimension_semantics = [#tpu.dimension_semantics<arbitrary>], iteration_bounds = array<i64: 1>, scalar_prefetch = 0 : i64, scratch_operands = 0 : i64, tpu.core_type = #tpu.core_type<tc>, window_params = [{pipeline_mode = #tpu.pipeline_mode<synchronous>, transform_indices = @transform_0, window_bounds = array<i64: 512, 1024>}, {pipeline_mode = #tpu.pipeline_mode<synchronous>, transform_indices = @transform_1, window_bounds = array<i64: 512, 1>}, {pipeline_mode = #tpu.pipeline_mode<synchronous>, transform_indices = @transform_2, window_bounds = array<i64: 256, 512>}, {pipeline_mode = #tpu.pipeline_mode<synchronous>, transform_indices = @transform_3, window_bounds = array<i64: 256, 1>}, {pipeline_mode = #tpu.pipeline_mode<synchronous>, transform_indices = @transform_4, window_bounds = array<i64: 1024, 128>}, {pipeline_mode = #tpu.pipeline_mode<synchronous>, transform_indices = @transform_5, window_bounds = array<i64: 512, 128>}, {pipeline_mode = #tpu.pipeline_mode<synchronous>, transform_indices = @transform_6, window_bounds = array<i64: 256, 128>}]} {
    %c0 = arith.constant 0 : index
    %c0_0 = arith.constant 0 : index
    %0 = vector.load %arg1[%c0, %c0_0] : memref<512x1024xi8, #tpu.memory_space<vmem>>, vector<512x1024xi8>
    %1 = arith.sitofp %0 : vector<512x1024xi8> to vector<512x1024xf32>
    %c0_1 = arith.constant 0 : index
    %c0_2 = arith.constant 0 : index
    %2 = vector.load %arg5[%c0_1, %c0_2] : memref<1024x128xf32, #tpu.memory_space<vmem>>, vector<1024x128xf32>
    %cst = arith.constant dense<0.000000e+00> : vector<512x128xf32>
    %3 = tpu.matmul %1, %2, %cst {dimension_numbers = #tpu.dot_dimension_numbers<[1], [0], [0], [1], [0, 0, 1, 1], [], []>} : vector<512x1024xf32>, vector<1024x128xf32>, vector<512x128xf32> -> vector<512x128xf32>
    %c0_3 = arith.constant 0 : index
    %c0_4 = arith.constant 0 : index
    %4 = vector.load %arg2[%c0_3, %c0_4] : memref<512x1xf32, #tpu.memory_space<vmem>>, vector<512x1xf32>
    %5 = vector.broadcast %4 : vector<512x1xf32> to vector<512x128xf32>
    %6 = arith.mulf %3, %5 : vector<512x128xf32>
    %c0_5 = arith.constant 0 : index
    %c0_6 = arith.constant 0 : index
    %7 = vector.load %arg6[%c0_5, %c0_6] : memref<512x128xf32, #tpu.memory_space<vmem>>, vector<512x128xf32>
    tpu.vector_store %arg6[%c0_5, %c0_6], %6 {strides = array<i32>} : memref<512x128xf32, #tpu.memory_space<vmem>>, vector<512x128xf32>,
    %c0_7 = arith.constant 0 : index
    %c0_8 = arith.constant 0 : index
    %8 = vector.load %arg3[%c0_7, %c0_8] : memref<256x512xi8, #tpu.memory_space<vmem>>, vector<256x512xi8>
    %9 = arith.sitofp %8 : vector<256x512xi8> to vector<256x512xf32>
    %cst_9 = arith.constant dense<0.000000e+00> : vector<256x128xf32>
    %10 = tpu.matmul %9, %6, %cst_9 {dimension_numbers = #tpu.dot_dimension_numbers<[1], [0], [0], [1], [0, 0, 1, 1], [], []>} : vector<256x512xf32>, vector<512x128xf32>, vector<256x128xf32> -> vector<256x128xf32>
    %c0_10 = arith.constant 0 : index
    %c0_11 = arith.constant 0 : index
    %11 = vector.load %arg4[%c0_10, %c0_11] : memref<256x1xf32, #tpu.memory_space<vmem>>, vector<256x1xf32>
    %12 = vector.broadcast %11 : vector<256x1xf32> to vector<256x128xf32>
    %13 = arith.mulf %10, %12 : vector<256x128xf32>
    %c0_12 = arith.constant 0 : index
    %c0_13 = arith.constant 0 : index
    %14 = vector.load %arg7[%c0_12, %c0_13] : memref<256x128xf32, #tpu.memory_space<vmem>>, vector<256x128xf32>
    tpu.vector_store %arg7[%c0_12, %c0_13], %13 {strides = array<i32>} : memref<256x128xf32, #tpu.memory_space<vmem>>, vector<256x128xf32>,
    return
  }
  func.func @transform_0(%arg0: i32) -> (i32, i32) {
    %c0_i32 = arith.constant 0 : i32
    %c0_i32_0 = arith.constant 0 : i32
    %c0_i32_1 = arith.constant 0 : i32
    return %c0_i32, %c0_i32_0 : i32, i32
  }
  func.func @transform_1(%arg0: i32) -> (i32, i32) {
    %c0_i32 = arith.constant 0 : i32
    %c0_i32_0 = arith.constant 0 : i32
    %c0_i32_1 = arith.constant 0 : i32
    return %c0_i32, %c0_i32_0 : i32, i32
  }
  func.func @transform_2(%arg0: i32) -> (i32, i32) {
    %c0_i32 = arith.constant 0 : i32
    %c0_i32_0 = arith.constant 0 : i32
    %c0_i32_1 = arith.constant 0 : i32
    return %c0_i32, %c0_i32_0 : i32, i32
  }
  func.func @transform_3(%arg0: i32) -> (i32, i32) {
    %c0_i32 = arith.constant 0 : i32
    %c0_i32_0 = arith.constant 0 : i32
    %c0_i32_1 = arith.constant 0 : i32
    return %c0_i32, %c0_i32_0 : i32, i32
  }
  func.func @transform_4(%arg0: i32) -> (i32, i32) {
    %c0_i32 = arith.constant 0 : i32
    %c0_i32_0 = arith.constant 0 : i32
    %c0_i32_1 = arith.constant 0 : i32
    return %c0_i32, %c0_i32_0 : i32, i32
  }
  func.func @transform_5(%arg0: i32) -> (i32, i32) {
    %c0_i32 = arith.constant 0 : i32
    %c0_i32_0 = arith.constant 0 : i32
    %c0_i32_1 = arith.constant 0 : i32
    return %c0_i32, %c0_i32_0 : i32, i32
  }
  func.func @transform_6(%arg0: i32) -> (i32, i32) {
    %c0_i32 = arith.constant 0 : i32
    %c0_i32_0 = arith.constant 0 : i32
    %c0_i32_1 = arith.constant 0 : i32
    return %c0_i32, %c0_i32_0 : i32, i32
  }
}

</mosaic_0001>

<llo_original>
// kernel: nodeflow_forward.1
$region0: #{nodeflow_forward.1}
  #allocation0 [shape = 'u32[]', space=smem, size = 0x4, offset = 0x4, fixed_abs, tag = 'smem constant byte address 0x4 - core index']
  #allocation1 [shape = 'u32[144,128]{1,0:T(1,128)}', space=vmem, size = 0x12000, scoped, tag = 'internal scratch']
  %s0 = inlined_call_operand.hbm [shape: s8[512,1024], index: 0, kind: input, shape index: {}]
  %s1 = inlined_call_operand.vmem [shape: f32[512,1], index: 1, kind: input, shape index: {}]
  %s2 = inlined_call_operand.vmem [shape: s8[256,512], index: 2, kind: input, shape index: {}]
  %s3 = inlined_call_operand.vmem [shape: f32[256,1], index: 3, kind: input, shape index: {}]
  %s4 = inlined_call_operand.hbm [shape: f32[1024,128], index: 4, kind: input, shape index: {}]
  %s5 = inlined_call_operand.hbm [shape: f32[512,128], index: 5, kind: output, shape index: {0}]
  %s6 = inlined_call_operand.hbm [shape: f32[256,128], index: 6, kind: output, shape index: {1}]
  %7 = xla_tuple %s5, %s6
  %s8 = sld [smem:[#allocation0]]
  $region46: #{nodeflow_forward.1} parent=0
    _
  %s10 = ssub.s32 1, %s8
  %s11 = scalar_select 0, %s10, %s8
  $region1: #{nodeflow_forward.1} parent=0
    #allocation2 [shape = 'u8[524288]{0}', space=vmem, size = 0x80000, scoped, tag = 'input window, operand 0, single buffered']
    #allocation3 [shape = 's32[1]{0}', space=sflag, size = 0x4, scoped, tag = 'scoped memory for nodeflow_forward.1']
    #allocation4 [shape = 's32[1]{0}', space=sflag, size = 0x4, scoped, tag = 'scoped memory for nodeflow_forward.1']
    #allocation5 [shape = 'u8[524288]{0}', space=vmem, size = 0x80000, scoped, tag = 'input window, operand 4, single buffered']
    #allocation6 [shape = 's32[1]{0}', space=sflag, size = 0x4, scoped, tag = 'scoped memory for nodeflow_forward.1']
    #allocation7 [shape = 'u8[262144]{0}', space=vmem, size = 0x40000, scoped, tag = 'output window, operand 0, single buffered']
    #allocation8 [shape = 'u8[131072]{0}', space=vmem, size = 0x20000, scoped, tag = 'output window, operand 1, single buffered']
    #allocation9 [shape = 's32[1]{0}', space=sflag, size = 0x4, scoped, tag = 'scoped memory for nodeflow_forward.1']
    %12 = vsyncpa [#allocation3], 0
    %13 = vsyncpa [#allocation6], 0
    %14 = vsyncpa [#allocation4], 0
    %15 = vsyncpa [#allocation9], 0
    // Predicated region
    $region2: #{nodeflow_forward.1} parent=1 // pred_check
      _
    $region3: #{nodeflow_forward.1} parent=1 // pred_check_branch
      %17 = sbr.rel (0) target = $region5
    $region4: #{nodeflow_forward.1} parent=1 // pred_region
      %s19 = ssub.s32 16384, 16384
      %20 = vsyncadd [#allocation3], %s19
      %s21 = sshll.u32 [#allocation2], 4
      %s22 = int_to_ptr.vmem [resolvable:$true] %s21
      %27 = dma.hbm_to_vmem [thread:$0]  %s0, 16384, %s22, [#allocation3], 1024, 1024, 64
    $region5: #{nodeflow_forward.1} parent=1 // pred_fallthru
      _
    // Predicated region
    $region6: #{nodeflow_forward.1} parent=1 // pred_check
      _
    $region7: #{nodeflow_forward.1} parent=1 // pred_check_branch
      %29 = sbr.rel (0) target = $region9
    $region8: #{nodeflow_forward.1} parent=1 // pred_region
      _
    $region9: #{nodeflow_forward.1} parent=1 // pred_fallthru
      _
    // Predicated region
    $region10: #{nodeflow_forward.1} parent=1 // pred_check
      _
    $region11: #{nodeflow_forward.1} parent=1 // pred_check_branch
      %31 = sbr.rel (0) target = $region13
    $region12: #{nodeflow_forward.1} parent=1 // pred_region
      _
    $region13: #{nodeflow_forward.1} parent=1 // pred_fallthru
      _
    // Predicated region
    $region14: #{nodeflow_forward.1} parent=1 // pred_check
      _
    $region15: #{nodeflow_forward.1} parent=1 // pred_check_branch
      %33 = sbr.rel (0) target = $region17
    $region16: #{nodeflow_forward.1} parent=1 // pred_region
      _
    $region17: #{nodeflow_forward.1} parent=1 // pred_fallthru
      _
    // Predicated region
    $region18: #{nodeflow_forward.1} parent=1 // pred_check
      _
    $region19: #{nodeflow_forward.1} parent=1 // pred_check_branch
      %35 = sbr.rel (0) target = $region21
    $region20: #{nodeflow_forward.1} parent=1 // pred_region
      %s37 = ssub.s32 16384, 16384
      %38 = vsyncadd [#allocation6], %s37
      %s39 = sshll.u32 [#allocation5], 4
      %s40 = int_to_ptr.vmem [resolvable:$true] %s39
      %45 = dma.hbm_to_vmem [thread:$0]  %s4, 16384, %s40, [#allocation6], 128, 128, 8
    $region21: #{nodeflow_forward.1} parent=1 // pred_fallthru
      _
    // Predicated region
    $region22: #{nodeflow_forward.1} parent=1 // pred_check
      _
    $region23: #{nodeflow_forward.1} parent=1 // pred_check_branch
      %47 = sbr.rel (0) target = $region25
    $region24: #{nodeflow_forward.1} parent=1 // pred_region
      %48 = dma.done [#allocation3], 16384
    $region25: #{nodeflow_forward.1} parent=1 // pred_fallthru
      _
    // Predicated region
    $region26: #{nodeflow_forward.1} parent=1 // pred_check
      _
    $region27: #{nodeflow_forward.1} parent=1 // pred_check_branch
      %50 = sbr.rel (0) target = $region29
    $region28: #{nodeflow_forward.1} parent=1 // pred_region
      %51 = dma.done [#allocation6], 16384
    $region29: #{nodeflow_forward.1} parent=1 // pred_fallthru
      _
    %v52 = vld [vmem:[#allocation2] sm:$0xff]
    %v53 = vld [vmem:[#allocation2 + $0x8] sm:$0xff]
    %v54 = vld [vmem:[#allocation2 + $0x10] sm:$0xff]
    %v55 = vld [vmem:[#allocation2 + $0x18] sm:$0xff]
    %v56 = vld [vmem:[#allocation2 + $0x20] sm:$0xff]
    %v57 = vld [vmem:[#allocation2 + $0x28] sm:$0xff]
    %v58 = vld [vmem:[#allocation2 + $0x30] sm:$0xff]
    %v59 = vld [vmem:[#allocation2 + $0x38] sm:$0xff]
    %v60 = vld [vmem:[#allocation2 + $0x40] sm:$0xff]
    %v61 = vld [vmem:[#allocation2 + $0x48] sm:$0xff]
    %v62 = vld [vmem:[#allocation2 + $0x50] sm:$0xff]
    %v63 = vld [vmem:[#allocation2 + $0x58] sm:$0xff]
    %v64 = vld [vmem:[#allocation2 + $0x60] sm:$0xff]
    %v65 = vld [vmem:[#allocation2 + $0x68] sm:$0xff]
    %v66 = vld [vmem:[#allocation2 + $0x70] sm:$0xff]
    %v67 = vld [vmem:[#allocation2 + $0x78] sm:$0xff]
    %v68 = vld [vmem:[#allocation2 + $0x80] sm:$0xff]
    %v69 = vld [vmem:[#allocation2 + $0x88] sm:$0xff]
    %v70 = vld [vmem:[#allocation2 + $0x90] sm:$0xff]
    %v71 = vld [vmem:[#allocation2 + $0x98] sm:$0xff]
    %v72 = vld [vmem:[#allocation2 + $0xa0] sm:$0xff]
    %v73 = vld [vmem:[#allocation2 + $0xa8] sm:$0xff]
    %v74 = vld [vmem:[#allocation2 + $0xb0] sm:$0xff]
    %v75 = vld [vmem:[#allocation2 + $0xb8] sm:$0xff]
    %v76 = vld [vmem:[#allocation2 + $0xc0] sm:$0xff]
    %v77 = vld [vmem:[#allocation2 + $0xc8] sm:$0xff]
    %v78 = vld [vmem:[#allocation2 + $0xd0] sm:$0xff]
    %v79 = vld [vmem:[#allocation2 + $0xd8] sm:$0xff]
    %v80 = vld [vmem:[#allocation2 + $0xe0] sm:$0xff]
    %v81 = vld [vmem:[#allocation2 + $0xe8] sm:$0xff]
    %v82 = vld [vmem:[#allocation2 + $0xf0] sm:$0xff]
    %v83 = vld [vmem:[#allocation2 + $0xf8] sm:$0xff]
    %v84 = vld [vmem:[#allocation2 + $0x100] sm:$0xff]
    %v85 = vld [vmem:[#allocation2 + $0x108] sm:$0xff]
    %v86 = vld [vmem:[#allocation2 + $0x110] sm:$0xff]
    %v87 = vld [vmem:[#allocation2 + $0x118] sm:$0xff]
    %v88 = vld [vmem:[#allocation2 + $0x120] sm:$0xff]
    %v89 = vld [vmem:[#allocation2 + $0x128] sm:$0xff]
    %v90 = vld [vmem:[#allocation2 + $0x130] sm:$0xff]
    %v91 = vld [vmem:[#allocation2 + $0x138] sm:$0xff]
    %v92 = vld [vmem:[#allocation2 + $0x140] sm:$0xff]
    %v93 = vld [vmem:[#allocation2 + $0x148] sm:$0xff]
    %v94 = vld [vmem:[#allocation2 + $0x150] sm:$0xff]
    %v95 = vld [vmem:[#allocation2 + $0x158] sm:$0xff]
    %v96 = vld [vmem:[#allocation2 + $0x160] sm:$0xff]
    %v97 = vld [vmem:[#allocation2 + $0x168] sm:$0xff]
    %v98 = vld [vmem:[#allocation2 + $0x170] sm:$0xff]
    %v99 = vld [vmem:[#allocation2 + $0x178] sm:$0xff]
    %v100 = vld [vmem:[#allocation2 + $0x180] sm:$0xff]
    %v101 = vld [vmem:[#allocation2 + $0x188] sm:$0xff]
    %v102 = vld [vmem:[#allocation2 + $0x190] sm:$0xff]
    %v103 = vld [vmem:[#allocation2 + $0x198] sm:$0xff]
    %v104 = vld [vmem:[#allocation2 + $0x1a0] sm:$0xff]
    %v105 = vld [vmem:[#allocation2 + $0x1a8] sm:$0xff]
    %v106 = vld [vmem:[#allocation2 + $0x1b0] sm:$0xff]
    %v107 = vld [vmem:[#allocation2 + $0x1b8] sm:$0xff]
    %v108 = vld [vmem:[#allocation2 + $0x1c0] sm:$0xff]
    %v109 = vld [vmem:[#allocation2 + $0x1c8] sm:$0xff]
    %v110 = vld [vmem:[#allocation2 + $0x1d0] sm:$0xff]
    %v111 = vld [vmem:[#allocation2 + $0x1d8] sm:$0xff]
    %v112 = vld [vmem:[#allocation2 + $0x1e0] sm:$0xff]
    %v113 = vld [vmem:[#allocation2 + $0x1e8] sm:$0xff]
    %v114 = vld [vmem:[#allocation2 + $0x1f0] sm:$0xff]
    %v115 = vld [vmem:[#allocation2 + $0x1f8] sm:$0xff]
    %v116 = vld [vmem:[#allocation2 + $0x200] sm:$0xff]
    %v117 = vld [vmem:[#allocation2 + $0x208] sm:$0xff]
    %v118 = vld [vmem:[#allocation2 + $0x210] sm:$0xff]
    %v119 = vld [vmem:[#allocation2 + $0x218] sm:$0xff]
    %v120 = vld [vmem:[#allocation2 + $0x220] sm:$0xff]
    %v121 = vld [vmem:[#allocation2 + $0x228] sm:$0xff]
    %v122 = vld [vmem:[#allocation2 + $0x230] sm:$0xff]
    %v123 = vld [vmem:[#allocation2 + $0x238] sm:$0xff]
    %v124 = vld [vmem:[#allocation2 + $0x240] sm:$0xff]
    %v125 = vld [vmem:[#allocation2 + $0x248] sm:$0xff]
    %v126 = vld [vmem:[#allocation2 + $0x250] sm:$0xff]
    %v127 = vld [vmem:[#allocation2 + $0x258] sm:$0xff]
    %v128 = vld [vmem:[#allocation2 + $0x260] sm:$0xff]
    %v129 = vld [vmem:[#allocation2 + $0x268] sm:$0xff]
    %v130 = vld [vmem:[#allocation2 + $0x270] sm:$0xff]
    %v131 = vld [vmem:[#allocation2 + $0x278] sm:$0xff]
    %v132 = vld [vmem:[#allocation2 + $0x280] sm:$0xff]
    %v133 = vld [vmem:[#allocation2 + $0x288] sm:$0xff]
    %v134 = vld [vmem:[#allocation2 + $0x290] sm:$0xff]
    %v135 = vld [vmem:[#allocation2 + $0x298] sm:$0xff]
    %v136 = vld [vmem:[#allocation2 + $0x2a0] sm:$0xff]
    %v137 = vld [vmem:[#allocation2 + $0x2a8] sm:$0xff]
    %v138 = vld [vmem:[#allocation2 + $0x2b0] sm:$0xff]
    %v139 = vld [vmem:[#allocation2 + $0x2b8] sm:$0xff]
    %v140 = vld [vmem:[#allocation2 + $0x2c0] sm:$0xff]
    %v141 = vld [vmem:[#allocation2 + $0x2c8] sm:$0xff]
    %v142 = vld [vmem:[#allocation2 + $0x2d0] sm:$0xff]
    %v143 = vld [vmem:[#allocation2 + $0x2d8] sm:$0xff]
    %v144 = vld [vmem:[#allocation2 + $0x2e0] sm:$0xff]
    %v145 = vld [vmem:[#allocation2 + $0x2e8] sm:$0xff]
    %v146 = vld [vmem:[#allocation2 + $0x2f0] sm:$0xff]
    %v147 = vld [vmem:[#allocation2 + $0x2f8] sm:$0xff]
    %v148 = vld [vmem:[#allocation2 + $0x300] sm:$0xff]
    %v149 = vld [vmem:[#allocation2 + $0x308] sm:$0xff]
    %v150 = vld [vmem:[#allocation2 + $0x310] sm:$0xff]
    %v151 = vld [vmem:[#allocation2 + $0x318] sm:$0xff]
    %v152 = vld [vmem:[#allocation2 + $0x320] sm:$0xff]
    %v153 = vld [vmem:[#allocation2 + $0x328] sm:$0xff]
    %v154 = vld [vmem:[#allocation2 + $0x330] sm:$0xff]
    %v155 = vld [vmem:[#allocation2 + $0x338] sm:$0xff]
    %v156 = vld [vmem:[#allocation2 + $0x340] sm:$0xff]
    %v157 = vld [vmem:[#allocation2 + $0x348] sm:$0xff]
    %v158 = vld [vmem:[#allocation2 + $0x350] sm:$0xff]
    %v159 = vld [vmem:[#allocation2 + $0x358] sm:$0xff]
    %v160 = vld [vmem:[#allocation2 + $0x360] sm:$0xff]
    %v161 = vld [vmem:[#allocation2 + $0x368] sm:$0xff]
    %v162 = vld [vmem:[#allocation2 + $0x370] sm:$0xff]
    %v163 = vld [vmem:[#allocation2 + $0x378] sm:$0xff]
    %v164 = vld [vmem:[#allocation2 + $0x380] sm:$0xff]
    %v165 = vld [vmem:[#allocation2 + $0x388] sm:$0xff]
    %v166 = vld [vmem:[#allocation2 + $0x390] sm:$0xff]
    %v167 = vld [vmem:[#allocation2 + $0x398] sm:$0xff]
    %v168 = vld [vmem:[#allocation2 + $0x3a0] sm:$0xff]
    %v169 = vld [vmem:[#allocation2 + $0x3a8] sm:$0xff]
    %v170 = vld [vmem:[#allocation2 + $0x3b0] sm:$0xff]
    %v171 = vld [vmem:[#allocation2 + $0x3b8] sm:$0xff]
    %v172 = vld [vmem:[#allocation2 + $0x3c0] sm:$0xff]
    %v173 = vld [vmem:[#allocation2 + $0x3c8] sm:$0xff]
    %v174 = vld [vmem:[#allocation2 + $0x3d0] sm:$0xff]
    %v175 = vld [vmem:[#allocation2 + $0x3d8] sm:$0xff]
    %v176 = vld [vmem:[#allocation2 + $0x3e0] sm:$0xff]
    %v177 = vld [vmem:[#allocation2 + $0x3e8] sm:$0xff]
    %v178 = vld [vmem:[#allocation2 + $0x3f0] sm:$0xff]
    %v179 = vld [vmem:[#allocation2 + $0x3f8] sm:$0xff]
    %v180 = vunpack.c.0.s8 %v52
    %v181 = vunpack.c.0.s8 %v53
    %v182 = vunpack.c.0.s8 %v54
    %v183 = vunpack.c.0.s8 %v55
    %v184 = vunpack.c.0.s8 %v56
    %v185 = vunpack.c.0.s8 %v57
    %v186 = vunpack.c.0.s8 %v58
    %v187 = vunpack.c.0.s8 %v59
    %v188 = vunpack.c.1.s8 %v52
    %v189 = vunpack.c.1.s8 %v53
    %v190 = vunpack.c.1.s8 %v54
    %v191 = vunpack.c.1.s8 %v55
    %v192 = vunpack.c.1.s8 %v56
    %v193 = vunpack.c.1.s8 %v57
    %v194 = vunpack.c.1.s8 %v58
    %v195 = vunpack.c.1.s8 %v59
    %v196 = vunpack.c.2.s8 %v52
    %v197 = vunpack.c.2.s8 %v53
    %v198 = vunpack.c.2.s8 %v54
    %v199 = vunpack.c.2.s8 %v55
    %v200 = vunpack.c.2.s8 %v56
    %v201 = vunpack.c.2.s8 %v57
    %v202 = vunpack.c.2.s8 %v58
    %v203 = vunpack.c.2.s8 %v59
    %v204 = vunpack.c.3.s8 %v52
    %v205 = vunpack.c.3.s8 %v53
    %v206 = vunpack.c.3.s8 %v54
    %v207 = vunpack.c.3.s8 %v55
    %v208 = vunpack.c.3.s8 %v56
    %v209 = vunpack.c.3.s8 %v57
    %v210 = vunpack.c.3.s8 %v58
    %v211 = vunpack.c.3.s8 %v59
    %v212 = vunpack.c.0.s8 %v60
    %v213 = vunpack.c.0.s8 %v61
    %v214 = vunpack.c.0.s8 %v62
    %v215 = vunpack.c.0.s8 %v63
    %v216 = vunpack.c.0.s8 %v64
    %v217 = vunpack.c.0.s8 %v65
    %v218 = vunpack.c.0.s8 %v66
    %v219 = vunpack.c.0.s8 %v67
    %v220 = vunpack.c.1.s8 %v60
    %v221 = vunpack.c.1.s8 %v61
    %v222 = vunpack.c.1.s8 %v62
    %v223 = vunpack.c.1.s8 %v63
    %v224 = vunpack.c.1.s8 %v64
    %v225 = vunpack.c.1.s8 %v65
    %v226 = vunpack.c.1.s8 %v66
    %v227 = vunpack.c.1.s8 %v67
    %v228 = vunpack.c.2.s8 %v60
    %v229 = vunpack.c.2.s8 %v61
    %v230 = vunpack.c.2.s8 %v62
    %v231 = vunpack.c.2.s8 %v63
    %v232 = vunpack.c.2.s8 %v64
    %v233 = vunpack.c.2.s8 %v65
    %v234 = vunpack.c.2.s8 %v66
    %v235 = vunpack.c.2.s8 %v67
    %v236 = vunpack.c.3.s8 %v60
    %v237 = vunpack.c.3.s8 %v61
    %v238 = vunpack.c.3.s8 %v62
    %v239 = vunpack.c.3.s8 %v63
    %v240 = vunpack.c.3.s8 %v64
    %v241 = vunpack.c.3.s8 %v65
    %v242 = vunpack.c.3.s8 %v66
    %v243 = vunpack.c.3.s8 %v67
    %v244 = vunpack.c.0.s8 %v68
    %v245 = vunpack.c.0.s8 %v69
    %v246 = vunpack.c.0.s8 %v70
    %v247 = vunpack.c.0.s8 %v71
    %v248 = vunpack.c.0.s8 %v72
    %v249 = vunpack.c.0.s8 %v73
    %v250 = vunpack.c.0.s8 %v74
    %v251 = vunpack.c.0.s8 %v75
    %v252 = vunpack.c.1.s8 %v68
    %v253 = vunpack.c.1.s8 %v69
    %v254 = vunpack.c.1.s8 %v70
    %v255 = vunpack.c.1.s8 %v71
    %v256 = vunpack.c.1.s8 %v72
    %v257 = vunpack.c.1.s8 %v73
    %v258 = vunpack.c.1.s8 %v74
    %v259 = vunpack.c.1.s8 %v75
    %v260 = vunpack.c.2.s8 %v68
    %v261 = vunpack.c.2.s8 %v69
    %v262 = vunpack.c.2.s8 %v70
    %v263 = vunpack.c.2.s8 %v71
    %v264 = vunpack.c.2.s8 %v72
    %v265 = vunpack.c.2.s8 %v73
    %v266 = vunpack.c.2.s8 %v74
    %v267 = vunpack.c.2.s8 %v75
    %v268 = vunpack.c.3.s8 %v68
    %v269 = vunpack.c.3.s8 %v69
    %v270 = vunpack.c.3.s8 %v70
    %v271 = vunpack.c.3.s8 %v71
    %v272 = vunpack.c.3.s8 %v72
    %v273 = vunpack.c.3.s8 %v73
    %v274 = vunpack.c.3.s8 %v74
    %v275 = vunpack.c.3.s8 %v75
    %v276 = vunpack.c.0.s8 %v76
    %v277 = vunpack.c.0.s8 %v77
    %v278 = vunpack.c.0.s8 %v78
    %v279 = vunpack.c.0.s8 %v79
    %v280 = vunpack.c.0.s8 %v80
    %v281 = vunpack.c.0.s8 %v81
    %v282 = vunpack.c.0.s8 %v82
    %v283 = vunpack.c.0.s8 %v83
    %v284 = vunpack.c.1.s8 %v76
    %v285 = vunpack.c.1.s8 %v77
    %v286 = vunpack.c.1.s8 %v78
    %v287 = vunpack.c.1.s8 %v79
    %v288 = vunpack.c.1.s8 %v80
    %v289 = vunpack.c.1.s8 %v81
    %v290 = vunpack.c.1.s8 %v82
    %v291 = vunpack.c.1.s8 %v83
    %v292 = vunpack.c.2.s8 %v76
    %v293 = vunpack.c.2.s8 %v77
    %v294 = vunpack.c.2.s8 %v78
    %v295 = vunpack.c.2.s8 %v79
    %v296 = vunpack.c.2.s8 %v80
    %v297 = vunpack.c.2.s8 %v81
    %v298 = vunpack.c.2.s8 %v82
    %v299 = vunpack.c.2.s8 %v83
    %v300 = vunpack.c.3.s8 %v76
    %v301 = vunpack.c.3.s8 %v77
    %v302 = vunpack.c.3.s8 %v78
    %v303 = vunpack.c.3.s8 %v79
    %v304 = vunpack.c.3.s8 %v80
    %v305 = vunpack.c.3.s8 %v81
    %v306 = vunpack.c.3.s8 %v82
    %v307 = vunpack.c.3.s8 %v83
    %v308 = vunpack.c.0.s8 %v84
    %v309 = vunpack.c.0.s8 %v85
    %v310 = vunpack.c.0.s8 %v86
    %v311 = vunpack.c.0.s8 %v87
    %v312 = vunpack.c.0.s8 %v88
    %v313 = vunpack.c.0.s8 %v89
    %v314 = vunpack.c.0.s8 %v90
    %v315 = vunpack.c.0.s8 %v91
    %v316 = vunpack.c.1.s8 %v84
    %v317 = vunpack.c.1.s8 %v85
    %v318 = vunpack.c.1.s8 %v86
    %v319 = vunpack.c.1.s8 %v87
    %v320 = vunpack.c.1.s8 %v88
    %v321 = vunpack.c.1.s8 %v89
    %v322 = vunpack.c.1.s8 %v90
    %v323 = vunpack.c.1.s8 %v91
    %v324 = vunpack.c.2.s8 %v84
    %v325 = vunpack.c.2.s8 %v85
    %v326 = vunpack.c.2.s8 %v86
    %v327 = vunpack.c.2.s8 %v87
    %v328 = vunpack.c.2.s8 %v88
    %v329 = vunpack.c.2.s8 %v89
    %v330 = vunpack.c.2.s8 %v90
    %v331 = vunpack.c.2.s8 %v91
    %v332 = vunpack.c.3.s8 %v84
    %v333 = vunpack.c.3.s8 %v85
    %v334 = vunpack.c.3.s8 %v86
    %v335 = vunpack.c.3.s8 %v87
    %v336 = vunpack.c.3.s8 %v88
    %v337 = vunpack.c.3.s8 %v89
    %v338 = vunpack.c.3.s8 %v90
    %v339 = vunpack.c.3.s8 %v91
    %v340 = vunpack.c.0.s8 %v92
    %v341 = vunpack.c.0.s8 %v93
    %v342 = vunpack.c.0.s8 %v94
    %v343 = vunpack.c.0.s8 %v95
    %v344 = vunpack.c.0.s8 %v96
    %v345 = vunpack.c.0.s8 %v97
    %v346 = vunpack.c.0.s8 %v98
    %v347 = vunpack.c.0.s8 %v99
    %v348 = vunpack.c.1.s8 %v92
    %v349 = vunpack.c.1.s8 %v93
    %v350 = vunpack.c.1.s8 %v94
    %v351 = vunpack.c.1.s8 %v95
    %v352 = vunpack.c.1.s8 %v96
    %v353 = vunpack.c.1.s8 %v97
    %v354 = vunpack.c.1.s8 %v98
    %v355 = vunpack.c.1.s8 %v99
    %v356 = vunpack.c.2.s8 %v92
    %v357 = vunpack.c.2.s8 %v93
    %v358 = vunpack.c.2.s8 %v94
    %v359 = vunpack.c.2.s8 %v95
    %v360 = vunpack.c.2.s8 %v96
    %v361 = vunpack.c.2.s8 %v97
    %v362 = vunpack.c.2.s8 %v98
    %v363 = vunpack.c.2.s8 %v99
    %v364 = vunpack.c.3.s8 %v92
    %v365 = vunpack.c.3.s8 %v93
    %v366 = vunpack.c.3.s8 %v94
    %v367 = vunpack.c.3.s8 %v95
    %v368 = vunpack.c.3.s8 %v96
    %v369 = vunpack.c.3.s8 %v97
    %v370 = vunpack.c.3.s8 %v98
    %v371 = vunpack.c.3.s8 %v99
    %v372 = vunpack.c.0.s8 %v100
    %v373 = vunpack.c.0.s8 %v101
    %v374 = vunpack.c.0.s8 %v102
    %v375 = vunpack.c.0.s8 %v103
    %v376 = vunpack.c.0.s8 %v104
    %v377 = vunpack.c.0.s8 %v105
    %v378 = vunpack.c.0.s8 %v106
    %v379 = vunpack.c.0.s8 %v107
    %v380 = vunpack.c.1.s8 %v100
    %v381 = vunpack.c.1.s8 %v101
    %v382 = vunpack.c.1.s8 %v102
    %v383 = vunpack.c.1.s8 %v103
    %v384 = vunpack.c.1.s8 %v104
    %v385 = vunpack.c.1.s8 %v105
    %v386 = vunpack.c.1.s8 %v106
    %v387 = vunpack.c.1.s8 %v107
    %v388 = vunpack.c.2.s8 %v100
    %v389 = vunpack.c.2.s8 %v101
    %v390 = vunpack.c.2.s8 %v102
    %v391 = vunpack.c.2.s8 %v103
    %v392 = vunpack.c.2.s8 %v104
    %v393 = vunpack.c.2.s8 %v105
    %v394 = vunpack.c.2.s8 %v106
    %v395 = vunpack.c.2.s8 %v107
    %v396 = vunpack.c.3.s8 %v100
    %v397 = vunpack.c.3.s8 %v101
    %v398 = vunpack.c.3.s8 %v102
    %v399 = vunpack.c.3.s8 %v103
    %v400 = vunpack.c.3.s8 %v104
    %v401 = vunpack.c.3.s8 %v105
    %v402 = vunpack.c.3.s8 %v106
    %v403 = vunpack.c.3.s8 %v107
    %v404 = vunpack.c.0.s8 %v108
    %v405 = vunpack.c.0.s8 %v109
    %v406 = vunpack.c.0.s8 %v110
    %v407 = vunpack.c.0.s8 %v111
    %v408 = vunpack.c.0.s8 %v112
    %v409 = vunpack.c.0.s8 %v113
    %v410 = vunpack.c.0.s8 %v114
    %v411 = vunpack.c.0.s8 %v115
    %v412 = vunpack.c.1.s8 %v108
    %v413 = vunpack.c.1.s8 %v109
    %v414 = vunpack.c.1.s8 %v110
    %v415 = vunpack.c.1.s8 %v111
    %v416 = vunpack.c.1.s8 %v112
    %v417 = vunpack.c.1.s8 %v113
    %v418 = vunpack.c.1.s8 %v114
    %v419 = vunpack.c.1.s8 %v115
    %v420 = vunpack.c.2.s8 %v108
    %v421 = vunpack.c.2.s8 %v109
    %v422 = vunpack.c.2.s8 %v110
    %v423 = vunpack.c.2.s8 %v111
    %v424 = vunpack.c.2.s8 %v112
    %v425 = vunpack.c.2.s8 %v113
    %v426 = vunpack.c.2.s8 %v114
    %v427 = vunpack.c.2.s8 %v115
    %v428 = vunpack.c.3.s8 %v108
    %v429 = vunpack.c.3.s8 %v109
    %v430 = vunpack.c.3.s8 %v110
    %v431 = vunpack.c.3.s8 %v111
    %v432 = vunpack.c.3.s8 %v112
    %v433 = vunpack.c.3.s8 %v113
    %v434 = vunpack.c.3.s8 %v114
    %v435 = vunpack.c.3.s8 %v115
    %v436 = vunpack.c.0.s8 %v116
    %v437 = vunpack.c.0.s8 %v117
    %v438 = vunpack.c.0.s8 %v118
    %v439 = vunpack.c.0.s8 %v119
    %v440 = vunpack.c.0.s8 %v120
    %v441 = vunpack.c.0.s8 %v121
    %v442 = vunpack.c.0.s8 %v122
    %v443 = vunpack.c.0.s8 %v123
    %v444 = vunpack.c.1.s8 %v116
    %v445 = vunpack.c.1.s8 %v117
    %v446 = vunpack.c.1.s8 %v118
    %v447 = vunpack.c.1.s8 %v119
    %v448 = vunpack.c.1.s8 %v120
    %v449 = vunpack.c.1.s8 %v121
    %v450 = vunpack.c.1.s8 %v122
    %v451 = vunpack.c.1.s8 %v123
    %v452 = vunpack.c.2.s8 %v116
    %v453 = vunpack.c.2.s8 %v117
    %v454 = vunpack.c.2.s8 %v118
    %v455 = vunpack.c.2.s8 %v119
    %v456 = vunpack.c.2.s8 %v120
    %v457 = vunpack.c.2.s8 %v121
    %v458 = vunpack.c.2.s8 %v122
    %v459 = vunpack.c.2.s8 %v123
    %v460 = vunpack.c.3.s8 %v116
    %v461 = vunpack.c.3.s8 %v117
    %v462 = vunpack.c.3.s8 %v118
    %v463 = vunpack.c.3.s8 %v119
    %v464 = vunpack.c.3.s8 %v120
    %v465 = vunpack.c.3.s8 %v121
    %v466 = vunpack.c.3.s8 %v122
    %v467 = vunpack.c.3.s8 %v123
    %v468 = vunpack.c.0.s8 %v124
    %v469 = vunpack.c.0.s8 %v125
    %v470 = vunpack.c.0.s8 %v126
    %v471 = vunpack.c.0.s8 %v127
    %v472 = vunpack.c.0.s8 %v128
    %v473 = vunpack.c.0.s8 %v129
    %v474 = vunpack.c.0.s8 %v130
    %v475 = vunpack.c.0.s8 %v131
    %v476 = vunpack.c.1.s8 %v124
    %v477 = vunpack.c.1.s8 %v125
    %v478 = vunpack.c.1.s8 %v126
    %v479 = vunpack.c.1.s8 %v127
    %v480 = vunpack.c.1.s8 %v128
    %v481 = vunpack.c.1.s8 %v129
    %v482 = vunpack.c.1.s8 %v130
    %v483 = vunpack.c.1.s8 %v131
    %v484 = vunpack.c.2.s8 %v124
    %v485 = vunpack.c.2.s8 %v125
    %v486 = vunpack.c.2.s8 %v126
    %v487 = vunpack.c.2.s8 %v127
    %v488 = vunpack.c.2.s8 %v128
    %v489 = vunpack.c.2.s8 %v129
    %v490 = vunpack.c.2.s8 %v130
    %v491 = vunpack.c.2.s8 %v131
    %v492 = vunpack.c.3.s8 %v124
    %v493 = vunpack.c.3.s8 %v125
    %v494 = vunpack.c.3.s8 %v126
    %v495 = vunpack.c.3.s8 %v127
    %v496 = vunpack.c.3.s8 %v128
    %v497 = vunpack.c.3.s8 %v129
    %v498 = vunpack.c.3.s8 %v130
    %v499 = vunpack.c.3.s8 %v131
    %v500 = vunpack.c.0.s8 %v132
    %v501 = vunpack.c.0.s8 %v133
    %v502 = vunpack.c.0.s8 %v134
    %v503 = vunpack.c.0.s8 %v135
    %v504 = vunpack.c.0.s8 %v136
    %v505 = vunpack.c.0.s8 %v137
    %v506 = vunpack.c.0.s8 %v138
    %v507 = vunpack.c.0.s8 %v139
    %v508 = vunpack.c.1.s8 %v132
    %v509 = vunpack.c.1.s8 %v133
    %v510 = vunpack.c.1.s8 %v134
    %v511 = vunpack.c.1.s8 %v135
    %v512 = vunpack.c.1.s8 %v136
    %v513 = vunpack.c.1.s8 %v137
    %v514 = vunpack.c.1.s8 %v138
    %v515 = vunpack.c.1.s8 %v139
    %v516 = vunpack.c.2.s8 %v132
    %v517 = vunpack.c.2.s8 %v133
    %v518 = vunpack.c.2.s8 %v134
    %v519 = vunpack.c.2.s8 %v135
    %v520 = vunpack.c.2.s8 %v136
    %v521 = vunpack.c.2.s8 %v137
    %v522 = vunpack.c.2.s8 %v138
    %v523 = vunpack.c.2.s8 %v139
    %v524 = vunpack.c.3.s8 %v132
    %v525 = vunpack.c.3.s8 %v133
    %v526 = vunpack.c.3.s8 %v134
    %v527 = vunpack.c.3.s8 %v135
    %v528 = vunpack.c.3.s8 %v136
    %v529 = vunpack.c.3.s8 %v137
    %v530 = vunpack.c.3.s8 %v138
    %v531 = vunpack.c.3.s8 %v139
    %v532 = vunpack.c.0.s8 %v140
    %v533 = vunpack.c.0.s8 %v141
    %v534 = vunpack.c.0.s8 %v142
    %v535 = vunpack.c.0.s8 %v143
    %v536 = vunpack.c.0.s8 %v144
    %v537 = vunpack.c.0.s8 %v145
    %v538 = vunpack.c.0.s8 %v146
    %v539 = vunpack.c.0.s8 %v147
    %v540 = vunpack.c.1.s8 %v140
    %v541 = vunpack.c.1.s8 %v141
    %v542 = vunpack.c.1.s8 %v142
    %v543 = vunpack.c.1.s8 %v143
    %v544 = vunpack.c.1.s8 %v144
    %v545 = vunpack.c.1.s8 %v145
    %v546 = vunpack.c.1.s8 %v146
    %v547 = vunpack.c.1.s8 %v147
    %v548 = vunpack.c.2.s8 %v140
    %v549 = vunpack.c.2.s8 %v141
    %v550 = vunpack.c.2.s8 %v142
    %v551 = vunpack.c.2.s8 %v143
    %v552 = vunpack.c.2.s8 %v144
    %v553 = vunpack.c.2.s8 %v145
    %v554 = vunpack.c.2.s8 %v146
    %v555 = vunpack.c.2.s8 %v147
    %v556 = vunpack.c.3.s8 %v140
    %v557 = vunpack.c.3.s8 %v141
    %v558 = vunpack.c.3.s8 %v142
    %v559 = vunpack.c.3.s8 %v143
    %v560 = vunpack.c.3.s8 %v144
    %v561 = vunpack.c.3.s8 %v145
    %v562 = vunpack.c.3.s8 %v146
    %v563 = vunpack.c.3.s8 %v147
    %v564 = vunpack.c.0.s8 %v148
    %v565 = vunpack.c.0.s8 %v149
    %v566 = vunpack.c.0.s8 %v150
    %v567 = vunpack.c.0.s8 %v151
    %v568 = vunpack.c.0.s8 %v152
    %v569 = vunpack.c.0.s8 %v153
    %v570 = vunpack.c.0.s8 %v154
    %v571 = vunpack.c.0.s8 %v155
    %v572 = vunpack.c.1.s8 %v148
    %v573 = vunpack.c.1.s8 %v149
    %v574 = vunpack.c.1.s8 %v150
    %v575 = vunpack.c.1.s8 %v151
    %v576 = vunpack.c.1.s8 %v152
    %v577 = vunpack.c.1.s8 %v153
    %v578 = vunpack.c.1.s8 %v154
    %v579 = vunpack.c.1.s8 %v155
    %v580 = vunpack.c.2.s8 %v148
    %v581 = vunpack.c.2.s8 %v149
    %v582 = vunpack.c.2.s8 %v150
    %v583 = vunpack.c.2.s8 %v151
    %v584 = vunpack.c.2.s8 %v152
    %v585 = vunpack.c.2.s8 %v153
    %v586 = vunpack.c.2.s8 %v154
    %v587 = vunpack.c.2.s8 %v155
    %v588 = vunpack.c.3.s8 %v148
    %v589 = vunpack.c.3.s8 %v149
    %v590 = vunpack.c.3.s8 %v150
    %v591 = vunpack.c.3.s8 %v151
    %v592 = vunpack.c.3.s8 %v152
    %v593 = vunpack.c.3.s8 %v153
    %v594 = vunpack.c.3.s8 %v154
    %v595 = vunpack.c.3.s8 %v155
    %v596 = vunpack.c.0.s8 %v156
    %v597 = vunpack.c.0.s8 %v157
    %v598 = vunpack.c.0.s8 %v158
    %v599 = vunpack.c.0.s8 %v159
    %v600 = vunpack.c.0.s8 %v160
    %v601 = vunpack.c.0.s8 %v161
    %v602 = vunpack.c.0.s8 %v162
    %v603 = vunpack.c.0.s8 %v163
    %v604 = vunpack.c.1.s8 %v156
    %v605 = vunpack.c.1.s8 %v157
    %v606 = vunpack.c.1.s8 %v158
    %v607 = vunpack.c.1.s8 %v159
    %v608 = vunpack.c.1.s8 %v160
    %v609 = vunpack.c.1.s8 %v161
    %v610 = vunpack.c.1.s8 %v162
    %v611 = vunpack.c.1.s8 %v163
    %v612 = vunpack.c.2.s8 %v156
    %v613 = vunpack.c.2.s8 %v157
    %v614 = vunpack.c.2.s8 %v158
    %v615 = vunpack.c.2.s8 %v159
    %v616 = vunpack.c.2.s8 %v160
    %v617 = vunpack.c.2.s8 %v161
    %v618 = vunpack.c.2.s8 %v162
    %v619 = vunpack.c.2.s8 %v163
    %v620 = vunpack.c.3.s8 %v156
    %v621 = vunpack.c.3.s8 %v157
    %v622 = vunpack.c.3.s8 %v158
    %v623 = vunpack.c.3.s8 %v159
    %v624 = vunpack.c.3.s8 %v160
    %v625 = vunpack.c.3.s8 %v161
    %v626 = vunpack.c.3.s8 %v162
    %v627 = vunpack.c.3.s8 %v163
    %v628 = vunpack.c.0.s8 %v164
    %v629 = vunpack.c.0.s8 %v165
    %v630 = vunpack.c.0.s8 %v166
    %v631 = vunpack.c.0.s8 %v167
    %v632 = vunpack.c.0.s8 %v168
    %v633 = vunpack.c.0.s8 %v169
    %v634 = vunpack.c.0.s8 %v170
    %v635 = vunpack.c.0.s8 %v171
    %v636 = vunpack.c.1.s8 %v164
    %v637 = vunpack.c.1.s8 %v165
    %v638 = vunpack.c.1.s8 %v166
    %v639 = vunpack.c.1.s8 %v167
    %v640 = vunpack.c.1.s8 %v168
    %v641 = vunpack.c.1.s8 %v169
    %v642 = vunpack.c.1.s8 %v170
    %v643 = vunpack.c.1.s8 %v171
    %v644 = vunpack.c.2.s8 %v164
    %v645 = vunpack.c.2.s8 %v165
    %v646 = vunpack.c.2.s8 %v166
    %v647 = vunpack.c.2.s8 %v167
    %v648 = vunpack.c.2.s8 %v168
    %v649 = vunpack.c.2.s8 %v169
    %v650 = vunpack.c.2.s8 %v170
    %v651 = vunpack.c.2.s8 %v171
    %v652 = vunpack.c.3.s8 %v164
    %v653 = vunpack.c.3.s8 %v165
    %v654 = vunpack.c.3.s8 %v166
    %v655 = vunpack.c.3.s8 %v167
    %v656 = vunpack.c.3.s8 %v168
    %v657 = vunpack.c.3.s8 %v169
    %v658 = vunpack.c.3.s8 %v170
    %v659 = vunpack.c.3.s8 %v171
    %v660 = vunpack.c.0.s8 %v172
    %v661 = vunpack.c.0.s8 %v173
    %v662 = vunpack.c.0.s8 %v174
    %v663 = vunpack.c.0.s8 %v175
    %v664 = vunpack.c.0.s8 %v176
    %v665 = vunpack.c.0.s8 %v177
    %v666 = vunpack.c.0.s8 %v178
    %v667 = vunpack.c.0.s8 %v179
    %v668 = vunpack.c.1.s8 %v172
    %v669 = vunpack.c.1.s8 %v173
    %v670 = vunpack.c.1.s8 %v174
    %v671 = vunpack.c.1.s8 %v175
    %v672 = vunpack.c.1.s8 %v176
    %v673 = vunpack.c.1.s8 %v177
    %v674 = vunpack.c.1.s8 %v178
    %v675 = vunpack.c.1.s8 %v179
    %v676 = vunpack.c.2.s8 %v172
    %v677 = vunpack.c.2.s8 %v173
    %v678 = vunpack.c.2.s8 %v174
    %v679 = vunpack.c.2.s8 %v175
    %v680 = vunpack.c.2.s8 %v176
    %v681 = vunpack.c.2.s8 %v177
    %v682 = vunpack.c.2.s8 %v178
    %v683 = vunpack.c.2.s8 %v179
    %v684 = vunpack.c.3.s8 %v172
    %v685 = vunpack.c.3.s8 %v173
    %v686 = vunpack.c.3.s8 %v174
    %v687 = vunpack.c.3.s8 %v175
    %v688 = vunpack.c.3.s8 %v176
    %v689 = vunpack.c.3.s8 %v177
    %v690 = vunpack.c.3.s8 %v178
    %v691 = vunpack.c.3.s8 %v179
    %v692 = vcvt.s32.f32 %v180
    %v693 = vcvt.s32.f32 %v181
    %v694 = vcvt.s32.f32 %v182
    %v695 = vcvt.s32.f32 %v183
    %v696 = vcvt.s32.f32 %v184
    %v697 = vcvt.s32.f32 %v185
    %v698 = vcvt.s32.f32 %v186
    %v699 = vcvt.s32.f32 %v187
    %v700 = vcvt.s32.f32 %v188
    %v701 = vcvt.s32.f32 %v189
    %v702 = vcvt.s32.f32 %v190
    %v703 = vcvt.s32.f32 %v191
    %v704 = vcvt.s32.f32 %v192
    %v705 = vcvt.s32.f32 %v193
    %v706 = vcvt.s32.f32 %v194
    %v707 = vcvt.s32.f32 %v195
    %v708 = vcvt.s32.f32 %v196
    %v709 = vcvt.s32.f32 %v197
    %v710 = vcvt.s32.f32 %v198
    %v711 = vcvt.s32.f32 %v199
    %v712 = vcvt.s32.f32 %v200
    %v713 = vcvt.s32.f32 %v201
    %v714 = vcvt.s32.f32 %v202
    %v715 = vcvt.s32.f32 %v203
    %v716 = vcvt.s32.f32 %v204
    %v717 = vcvt.s32.f32 %v205
    %v718 = vcvt.s32.f32 %v206
    %v719 = vcvt.s32.f32 %v207
    %v720 = vcvt.s32.f32 %v208
    %v721 = vcvt.s32.f32 %v209
    %v722 = vcvt.s32.f32 %v210
    %v723 = vcvt.s32.f32 %v211
    %v724 = vcvt.s32.f32 %v212
    %v725 = vcvt.s32.f32 %v213
    %v726 = vcvt.s32.f32 %v214
    %v727 = vcvt.s32.f32 %v215
    %v728 = vcvt.s32.f32 %v216
    %v729 = vcvt.s32.f32 %v217
    %v730 = vcvt.s32.f32 %v218
    %v731 = vcvt.s32.f32 %v219
    %v732 = vcvt.s32.f32 %v220
    %v733 = vcvt.s32.f32 %v221
    %v734 = vcvt.s32.f32 %v222
    %v735 = vcvt.s32.f32 %v223
    %v736 = vcvt.s32.f32 %v224
    %v737 = vcvt.s32.f32 %v225
    %v738 = vcvt.s32.f32 %v226
    %v739 = vcvt.s32.f32 %v227
    %v740 = vcvt.s32.f32 %v228
    %v741 = vcvt.s32.f32 %v229
    %v742 = vcvt.s32.f32 %v230
    %v743 = vcvt.s32.f32 %v231
    %v744 = vcvt.s32.f32 %v232
    %v745 = vcvt.s32.f32 %v233
    %v746 = vcvt.s32.f32 %v234
    %v747 = vcvt.s32.f32 %v235
    %v748 = vcvt.s32.f32 %v236
    %v749 = vcvt.s32.f32 %v237
    %v750 = vcvt.s32.f32 %v238
    %v751 = vcvt.s32.f32 %v239
    %v752 = vcvt.s32.f32 %v240
    %v753 = vcvt.s32.f32 %v241
    %v754 = vcvt.s32.f32 %v242
    %v755 = vcvt.s32.f32 %v243
    %v756 = vcvt.s32.f32 %v244
    %v757 = vcvt.s32.f32 %v245
    %v758 = vcvt.s32.f32 %v246
    %v759 = vcvt.s32.f32 %v247
    %v760 = vcvt.s32.f32 %v248
    %v761 = vcvt.s32.f32 %v249
    %v762 = vcvt.s32.f32 %v250
    %v763 = vcvt.s32.f32 %v251
    %v764 = vcvt.s32.f32 %v252
    %v765 = vcvt.s32.f32 %v253
    %v766 = vcvt.s32.f32 %v254
    %v767 = vcvt.s32.f32 %v255
    %v768 = vcvt.s32.f32 %v256
    %v769 = vcvt.s32.f32 %v257
    %v770 = vcvt.s32.f32 %v258
    %v771 = vcvt.s32.f32 %v259
    %v772 = vcvt.s32.f32 %v260
    %v773 = vcvt.s32.f32 %v261
    %v774 = vcvt.s32.f32 %v262
    %v775 = vcvt.s32.f32 %v263
    %v776 = vcvt.s32.f32 %v264
    %v777 = vcvt.s32.f32 %v265
    %v778 = vcvt.s32.f32 %v266
    %v779 = vcvt.s32.f32 %v267
    %v780 = vcvt.s32.f32 %v268
    %v781 = vcvt.s32.f32 %v269
    %v782 = vcvt.s32.f32 %v270
    %v783 = vcvt.s32.f32 %v271
    %v784 = vcvt.s32.f32 %v272
    %v785 = vcvt.s32.f32 %v273
    %v786 = vcvt.s32.f32 %v274
    %v787 = vcvt.s32.f32 %v275
    %v788 = vcvt.s32.f32 %v276
    %v789 = vcvt.s32.f32 %v277
    %v790 = vcvt.s32.f32 %v278
    %v791 = vcvt.s32.f32 %v279
    %v792 = vcvt.s32.f32 %v280
    %v793 = vcvt.s32.f32 %v281
    %v794 = vcvt.s32.f32 %v282
    %v795 = vcvt.s32.f32 %v283
    %v796 = vcvt.s32.f32 %v284
    %v797 = vcvt.s32.f32 %v285
    %v798 = vcvt.s32.f32 %v286
    %v799 = vcvt.s32.f32 %v287
    %v800 = vcvt.s32.f32 %v288
    %v801 = vcvt.s32.f32 %v289
    %v802 = vcvt.s32.f32 %v290
    %v803 = vcvt.s32.f32 %v291
    %v804 = vcvt.s32.f32 %v292
    %v805 = vcvt.s32.f32 %v293
    %v806 = vcvt.s32.f32 %v294
    %v807 = vcvt.s32.f32 %v295
    %v808 = vcvt.s32.f32 %v296
    %v809 = vcvt.s32.f32 %v297
    %v810 = vcvt.s32.f32 %v298
    %v811 = vcvt.s32.f32 %v299
    %v812 = vcvt.s32.f32 %v300
    %v813 = vcvt.s32.f32 %v301
    %v814 = vcvt.s32.f32 %v302
    %v815 = vcvt.s32.f32 %v303
    %v816 = vcvt.s32.f32 %v304
    %v817 = vcvt.s32.f32 %v305
    %v818 = vcvt.s32.f32 %v306
    %v819 = vcvt.s32.f32 %v307
    %v820 = vcvt.s32.f32 %v308
    %v821 = vcvt.s32.f32 %v309
    %v822 = vcvt.s32.f32 %v310
    %v823 = vcvt.s32.f32 %v311
    %v824 = vcvt.s32.f32 %v312
    %v825 = vcvt.s32.f32 %v313
    %v826 = vcvt.s32.f32 %v314
    %v827 = vcvt.s32.f32 %v315
    %v828 = vcvt.s32.f32 %v316
    %v829 = vcvt.s32.f32 %v317
    %v830 = vcvt.s32.f32 %v318
    %v831 = vcvt.s32.f32 %v319
    %v832 = vcvt.s32.f32 %v320
    %v833 = vcvt.s32.f32 %v321
    %v834 = vcvt.s32.f32 %v322
    %v835 = vcvt.s32.f32 %v323
    %v836 = vcvt.s32.f32 %v324
    %v837 = vcvt.s32.f32 %v325
    %v838 = vcvt.s32.f32 %v326
    %v839 = vcvt.s32.f32 %v327
    %v840 = vcvt.s32.f32 %v328
    %v841 = vcvt.s32.f32 %v329
    %v842 = vcvt.s32.f32 %v330
    %v843 = vcvt.s32.f32 %v331
    %v844 = vcvt.s32.f32 %v332
    %v845 = vcvt.s32.f32 %v333
    %v846 = vcvt.s32.f32 %v334
    %v847 = vcvt.s32.f32 %v335
    %v848 = vcvt.s32.f32 %v336
    %v849 = vcvt.s32.f32 %v337
    %v850 = vcvt.s32.f32 %v338
    %v851 = vcvt.s32.f32 %v339
    %v852 = vcvt.s32.f32 %v340
    %v853 = vcvt.s32.f32 %v341
    %v854 = vcvt.s32.f32 %v342
    %v855 = vcvt.s32.f32 %v343
    %v856 = vcvt.s32.f32 %v344
    %v857 = vcvt.s32.f32 %v345
    %v858 = vcvt.s32.f32 %v346
    %v859 = vcvt.s32.f32 %v347
    %v860 = vcvt.s32.f32 %v348
    %v861 = vcvt.s32.f32 %v349
    %v862 = vcvt.s32.f32 %v350
    %v863 = vcvt.s32.f32 %v351
    %v864 = vcvt.s32.f32 %v352
    %v865 = vcvt.s32.f32 %v353
    %v866 = vcvt.s32.f32 %v354
    %v867 = vcvt.s32.f32 %v355
    %v868 = vcvt.s32.f32 %v356
    %v869 = vcvt.s32.f32 %v357
    %v870 = vcvt.s32.f32 %v358
    %v871 = vcvt.s32.f32 %v359
    %v872 = vcvt.s32.f32 %v360
    %v873 = vcvt.s32.f32 %v361
    %v874 = vcvt.s32.f32 %v362
    %v875 = vcvt.s32.f32 %v363
    %v876 = vcvt.s32.f32 %v364
    %v877 = vcvt.s32.f32 %v365
    %v878 = vcvt.s32.f32 %v366
    %v879 = vcvt.s32.f32 %v367
    %v880 = vcvt.s32.f32 %v368
    %v881 = vcvt.s32.f32 %v369
    %v882 = vcvt.s32.f32 %v370
    %v883 = vcvt.s32.f32 %v371
    %v884 = vcvt.s32.f32 %v372
    %v885 = vcvt.s32.f32 %v373
    %v886 = vcvt.s32.f32 %v374
    %v887 = vcvt.s32.f32 %v375
    %v888 = vcvt.s32.f32 %v376
    %v889 = vcvt.s32.f32 %v377
    %v890 = vcvt.s32.f32 %v378
    %v891 = vcvt.s32.f32 %v379
    %v892 = vcvt.s32.f32 %v380
    %v893 = vcvt.s32.f32 %v381
    %v894 = vcvt.s32.f32 %v382
    %v895 = vcvt.s32.f32 %v383
    %v896 = vcvt.s32.f32 %v384
    %v897 = vcvt.s32.f32 %v385
    %v898 = vcvt.s32.f32 %v386
    %v899 = vcvt.s32.f32 %v387
    %v900 = vcvt.s32.f32 %v388
    %v901 = vcvt.s32.f32 %v389
    %v902 = vcvt.s32.f32 %v390
    %v903 = vcvt.s32.f32 %v391
    %v904 = vcvt.s32.f32 %v392
    %v905 = vcvt.s32.f32 %v393
    %v906 = vcvt.s32.f32 %v394
    %v907 = vcvt.s32.f32 %v395
    %v908 = vcvt.s32.f32 %v396
    %v909 = vcvt.s32.f32 %v397
    %v910 = vcvt.s32.f32 %v398
    %v911 = vcvt.s32.f32 %v399
    %v912 = vcvt.s32.f32 %v400
    %v913 = vcvt.s32.f32 %v401
    %v914 = vcvt.s32.f32 %v402
    %v915 = vcvt.s32.f32 %v403
    %v916 = vcvt.s32.f32 %v404
    %v917 = vcvt.s32.f32 %v405
    %v918 = vcvt.s32.f32 %v406
    %v919 = vcvt.s32.f32 %v407
    %v920 = vcvt.s32.f32 %v408
    %v921 = vcvt.s32.f32 %v409
    %v922 = vcvt.s32.f32 %v410
    %v923 = vcvt.s32.f32 %v411
    %v924 = vcvt.s32.f32 %v412
    %v925 = vcvt.s32.f32 %v413
    %v926 = vcvt.s32.f32 %v414
    %v927 = vcvt.s32.f32 %v415
    %v928 = vcvt.s32.f32 %v416
    %v929 = vcvt.s32.f32 %v417
    %v930 = vcvt.s32.f32 %v418
    %v931 = vcvt.s32.f32 %v419
    %v932 = vcvt.s32.f32 %v420
    %v933 = vcvt.s32.f32 %v421
    %v934 = vcvt.s32.f32 %v422
    %v935 = vcvt.s32.f32 %v423
    %v936 = vcvt.s32.f32 %v424
    %v937 = vcvt.s32.f32 %v425
    %v938 = vcvt.s32.f32 %v426
    %v939 = vcvt.s32.f32 %v427
    %v940 = vcvt.s32.f32 %v428
    %v941 = vcvt.s32.f32 %v429
    %v942 = vcvt.s32.f32 %v430
    %v943 = vcvt.s32.f32 %v431
    %v944 = vcvt.s32.f32 %v432
    %v945 = vcvt.s32.f32 %v433
    %v946 = vcvt.s32.f32 %v434
    %v947 = vcvt.s32.f32 %v435
    %v948 = vcvt.s32.f32 %v436
    %v949 = vcvt.s32.f32 %v437
    %v950 = vcvt.s32.f32 %v438
    %v951 = vcvt.s32.f32 %v439
    %v952 = vcvt.s32.f32 %v440
    %v953 = vcvt.s32.f32 %v441
    %v954 = vcvt.s32.f32 %v442
    %v955 = vcvt.s32.f32 %v443
    %v956 = vcvt.s32.f32 %v444
    %v957 = vcvt.s32.f32 %v445
    %v958 = vcvt.s32.f32 %v446
    %v959 = vcvt.s32.f32 %v447
    %v960 = vcvt.s32.f32 %v448
    %v961 = vcvt.s32.f32 %v449
    %v962 = vcvt.s32.f32 %v450
    %v963 = vcvt.s32.f32 %v451
    %v964 = vcvt.s32.f32 %v452
    %v965 = vcvt.s32.f32 %v453
    %v966 = vcvt.s32.f32 %v454
    %v967 = vcvt.s32.f32 %v455
    %v968 = vcvt.s32.f32 %v456
    %v969 = vcvt.s32.f32 %v457
    %v970 = vcvt.s32.f32 %v458
    %v971 = vcvt.s32.f32 %v459
    %v972 = vcvt.s32.f32 %v460
    %v973 = vcvt.s32.f32 %v461
    %v974 = vcvt.s32.f32 %v462
    %v975 = vcvt.s32.f32 %v463
    %v976 = vcvt.s32.f32 %v464
    %v977 = vcvt.s32.f32 %v465
    %v978 = vcvt.s32.f32 %v466
    %v979 = vcvt.s32.f32 %v467
    %v980 = vcvt.s32.f32 %v468
    %v981 = vcvt.s32.f32 %v469
    %v982 = vcvt.s32.f32 %v470
    %v983 = vcvt.s32.f32 %v471
    %v984 = vcvt.s32.f32 %v472
    %v985 = vcvt.s32.f32 %v473
    %v986 = vcvt.s32.f32 %v474
    %v987 = vcvt.s32.f32 %v475
    %v988 = vcvt.s32.f32 %v476
    %v989 = vcvt.s32.f32 %v477
    %v990 = vcvt.s32.f32 %v478
    %v991 = vcvt.s32.f32 %v479
    %v992 = vcvt.s32.f32 %v480
    %v993 = vcvt.s32.f32 %v481
    %v994 = vcvt.s32.f32 %v482
    %v995 = vcvt.s32.f32 %v483
    %v996 = vcvt.s32.f32 %v484
    %v997 = vcvt.s32.f32 %v485
    %v998 = vcvt.s32.f32 %v486
    %v999 = vcvt.s32.f32 %v487
    %v1000 = vcvt.s32.f32 %v488
    %v1001 = vcvt.s32.f32 %v489
    %v1002 = vcvt.s32.f32 %v490
    %v1003 = vcvt.s32.f32 %v491
    %v1004 = vcvt.s32.f32 %v492
    %v1005 = vcvt.s32.f32 %v493
    %v1006 = vcvt.s32.f32 %v494
    %v1007 = vcvt.s32.f32 %v495
    %v1008 = vcvt.s32.f32 %v496
    %v1009 = vcvt.s32.f32 %v497
    %v1010 = vcvt.s32.f32 %v498
    %v1011 = vcvt.s32.f32 %v499
    %v1012 = vcvt.s32.f32 %v500
    %v1013 = vcvt.s32.f32 %v501
    %v1014 = vcvt.s32.f32 %v502
    %v1015 = vcvt.s32.f32 %v503
    %v1016 = vcvt.s32.f32 %v504
    %v1017 = vcvt.s32.f32 %v505
    %v1018 = vcvt.s32.f32 %v506
    %v1019 = vcvt.s32.f32 %v507
    %v1020 = vcvt.s32.f32 %v508
    %v1021 = vcvt.s32.f32 %v509
    %v1022 = vcvt.s32.f32 %v510
    %v1023 = vcvt.s32.f32 %v511
    %v1024 = vcvt.s32.f32 %v512
    %v1025 = vcvt.s32.f32 %v513
    %v1026 = vcvt.s32.f32 %v514
    %v1027 = vcvt.s32.f32 %v515
    %v1028 = vcvt.s32.f32 %v516
    %v1029 = vcvt.s32.f32 %v517
    %v1030 = vcvt.s32.f32 %v518
    %v1031 = vcvt.s32.f32 %v519
    %v1032 = vcvt.s32.f32 %v520
    %v1033 = vcvt.s32.f32 %v521
    %v1034 = vcvt.s32.f32 %v522
    %v1035 = vcvt.s32.f32 %v523
    %v1036 = vcvt.s32.f32 %v524
    %v1037 = vcvt.s32.f32 %v525
    %v1038 = vcvt.s32.f32 %v526
    %v1039 = vcvt.s32.f32 %v527
    %v1040 = vcvt.s32.f32 %v528
    %v1041 = vcvt.s32.f32 %v529
    %v1042 = vcvt.s32.f32 %v530
    %v1043 = vcvt.s32.f32 %v531
    %v1044 = vcvt.s32.f32 %v532
    %v1045 = vcvt.s32.f32 %v533
    %v1046 = vcvt.s32.f32 %v534
    %v1047 = vcvt.s32.f32 %v535
    %v1048 = vcvt.s32.f32 %v536
    %v1049 = vcvt.s32.f32 %v537
    %v1050 = vcvt.s32.f32 %v538
    %v1051 = vcvt.s32.f32 %v539
    %v1052 = vcvt.s32.f32 %v540
    %v1053 = vcvt.s32.f32 %v541
    %v1054 = vcvt.s32.f32 %v542
    %v1055 = vcvt.s32.f32 %v543
    %v1056 = vcvt.s32.f32 %v544
    %v1057 = vcvt.s32.f32 %v545
    %v1058 = vcvt.s32.f32 %v546
    %v1059 = vcvt.s32.f32 %v547
    %v1060 = vcvt.s32.f32 %v548
    %v1061 = vcvt.s32.f32 %v549
    %v1062 = vcvt.s32.f32 %v550
    %v1063 = vcvt.s32.f32 %v551
    %v1064 = vcvt.s32.f32 %v552
    %v1065 = vcvt.s32.f32 %v553
    %v1066 = vcvt.s32.f32 %v554
    %v1067 = vcvt.s32.f32 %v555
    %v1068 = vcvt.s32.f32 %v556
    %v1069 = vcvt.s32.f32 %v557
    %v1070 = vcvt.s32.f32 %v558
    %v1071 = vcvt.s32.f32 %v559
    %v1072 = vcvt.s32.f32 %v560
    %v1073 = vcvt.s32.f32 %v561
    %v1074 = vcvt.s32.f32 %v562
    %v1075 = vcvt.s32.f32 %v563
    %v1076 = vcvt.s32.f32 %v564
    %v1077 = vcvt.s32.f32 %v565
    %v1078 = vcvt.s32.f32 %v566
    %v1079 = vcvt.s32.f32 %v567
    %v1080 = vcvt.s32.f32 %v568
    %v1081 = vcvt.s32.f32 %v569
    %v1082 = vcvt.s32.f32 %v570
    %v1083 = vcvt.s32.f32 %v571
    %v1084 = vcvt.s32.f32 %v572
    %v1085 = vcvt.s32.f32 %v573
    %v1086 = vcvt.s32.f32 %v574
    %v1087 = vcvt.s32.f32 %v575
    %v1088 = vcvt.s32.f32 %v576
    %v1089 = vcvt.s32.f32 %v577
    %v1090 = vcvt.s32.f32 %v578
    %v1091 = vcvt.s32.f32 %v579
    %v1092 = vcvt.s32.f32 %v580
    %v1093 = vcvt.s32.f32 %v581
    %v1094 = vcvt.s32.f32 %v582
    %v1095 = vcvt.s32.f32 %v583
    %v1096 = vcvt.s32.f32 %v584
    %v1097 = vcvt.s32.f32 %v585
    %v1098 = vcvt.s32.f32 %v586
    %v1099 = vcvt.s32.f32 %v587
    %v1100 = vcvt.s32.f32 %v588
    %v1101 = vcvt.s32.f32 %v589
    %v1102 = vcvt.s32.f32 %v590
    %v1103 = vcvt.s32.f32 %v591
    %v1104 = vcvt.s32.f32 %v592
    %v1105 = vcvt.s32.f32 %v593
    %v1106 = vcvt.s32.f32 %v594
    %v1107 = vcvt.s32.f32 %v595
    %v1108 = vcvt.s32.f32 %v596
    %v1109 = vcvt.s32.f32 %v597
    %v1110 = vcvt.s32.f32 %v598
    %v1111 = vcvt.s32.f32 %v599
    %v1112 = vcvt.s32.f32 %v600
    %v1113 = vcvt.s32.f32 %v601
    %v1114 = vcvt.s32.f32 %v602
    %v1115 = vcvt.s32.f32 %v603
    %v1116 = vcvt.s32.f32 %v604
    %v1117 = vcvt.s32.f32 %v605
    %v1118 = vcvt.s32.f32 %v606
    %v1119 = vcvt.s32.f32 %v607
    %v1120 = vcvt.s32.f32 %v608
    %v1121 = vcvt.s32.f32 %v609
    %v1122 = vcvt.s32.f32 %v610
    %v1123 = vcvt.s32.f32 %v611
    %v1124 = vcvt.s32.f32 %v612
    %v1125 = vcvt.s32.f32 %v613
    %v1126 = vcvt.s32.f32 %v614
    %v1127 = vcvt.s32.f32 %v615
    %v1128 = vcvt.s32.f32 %v616
    %v1129 = vcvt.s32.f32 %v617
    %v1130 = vcvt.s32.f32 %v618
    %v1131 = vcvt.s32.f32 %v619
    %v1132 = vcvt.s32.f32 %v620
    %v1133 = vcvt.s32.f32 %v621
    %v1134 = vcvt.s32.f32 %v622
    %v1135 = vcvt.s32.f32 %v623
    %v1136 = vcvt.s32.f32 %v624
    %v1137 = vcvt.s32.f32 %v625
    %v1138 = vcvt.s32.f32 %v626
    %v1139 = vcvt.s32.f32 %v627
    %v1140 = vcvt.s32.f32 %v628
    %v1141 = vcvt.s32.f32 %v629
    %v1142 = vcvt.s32.f32 %v630
    %v1143 = vcvt.s32.f32 %v631
    %v1144 = vcvt.s32.f32 %v632
    %v1145 = vcvt.s32.f32 %v633
    %v1146 = vcvt.s32.f32 %v634
    %v1147 = vcvt.s32.f32 %v635
    %v1148 = vcvt.s32.f32 %v636
    %v1149 = vcvt.s32.f32 %v637
    %v1150 = vcvt.s32.f32 %v638
    %v1151 = vcvt.s32.f32 %v639
    %v1152 = vcvt.s32.f32 %v640
    %v1153 = vcvt.s32.f32 %v641
    %v1154 = vcvt.s32.f32 %v642
    %v1155 = vcvt.s32.f32 %v643
    %v1156 = vcvt.s32.f32 %v644
    %v1157 = vcvt.s32.f32 %v645
    %v1158 = vcvt.s32.f32 %v646
    %v1159 = vcvt.s32.f32 %v647
    %v1160 = vcvt.s32.f32 %v648
    %v1161 = vcvt.s32.f32 %v649
    %v1162 = vcvt.s32.f32 %v650
    %v1163 = vcvt.s32.f32 %v651
    %v1164 = vcvt.s32.f32 %v652
    %v1165 = vcvt.s32.f32 %v653
    %v1166 = vcvt.s32.f32 %v654
    %v1167 = vcvt.s32.f32 %v655
    %v1168 = vcvt.s32.f32 %v656
    %v1169 = vcvt.s32.f32 %v657
    %v1170 = vcvt.s32.f32 %v658
    %v1171 = vcvt.s32.f32 %v659
    %v1172 = vcvt.s32.f32 %v660
    %v1173 = vcvt.s32.f32 %v661
    %v1174 = vcvt.s32.f32 %v662
    %v1175 = vcvt.s32.f32 %v663
    %v1176 = vcvt.s32.f32 %v664
    %v1177 = vcvt.s32.f32 %v665
    %v1178 = vcvt.s32.f32 %v666
    %v1179 = vcvt.s32.f32 %v667
    %v1180 = vcvt.s32.f32 %v668
    %v1181 = vcvt.s32.f32 %v669
    %v1182 = vcvt.s32.f32 %v670
    %v1183 = vcvt.s32.f32 %v671
    %v1184 = vcvt.s32.f32 %v672
    %v1185 = vcvt.s32.f32 %v673
    %v1186 = vcvt.s32.f32 %v674
    %v1187 = vcvt.s32.f32 %v675
    %v1188 = vcvt.s32.f32 %v676
    %v1189 = vcvt.s32.f32 %v677
    %v1190 = vcvt.s32.f32 %v678
    %v1191 = vcvt.s32.f32 %v679
    %v1192 = vcvt.s32.f32 %v680
    %v1193 = vcvt.s32.f32 %v681
    %v1194 = vcvt.s32.f32 %v682
    %v1195 = vcvt.s32.f32 %v683
    %v1196 = vcvt.s32.f32 %v684
    %v1197 = vcvt.s32.f32 %v685
    %v1198 = vcvt.s32.f32 %v686
    %v1199 = vcvt.s32.f32 %v687
    %v1200 = vcvt.s32.f32 %v688
    %v1201 = vcvt.s32.f32 %v689
    %v1202 = vcvt.s32.f32 %v690
    %v1203 = vcvt.s32.f32 %v691
    %v1204 = vld [vmem:[#allocation5] sm:$0xff]
    %v1205 = vld [vmem:[#allocation5 + $0x8] sm:$0xff]
    %v1206 = vld [vmem:[#allocation5 + $0x10] sm:$0xff]
    %v1207 = vld [vmem:[#allocation5 + $0x18] sm:$0xff]
    %v1208 = vld [vmem:[#allocation5 + $0x20] sm:$0xff]
    %v1209 = vld [vmem:[#allocation5 + $0x28] sm:$0xff]
    %v1210 = vld [vmem:[#allocation5 + $0x30] sm:$0xff]
    %v1211 = vld [vmem:[#allocation5 + $0x38] sm:$0xff]
    %v1212 = vld [vmem:[#allocation5 + $0x40] sm:$0xff]
    %v1213 = vld [vmem:[#allocation5 + $0x48] sm:$0xff]
    %v1214 = vld [vmem:[#allocation5 + $0x50] sm:$0xff]
    %v1215 = vld [vmem:[#allocation5 + $0x58] sm:$0xff]
    %v1216 = vld [vmem:[#allocation5 + $0x60] sm:$0xff]
    %v1217 = vld [vmem:[#allocation5 + $0x68] sm:$0xff]
    %v1218 = vld [vmem:[#allocation5 + $0x70] sm:$0xff]
    %v1219 = vld [vmem:[#allocation5 + $0x78] sm:$0xff]
    %v1220 = vld [vmem:[#allocation5 + $0x80] sm:$0xff]
    %v1221 = vld [vmem:[#allocation5 + $0x88] sm:$0xff]
    %v1222 = vld [vmem:[#allocation5 + $0x90] sm:$0xff]
    %v1223 = vld [vmem:[#allocation5 + $0x98] sm:$0xff]
    %v1224 = vld [vmem:[#allocation5 + $0xa0] sm:$0xff]
    %v1225 = vld [vmem:[#allocation5 + $0xa8] sm:$0xff]
    %v1226 = vld [vmem:[#allocation5 + $0xb0] sm:$0xff]
    %v1227 = vld [vmem:[#allocation5 + $0xb8] sm:$0xff]
    %v1228 = vld [vmem:[#allocation5 + $0xc0] sm:$0xff]
    %v1229 = vld [vmem:[#allocation5 + $0xc8] sm:$0xff]
    %v1230 = vld [vmem:[#allocation5 + $0xd0] sm:$0xff]
    %v1231 = vld [vmem:[#allocation5 + $0xd8] sm:$0xff]
    %v1232 = vld [vmem:[#allocation5 + $0xe0] sm:$0xff]
    %v1233 = vld [vmem:[#allocation5 + $0xe8] sm:$0xff]
    %v1234 = vld [vmem:[#allocation5 + $0xf0] sm:$0xff]
    %v1235 = vld [vmem:[#allocation5 + $0xf8] sm:$0xff]
    %v1236 = vld [vmem:[#allocation5 + $0x100] sm:$0xff]
    %v1237 = vld [vmem:[#allocation5 + $0x108] sm:$0xff]
    %v1238 = vld [vmem:[#allocation5 + $0x110] sm:$0xff]
    %v1239 = vld [vmem:[#allocation5 + $0x118] sm:$0xff]
    %v1240 = vld [vmem:[#allocation5 + $0x120] sm:$0xff]
    %v1241 = vld [vmem:[#allocation5 + $0x128] sm:$0xff]
    %v1242 = vld [vmem:[#allocation5 + $0x130] sm:$0xff]
    %v1243 = vld [vmem:[#allocation5 + $0x138] sm:$0xff]
    %v1244 = vld [vmem:[#allocation5 + $0x140] sm:$0xff]
    %v1245 = vld [vmem:[#allocation5 + $0x148] sm:$0xff]
    %v1246 = vld [vmem:[#allocation5 + $0x150] sm:$0xff]
    %v1247 = vld [vmem:[#allocation5 + $0x158] sm:$0xff]
    %v1248 = vld [vmem:[#allocation5 + $0x160] sm:$0xff]
    %v1249 = vld [vmem:[#allocation5 + $0x168] sm:$0xff]
    %v1250 = vld [vmem:[#allocation5 + $0x170] sm:$0xff]
    %v1251 = vld [vmem:[#allocation5 + $0x178] sm:$0xff]
    %v1252 = vld [vmem:[#allocation5 + $0x180] sm:$0xff]
    %v1253 = vld [vmem:[#allocation5 + $0x188] sm:$0xff]
    %v1254 = vld [vmem:[#allocation5 + $0x190] sm:$0xff]
    %v1255 = vld [vmem:[#allocation5 + $0x198] sm:$0xff]
    %v1256 = vld [vmem:[#allocation5 + $0x1a0] sm:$0xff]
    %v1257 = vld [vmem:[#allocation5 + $0x1a8] sm:$0xff]
    %v1258 = vld [vmem:[#allocation5 + $0x1b0] sm:$0xff]
    %v1259 = vld [vmem:[#allocation5 + $0x1b8] sm:$0xff]
    %v1260 = vld [vmem:[#allocation5 + $0x1c0] sm:$0xff]
    %v1261 = vld [vmem:[#allocation5 + $0x1c8] sm:$0xff]
    %v1262 = vld [vmem:[#allocation5 + $0x1d0] sm:$0xff]
    %v1263 = vld [vmem:[#allocation5 + $0x1d8] sm:$0xff]
    %v1264 = vld [vmem:[#allocation5 + $0x1e0] sm:$0xff]
    %v1265 = vld [vmem:[#allocation5 + $0x1e8] sm:$0xff]
    %v1266 = vld [vmem:[#allocation5 + $0x1f0] sm:$0xff]
    %v1267 = vld [vmem:[#allocation5 + $0x1f8] sm:$0xff]
    %v1268 = vld [vmem:[#allocation5 + $0x200] sm:$0xff]
    %v1269 = vld [vmem:[#allocation5 + $0x208] sm:$0xff]
    %v1270 = vld [vmem:[#allocation5 + $0x210] sm:$0xff]
    %v1271 = vld [vmem:[#allocation5 + $0x218] sm:$0xff]
    %v1272 = vld [vmem:[#allocation5 + $0x220] sm:$0xff]
    %v1273 = vld [vmem:[#allocation5 + $0x228] sm:$0xff]
    %v1274 = vld [vmem:[#allocation5 + $0x230] sm:$0xff]
    %v1275 = vld [vmem:[#allocation5 + $0x238] sm:$0xff]
    %v1276 = vld [vmem:[#allocation5 + $0x240] sm:$0xff]
    %v1277 = vld [vmem:[#allocation5 + $0x248] sm:$0xff]
    %v1278 = vld [vmem:[#allocation5 + $0x250] sm:$0xff]
    %v1279 = vld [vmem:[#allocation5 + $0x258] sm:$0xff]
    %v1280 = vld [vmem:[#allocation5 + $0x260] sm:$0xff]
    %v1281 = vld [vmem:[#allocation5 + $0x268] sm:$0xff]
    %v1282 = vld [vmem:[#allocation5 + $0x270] sm:$0xff]
    %v1283 = vld [vmem:[#allocation5 + $0x278] sm:$0xff]
    %v1284 = vld [vmem:[#allocation5 + $0x280] sm:$0xff]
    %v1285 = vld [vmem:[#allocation5 + $0x288] sm:$0xff]
    %v1286 = vld [vmem:[#allocation5 + $0x290] sm:$0xff]
    %v1287 = vld [vmem:[#allocation5 + $0x298] sm:$0xff]
    %v1288 = vld [vmem:[#allocation5 + $0x2a0] sm:$0xff]
    %v1289 = vld [vmem:[#allocation5 + $0x2a8] sm:$0xff]
    %v1290 = vld [vmem:[#allocation5 + $0x2b0] sm:$0xff]
    %v1291 = vld [vmem:[#allocation5 + $0x2b8] sm:$0xff]
    %v1292 = vld [vmem:[#allocation5 + $0x2c0] sm:$0xff]
    %v1293 = vld [vmem:[#allocation5 + $0x2c8] sm:$0xff]
    %v1294 = vld [vmem:[#allocation5 + $0x2d0] sm:$0xff]
    %v1295 = vld [vmem:[#allocation5 + $0x2d8] sm:$0xff]
    %v1296 = vld [vmem:[#allocation5 + $0x2e0] sm:$0xff]
    %v1297 = vld [vmem:[#allocation5 + $0x2e8] sm:$0xff]
    %v1298 = vld [vmem:[#allocation5 + $0x2f0] sm:$0xff]
    %v1299 = vld [vmem:[#allocation5 + $0x2f8] sm:$0xff]
    %v1300 = vld [vmem:[#allocation5 + $0x300] sm:$0xff]
    %v1301 = vld [vmem:[#allocation5 + $0x308] sm:$0xff]
    %v1302 = vld [vmem:[#allocation5 + $0x310] sm:$0xff]
    %v1303 = vld [vmem:[#allocation5 + $0x318] sm:$0xff]
    %v1304 = vld [vmem:[#allocation5 + $0x320] sm:$0xff]
    %v1305 = vld [vmem:[#allocation5 + $0x328] sm:$0xff]
    %v1306 = vld [vmem:[#allocation5 + $0x330] sm:$0xff]
    %v1307 = vld [vmem:[#allocation5 + $0x338] sm:$0xff]
    %v1308 = vld [vmem:[#allocation5 + $0x340] sm:$0xff]
    %v1309 = vld [vmem:[#allocation5 + $0x348] sm:$0xff]
    %v1310 = vld [vmem:[#allocation5 + $0x350] sm:$0xff]
    %v1311 = vld [vmem:[#allocation5 + $0x358] sm:$0xff]
    %v1312 = vld [vmem:[#allocation5 + $0x360] sm:$0xff]
    %v1313 = vld [vmem:[#allocation5 + $0x368] sm:$0xff]
    %v1314 = vld [vmem:[#allocation5 + $0x370] sm:$0xff]
    %v1315 = vld [vmem:[#allocation5 + $0x378] sm:$0xff]
    %v1316 = vld [vmem:[#allocation5 + $0x380] sm:$0xff]
    %v1317 = vld [vmem:[#allocation5 + $0x388] sm:$0xff]
    %v1318 = vld [vmem:[#allocation5 + $0x390] sm:$0xff]
    %v1319 = vld [vmem:[#allocation5 + $0x398] sm:$0xff]
    %v1320 = vld [vmem:[#allocation5 + $0x3a0] sm:$0xff]
    %v1321 = vld [vmem:[#allocation5 + $0x3a8] sm:$0xff]
    %v1322 = vld [vmem:[#allocation5 + $0x3b0] sm:$0xff]
    %v1323 = vld [vmem:[#allocation5 + $0x3b8] sm:$0xff]
    %v1324 = vld [vmem:[#allocation5 + $0x3c0] sm:$0xff]
    %v1325 = vld [vmem:[#allocation5 + $0x3c8] sm:$0xff]
    %v1326 = vld [vmem:[#allocation5 + $0x3d0] sm:$0xff]
    %v1327 = vld [vmem:[#allocation5 + $0x3d8] sm:$0xff]
    %v1328 = vld [vmem:[#allocation5 + $0x3e0] sm:$0xff]
    %v1329 = vld [vmem:[#allocation5 + $0x3e8] sm:$0xff]
    %v1330 = vld [vmem:[#allocation5 + $0x3f0] sm:$0xff]
    %v1331 = vld [vmem:[#allocation5 + $0x3f8] sm:$0xff]
    %1332 = vmatprep.subr.mxu0 0.0
    %1333 = vmatpush1.msra.mxu0 %v1219
    %1334 = vmatprep.subr.mxu0 0.0
    %1335 = vmatpush1.msra.mxu0 %v1218
    %1336 = vmatprep.subr.mxu0 0.0
    %1337 = vmatpush1.msra.mxu0 %v1217
    %1338 = vmatprep.subr.mxu0 0.0
    %1339 = vmatpush1.msra.mxu0 %v1216
    %1340 = vmatprep.subr.mxu0 0.0
    %1341 = vmatpush1.msra.mxu0 %v1215
    %1342 = vmatprep.subr.mxu0 0.0
    %1343 = vmatpush1.msra.mxu0 %v1214
    %1344 = vmatprep.subr.mxu0 0.0
    %1345 = vmatpush1.msra.mxu0 %v1213
    %1346 = vmatprep.subr.mxu0 0.0
    %1347 = vmatpush1.msra.mxu0 %v1212
    %1348 = vmatprep.subr.mxu0 0.0
    %1349 = vmatpush1.msra.mxu0 %v1211
    %1350 = vmatprep.subr.mxu0 0.0
    %1351 = vmatpush1.msra.mxu0 %v1210
    %1352 = vmatprep.subr.mxu0 0.0
    %1353 = vmatpush1.msra.mxu0 %v1209
    %1354 = vmatprep.subr.mxu0 0.0
    %1355 = vmatpush1.msra.mxu0 %v1208
    %1356 = vmatprep.subr.mxu0 0.0
    %1357 = vmatpush1.msra.mxu0 %v1207
    %1358 = vmatprep.subr.mxu0 0.0
    %1359 = vmatpush1.msra.mxu0 %v1206
    %1360 = vmatprep.subr.mxu0 0.0
    %1361 = vmatpush1.msra.mxu0 %v1205
    %1362 = vmatprep.subr.mxu0 0.0
    %1363 = vmatpush1.msra.mxu0 %v1204
    %1364 = vmatprep.subr.mxu0 0.0
    %1365 = vmatpush2.msra.mxu0 %v1235
    %1366 = vmatprep.subr.mxu0 0.0
    %1367 = vmatpush2.msra.mxu0 %v1234
    %1368 = vmatprep.subr.mxu0 0.0
    %1369 = vmatpush2.msra.mxu0 %v1233
    %1370 = vmatprep.subr.mxu0 0.0
    %1371 = vmatpush2.msra.mxu0 %v1232
    %1372 = vmatprep.subr.mxu0 0.0
    %1373 = vmatpush2.msra.mxu0 %v1231
    %1374 = vmatprep.subr.mxu0 0.0
    %1375 = vmatpush2.msra.mxu0 %v1230
    %1376 = vmatprep.subr.mxu0 0.0
    %1377 = vmatpush2.msra.mxu0 %v1229
    %1378 = vmatprep.subr.mxu0 0.0
    %1379 = vmatpush2.msra.mxu0 %v1228
    %1380 = vmatprep.subr.mxu0 0.0
    %1381 = vmatpush2.msra.mxu0 %v1227
    %1382 = vmatprep.subr.mxu0 0.0
    %1383 = vmatpush2.msra.mxu0 %v1226
    %1384 = vmatprep.subr.mxu0 0.0
    %1385 = vmatpush2.msra.mxu0 %v1225
    %1386 = vmatprep.subr.mxu0 0.0
    %1387 = vmatpush2.msra.mxu0 %v1224
    %1388 = vmatprep.subr.mxu0 0.0
    %1389 = vmatpush2.msra.mxu0 %v1223
    %1390 = vmatprep.subr.mxu0 0.0
    %1391 = vmatpush2.msra.mxu0 %v1222
    %1392 = vmatprep.subr.mxu0 0.0
    %1393 = vmatpush2.msra.mxu0 %v1221
    %1394 = vmatprep.subr.mxu0 0.0
    %1395 = vmatpush2.msra.mxu0 %v1220
    %1396 = vmatprep.mubr.f32.mxu0 %v693
    %1397 = vmatmul.mubr.f32.gmra.mxu0 %v692
    %v1398 = vpop.f32.mrf.mxu0
    %v1399 = vadd.f32 0.0, %v1398
    %v1400 = vpop.f32.mrf.mxu0
    %1401 = vmatprep.mubr.f32.mxu0 %v701
    %1402 = vmatmul.mubr.f32.gmra.mxu0 %v700
    %v1403 = vpop.f32.mrf.mxu0
    %v1404 = vadd.f32 0.0, %v1403
    %v1405 = vpop.f32.mrf.mxu0
    %1406 = vmatprep.mubr.f32.mxu0 %v709
    %1407 = vmatmul.mubr.f32.gmra.mxu0 %v708
    %v1408 = vpop.f32.mrf.mxu0
    %v1409 = vadd.f32 0.0, %v1408
    %v1410 = vpop.f32.mrf.mxu0
    %1411 = vmatprep.mubr.f32.mxu0 %v717
    %1412 = vmatmul.mubr.f32.gmra.mxu0 %v716
    %v1413 = vpop.f32.mrf.mxu0
    %v1414 = vadd.f32 0.0, %v1413
    %v1415 = vpop.f32.mrf.mxu0
    %1416 = vmatprep.mubr.f32.mxu0 %v725
    %1417 = vmatmul.mubr.f32.gmra.mxu0 %v724
    %v1418 = vpop.f32.mrf.mxu0
    %v1419 = vadd.f32 0.0, %v1418
    %v1420 = vpop.f32.mrf.mxu0
    %1421 = vmatprep.mubr.f32.mxu0 %v733
    %1422 = vmatmul.mubr.f32.gmra.mxu0 %v732
    %v1423 = vpop.f32.mrf.mxu0
    %v1424 = vadd.f32 0.0, %v1423
    %v1425 = vpop.f32.mrf.mxu0
    %1426 = vmatprep.mubr.f32.mxu0 %v741
    %1427 = vmatmul.mubr.f32.gmra.mxu0 %v740
    %v1428 = vpop.f32.mrf.mxu0
    %v1429 = vadd.f32 0.0, %v1428
    %v1430 = vpop.f32.mrf.mxu0
    %1431 = vmatprep.mubr.f32.mxu0 %v749
    %1432 = vmatmul.mubr.f32.gmra.mxu0 %v748
    %v1433 = vpop.f32.mrf.mxu0
    %v1434 = vadd.f32 0.0, %v1433
    %v1435 = vpop.f32.mrf.mxu0
    %1436 = vmatprep.mubr.f32.mxu0 %v757
    %1437 = vmatmul.mubr.f32.gmra.mxu0 %v756
    %v1438 = vpop.f32.mrf.mxu0
    %v1439 = vadd.f32 0.0, %v1438
    %v1440 = vpop.f32.mrf.mxu0
    %1441 = vmatprep.mubr.f32.mxu0 %v765
    %1442 = vmatmul.mubr.f32.gmra.mxu0 %v764
    %v1443 = vpop.f32.mrf.mxu0
    %v1444 = vadd.f32 0.0, %v1443
    %v1445 = vpop.f32.mrf.mxu0
    %1446 = vmatprep.mubr.f32.mxu0 %v773
    %1447 = vmatmul.mubr.f32.gmra.mxu0 %v772
    %v1448 = vpop.f32.mrf.mxu0
    %v1449 = vadd.f32 0.0, %v1448
    %v1450 = vpop.f32.mrf.mxu0
    %1451 = vmatprep.mubr.f32.mxu0 %v781
    %1452 = vmatmul.mubr.f32.gmra.mxu0 %v780
    %v1453 = vpop.f32.mrf.mxu0
    %v1454 = vadd.f32 0.0, %v1453
    %v1455 = vpop.f32.mrf.mxu0
    %1456 = vmatprep.mubr.f32.mxu0 %v789
    %1457 = vmatmul.mubr.f32.gmra.mxu0 %v788
    %v1458 = vpop.f32.mrf.mxu0
    %v1459 = vadd.f32 0.0, %v1458
    %v1460 = vpop.f32.mrf.mxu0
    %1461 = vmatprep.mubr.f32.mxu0 %v797
    %1462 = vmatmul.mubr.f32.gmra.mxu0 %v796
    %v1463 = vpop.f32.mrf.mxu0
    %v1464 = vadd.f32 0.0, %v1463
    %v1465 = vpop.f32.mrf.mxu0
    %1466 = vmatprep.mubr.f32.mxu0 %v805
    %1467 = vmatmul.mubr.f32.gmra.mxu0 %v804
    %v1468 = vpop.f32.mrf.mxu0
    %v1469 = vadd.f32 0.0, %v1468
    %v1470 = vpop.f32.mrf.mxu0
    %1471 = vmatprep.mubr.f32.mxu0 %v813
    %1472 = vmatmul.mubr.f32.gmra.mxu0 %v812
    %v1473 = vpop.f32.mrf.mxu0
    %v1474 = vadd.f32 0.0, %v1473
    %v1475 = vpop.f32.mrf.mxu0
    %1476 = vmatprep.mubr.f32.mxu0 %v821
    %1477 = vmatmul.mubr.f32.gmra.mxu0 %v820
    %v1478 = vpop.f32.mrf.mxu0
    %v1479 = vadd.f32 0.0, %v1478
    %v1480 = vpop.f32.mrf.mxu0
    %1481 = vmatprep.mubr.f32.mxu0 %v829
    %1482 = vmatmul.mubr.f32.gmra.mxu0 %v828
    %v1483 = vpop.f32.mrf.mxu0
    %v1484 = vadd.f32 0.0, %v1483
    %v1485 = vpop.f32.mrf.mxu0
    %1486 = vmatprep.mubr.f32.mxu0 %v837
    %1487 = vmatmul.mubr.f32.gmra.mxu0 %v836
    %v1488 = vpop.f32.mrf.mxu0
    %v1489 = vadd.f32 0.0, %v1488
    %v1490 = vpop.f32.mrf.mxu0
    %1491 = vmatprep.mubr.f32.mxu0 %v845
    %1492 = vmatmul.mubr.f32.gmra.mxu0 %v844
    %v1493 = vpop.f32.mrf.mxu0
    %v1494 = vadd.f32 0.0, %v1493
    %v1495 = vpop.f32.mrf.mxu0
    %1496 = vmatprep.mubr.f32.mxu0 %v853
    %1497 = vmatmul.mubr.f32.gmra.mxu0 %v852
    %v1498 = vpop.f32.mrf.mxu0
    %v1499 = vadd.f32 0.0, %v1498
    %v1500 = vpop.f32.mrf.mxu0
    %1501 = vmatprep.mubr.f32.mxu0 %v861
    %1502 = vmatmul.mubr.f32.gmra.mxu0 %v860
    %v1503 = vpop.f32.mrf.mxu0
    %v1504 = vadd.f32 0.0, %v1503
    %v1505 = vpop.f32.mrf.mxu0
    %1506 = vmatprep.mubr.f32.mxu0 %v869
    %1507 = vmatmul.mubr.f32.gmra.mxu0 %v868
    %v1508 = vpop.f32.mrf.mxu0
    %v1509 = vadd.f32 0.0, %v1508
    %v1510 = vpop.f32.mrf.mxu0
    %1511 = vmatprep.mubr.f32.mxu0 %v877
    %1512 = vmatmul.mubr.f32.gmra.mxu0 %v876
    %v1513 = vpop.f32.mrf.mxu0
    %v1514 = vadd.f32 0.0, %v1513
    %v1515 = vpop.f32.mrf.mxu0
    %1516 = vmatprep.mubr.f32.mxu0 %v885
    %1517 = vmatmul.mubr.f32.gmra.mxu0 %v884
    %v1518 = vpop.f32.mrf.mxu0
    %v1519 = vadd.f32 0.0, %v1518
    %v1520 = vpop.f32.mrf.mxu0
    %1521 = vmatprep.mubr.f32.mxu0 %v893
    %1522 = vmatmul.mubr.f32.gmra.mxu0 %v892
    %v1523 = vpop.f32.mrf.mxu0
    %v1524 = vadd.f32 0.0, %v1523
    %v1525 = vpop.f32.mrf.mxu0
    %1526 = vmatprep.mubr.f32.mxu0 %v901
    %1527 = vmatmul.mubr.f32.gmra.mxu0 %v900
    %v1528 = vpop.f32.mrf.mxu0
    %v1529 = vadd.f32 0.0, %v1528
    %v1530 = vpop.f32.mrf.mxu0
    %1531 = vmatprep.mubr.f32.mxu0 %v909
    %1532 = vmatmul.mubr.f32.gmra.mxu0 %v908
    %v1533 = vpop.f32.mrf.mxu0
    %v1534 = vadd.f32 0.0, %v1533
    %v1535 = vpop.f32.mrf.mxu0
    %1536 = vmatprep.mubr.f32.mxu0 %v917
    %1537 = vmatmul.mubr.f32.gmra.mxu0 %v916
    %v1538 = vpop.f32.mrf.mxu0
    %v1539 = vadd.f32 0.0, %v1538
    %v1540 = vpop.f32.mrf.mxu0
    %1541 = vmatprep.mubr.f32.mxu0 %v925
    %1542 = vmatmul.mubr.f32.gmra.mxu0 %v924
    %v1543 = vpop.f32.mrf.mxu0
    %v1544 = vadd.f32 0.0, %v1543
    %v1545 = vpop.f32.mrf.mxu0
    %1546 = vmatprep.mubr.f32.mxu0 %v933
    %1547 = vmatmul.mubr.f32.gmra.mxu0 %v932
    %v1548 = vpop.f32.mrf.mxu0
    %v1549 = vadd.f32 0.0, %v1548
    %v1550 = vpop.f32.mrf.mxu0
    %1551 = vmatprep.mubr.f32.mxu0 %v941
    %1552 = vmatmul.mubr.f32.gmra.mxu0 %v940
    %v1553 = vpop.f32.mrf.mxu0
    %v1554 = vadd.f32 0.0, %v1553
    %v1555 = vpop.f32.mrf.mxu0
    %1556 = vmatprep.mubr.f32.mxu0 %v949
    %1557 = vmatmul.mubr.f32.gmra.mxu0 %v948
    %v1558 = vpop.f32.mrf.mxu0
    %v1559 = vadd.f32 0.0, %v1558
    %v1560 = vpop.f32.mrf.mxu0
    %1561 = vmatprep.mubr.f32.mxu0 %v957
    %1562 = vmatmul.mubr.f32.gmra.mxu0 %v956
    %v1563 = vpop.f32.mrf.mxu0
    %v1564 = vadd.f32 0.0, %v1563
    %v1565 = vpop.f32.mrf.mxu0
    %1566 = vmatprep.mubr.f32.mxu0 %v965
    %1567 = vmatmul.mubr.f32.gmra.mxu0 %v964
    %v1568 = vpop.f32.mrf.mxu0
    %v1569 = vadd.f32 0.0, %v1568
    %v1570 = vpop.f32.mrf.mxu0
    %1571 = vmatprep.mubr.f32.mxu0 %v973
    %1572 = vmatmul.mubr.f32.gmra.mxu0 %v972
    %v1573 = vpop.f32.mrf.mxu0
    %v1574 = vadd.f32 0.0, %v1573
    %v1575 = vpop.f32.mrf.mxu0
    %1576 = vmatprep.mubr.f32.mxu0 %v981
    %1577 = vmatmul.mubr.f32.gmra.mxu0 %v980
    %v1578 = vpop.f32.mrf.mxu0
    %v1579 = vadd.f32 0.0, %v1578
    %v1580 = vpop.f32.mrf.mxu0
    %1581 = vmatprep.mubr.f32.mxu0 %v989
    %1582 = vmatmul.mubr.f32.gmra.mxu0 %v988
    %v1583 = vpop.f32.mrf.mxu0
    %v1584 = vadd.f32 0.0, %v1583
    %v1585 = vpop.f32.mrf.mxu0
    %1586 = vmatprep.mubr.f32.mxu0 %v997
    %1587 = vmatmul.mubr.f32.gmra.mxu0 %v996
    %v1588 = vpop.f32.mrf.mxu0
    %v1589 = vadd.f32 0.0, %v1588
    %v1590 = vpop.f32.mrf.mxu0
    %1591 = vmatprep.mubr.f32.mxu0 %v1005
    %1592 = vmatmul.mubr.f32.gmra.mxu0 %v1004
    %v1593 = vpop.f32.mrf.mxu0
    %v1594 = vadd.f32 0.0, %v1593
    %v1595 = vpop.f32.mrf.mxu0
    %1596 = vmatprep.mubr.f32.mxu0 %v1013
    %1597 = vmatmul.mubr.f32.gmra.mxu0 %v1012
    %v1598 = vpop.f32.mrf.mxu0
    %v1599 = vadd.f32 0.0, %v1598
    %v1600 = vpop.f32.mrf.mxu0
    %1601 = vmatprep.mubr.f32.mxu0 %v1021
    %1602 = vmatmul.mubr.f32.gmra.mxu0 %v1020
    %v1603 = vpop.f32.mrf.mxu0
    %v1604 = vadd.f32 0.0, %v1603
    %v1605 = vpop.f32.mrf.mxu0
    %1606 = vmatprep.mubr.f32.mxu0 %v1029
    %1607 = vmatmul.mubr.f32.gmra.mxu0 %v1028
    %v1608 = vpop.f32.mrf.mxu0
    %v1609 = vadd.f32 0.0, %v1608
    %v1610 = vpop.f32.mrf.mxu0
    %1611 = vmatprep.mubr.f32.mxu0 %v1037
    %1612 = vmatmul.mubr.f32.gmra.mxu0 %v1036
    %v1613 = vpop.f32.mrf.mxu0
    %v1614 = vadd.f32 0.0, %v1613
    %v1615 = vpop.f32.mrf.mxu0
    %1616 = vmatprep.mubr.f32.mxu0 %v1045
    %1617 = vmatmul.mubr.f32.gmra.mxu0 %v1044
    %v1618 = vpop.f32.mrf.mxu0
    %v1619 = vadd.f32 0.0, %v1618
    %v1620 = vpop.f32.mrf.mxu0
    %1621 = vmatprep.mubr.f32.mxu0 %v1053
    %1622 = vmatmul.mubr.f32.gmra.mxu0 %v1052
    %v1623 = vpop.f32.mrf.mxu0
    %v1624 = vadd.f32 0.0, %v1623
    %v1625 = vpop.f32.mrf.mxu0
    %1626 = vmatprep.mubr.f32.mxu0 %v1061
    %1627 = vmatmul.mubr.f32.gmra.mxu0 %v1060
    %v1628 = vpop.f32.mrf.mxu0
    %v1629 = vadd.f32 0.0, %v1628
    %v1630 = vpop.f32.mrf.mxu0
    %1631 = vmatprep.mubr.f32.mxu0 %v1069
    %1632 = vmatmul.mubr.f32.gmra.mxu0 %v1068
    %v1633 = vpop.f32.mrf.mxu0
    %v1634 = vadd.f32 0.0, %v1633
    %v1635 = vpop.f32.mrf.mxu0
    %1636 = vmatprep.mubr.f32.mxu0 %v1077
    %1637 = vmatmul.mubr.f32.gmra.mxu0 %v1076
    %v1638 = vpop.f32.mrf.mxu0
    %v1639 = vadd.f32 0.0, %v1638
    %v1640 = vpop.f32.mrf.mxu0
    %1641 = vmatprep.mubr.f32.mxu0 %v1085
    %1642 = vmatmul.mubr.f32.gmra.mxu0 %v1084
    %v1643 = vpop.f32.mrf.mxu0
    %v1644 = vadd.f32 0.0, %v1643
    %v1645 = vpop.f32.mrf.mxu0
    %1646 = vmatprep.mubr.f32.mxu0 %v1093
    %1647 = vmatmul.mubr.f32.gmra.mxu0 %v1092
    %v1648 = vpop.f32.mrf.mxu0
    %v1649 = vadd.f32 0.0, %v1648
    %v1650 = vpop.f32.mrf.mxu0
    %1651 = vmatprep.mubr.f32.mxu0 %v1101
    %1652 = vmatmul.mubr.f32.gmra.mxu0 %v1100
    %v1653 = vpop.f32.mrf.mxu0
    %v1654 = vadd.f32 0.0, %v1653
    %v1655 = vpop.f32.mrf.mxu0
    %1656 = vmatprep.mubr.f32.mxu0 %v1109
    %1657 = vmatmul.mubr.f32.gmra.mxu0 %v1108
    %v1658 = vpop.f32.mrf.mxu0
    %v1659 = vadd.f32 0.0, %v1658
    %v1660 = vpop.f32.mrf.mxu0
    %1661 = vmatprep.mubr.f32.mxu0 %v1117
    %1662 = vmatmul.mubr.f32.gmra.mxu0 %v1116
    %v1663 = vpop.f32.mrf.mxu0
    %v1664 = vadd.f32 0.0, %v1663
    %v1665 = vpop.f32.mrf.mxu0
    %1666 = vmatprep.mubr.f32.mxu0 %v1125
    %1667 = vmatmul.mubr.f32.gmra.mxu0 %v1124
    %v1668 = vpop.f32.mrf.mxu0
    %v1669 = vadd.f32 0.0, %v1668
    %v1670 = vpop.f32.mrf.mxu0
    %1671 = vmatprep.mubr.f32.mxu0 %v1133
    %1672 = vmatmul.mubr.f32.gmra.mxu0 %v1132
    %v1673 = vpop.f32.mrf.mxu0
    %v1674 = vadd.f32 0.0, %v1673
    %v1675 = vpop.f32.mrf.mxu0
    %1676 = vmatprep.mubr.f32.mxu0 %v1141
    %1677 = vmatmul.mubr.f32.gmra.mxu0 %v1140
    %v1678 = vpop.f32.mrf.mxu0
    %v1679 = vadd.f32 0.0, %v1678
    %v1680 = vpop.f32.mrf.mxu0
    %1681 = vmatprep.mubr.f32.mxu0 %v1149
    %1682 = vmatmul.mubr.f32.gmra.mxu0 %v1148
    %v1683 = vpop.f32.mrf.mxu0
    %v1684 = vadd.f32 0.0, %v1683
    %v1685 = vpop.f32.mrf.mxu0
    %1686 = vmatprep.mubr.f32.mxu0 %v1157
    %1687 = vmatmul.mubr.f32.gmra.mxu0 %v1156
    %v1688 = vpop.f32.mrf.mxu0
    %v1689 = vadd.f32 0.0, %v1688
    %v1690 = vpop.f32.mrf.mxu0
    %1691 = vmatprep.mubr.f32.mxu0 %v1165
    %1692 = vmatmul.mubr.f32.gmra.mxu0 %v1164
    %v1693 = vpop.f32.mrf.mxu0
    %v1694 = vadd.f32 0.0, %v1693
    %v1695 = vpop.f32.mrf.mxu0
    %1696 = vmatprep.mubr.f32.mxu0 %v1173
    %1697 = vmatmul.mubr.f32.gmra.mxu0 %v1172
    %v1698 = vpop.f32.mrf.mxu0
    %v1699 = vadd.f32 0.0, %v1698
    %v1700 = vpop.f32.mrf.mxu0
    %1701 = vmatprep.mubr.f32.mxu0 %v1181
    %1702 = vmatmul.mubr.f32.gmra.mxu0 %v1180
    %v1703 = vpop.f32.mrf.mxu0
    %v1704 = vadd.f32 0.0, %v1703
    %v1705 = vpop.f32.mrf.mxu0
    %1706 = vmatprep.mubr.f32.mxu0 %v1189
    %1707 = vmatmul.mubr.f32.gmra.mxu0 %v1188
    %v1708 = vpop.f32.mrf.mxu0
    %v1709 = vadd.f32 0.0, %v1708
    %v1710 = vpop.f32.mrf.mxu0
    %1711 = vmatprep.mubr.f32.mxu0 %v1197
    %1712 = vmatmul.mubr.f32.gmra.mxu0 %v1196
    %v1713 = vpop.f32.mrf.mxu0
    %v1714 = vadd.f32 0.0, %v1713
    %v1715 = vpop.f32.mrf.mxu0
    %1716 = vdwg.mxu0
    %1717 = vmatprep.subr.mxu0 0.0
    %1718 = vmatpush1.msra.mxu0 %v1251
    %1719 = vmatprep.subr.mxu0 0.0
    %1720 = vmatpush1.msra.mxu0 %v1250
    %1721 = vmatprep.subr.mxu0 0.0
    %1722 = vmatpush1.msra.mxu0 %v1249
    %1723 = vmatprep.subr.mxu0 0.0
    %1724 = vmatpush1.msra.mxu0 %v1248
    %1725 = vmatprep.subr.mxu0 0.0
    %1726 = vmatpush1.msra.mxu0 %v1247
    %1727 = vmatprep.subr.mxu0 0.0
    %1728 = vmatpush1.msra.mxu0 %v1246
    %1729 = vmatprep.subr.mxu0 0.0
    %1730 = vmatpush1.msra.mxu0 %v1245
    %1731 = vmatprep.subr.mxu0 0.0
    %1732 = vmatpush1.msra.mxu0 %v1244
    %1733 = vmatprep.subr.mxu0 0.0
    %1734 = vmatpush1.msra.mxu0 %v1243
    %1735 = vmatprep.subr.mxu0 0.0
    %1736 = vmatpush1.msra.mxu0 %v1242
    %1737 = vmatprep.subr.mxu0 0.0
    %1738 = vmatpush1.msra.mxu0 %v1241
    %1739 = vmatprep.subr.mxu0 0.0
    %1740 = vmatpush1.msra.mxu0 %v1240
    %1741 = vmatprep.subr.mxu0 0.0
    %1742 = vmatpush1.msra.mxu0 %v1239
    %1743 = vmatprep.subr.mxu0 0.0
    %1744 = vmatpush1.msra.mxu0 %v1238
    %1745 = vmatprep.subr.mxu0 0.0
    %1746 = vmatpush1.msra.mxu0 %v1237
    %1747 = vmatprep.subr.mxu0 0.0
    %1748 = vmatpush1.msra.mxu0 %v1236
    %1749 = vmatprep.subr.mxu0 0.0
    %1750 = vmatpush2.msra.mxu0 %v1267
    %1751 = vmatprep.subr.mxu0 0.0
    %1752 = vmatpush2.msra.mxu0 %v1266
    %1753 = vmatprep.subr.mxu0 0.0
    %1754 = vmatpush2.msra.mxu0 %v1265
    %1755 = vmatprep.subr.mxu0 0.0
    %1756 = vmatpush2.msra.mxu0 %v1264
    %1757 = vmatprep.subr.mxu0 0.0
    %1758 = vmatpush2.msra.mxu0 %v1263
    %1759 = vmatprep.subr.mxu0 0.0
    %1760 = vmatpush2.msra.mxu0 %v1262
    %1761 = vmatprep.subr.mxu0 0.0
    %1762 = vmatpush2.msra.mxu0 %v1261
    %1763 = vmatprep.subr.mxu0 0.0
    %1764 = vmatpush2.msra.mxu0 %v1260
    %1765 = vmatprep.subr.mxu0 0.0
    %1766 = vmatpush2.msra.mxu0 %v1259
    %1767 = vmatprep.subr.mxu0 0.0
    %1768 = vmatpush2.msra.mxu0 %v1258
    %1769 = vmatprep.subr.mxu0 0.0
    %1770 = vmatpush2.msra.mxu0 %v1257
    %1771 = vmatprep.subr.mxu0 0.0
    %1772 = vmatpush2.msra.mxu0 %v1256
    %1773 = vmatprep.subr.mxu0 0.0
    %1774 = vmatpush2.msra.mxu0 %v1255
    %1775 = vmatprep.subr.mxu0 0.0
    %1776 = vmatpush2.msra.mxu0 %v1254
    %1777 = vmatprep.subr.mxu0 0.0
    %1778 = vmatpush2.msra.mxu0 %v1253
    %1779 = vmatprep.subr.mxu0 0.0
    %1780 = vmatpush2.msra.mxu0 %v1252
    %1781 = vmatprep.mubr.f32.mxu0 %v695
    %1782 = vmatmul.mubr.f32.gmra.mxu0 %v694
    %v1783 = vpop.f32.mrf.mxu0
    %v1784 = vadd.f32 %v1399, %v1783
    %v1785 = vpop.f32.mrf.mxu0
    %1786 = vmatprep.mubr.f32.mxu0 %v703
    %1787 = vmatmul.mubr.f32.gmra.mxu0 %v702
    %v1788 = vpop.f32.mrf.mxu0
    %v1789 = vadd.f32 %v1404, %v1788
    %v1790 = vpop.f32.mrf.mxu0
    %1791 = vmatprep.mubr.f32.mxu0 %v711
    %1792 = vmatmul.mubr.f32.gmra.mxu0 %v710
    %v1793 = vpop.f32.mrf.mxu0
    %v1794 = vadd.f32 %v1409, %v1793
    %v1795 = vpop.f32.mrf.mxu0
    %1796 = vmatprep.mubr.f32.mxu0 %v719
    %1797 = vmatmul.mubr.f32.gmra.mxu0 %v718
    %v1798 = vpop.f32.mrf.mxu0
    %v1799 = vadd.f32 %v1414, %v1798
    %v1800 = vpop.f32.mrf.mxu0
    %1801 = vmatprep.mubr.f32.mxu0 %v727
    %1802 = vmatmul.mubr.f32.gmra.mxu0 %v726
    %v1803 = vpop.f32.mrf.mxu0
    %v1804 = vadd.f32 %v1419, %v1803
    %v1805 = vpop.f32.mrf.mxu0
    %1806 = vmatprep.mubr.f32.mxu0 %v735
    %1807 = vmatmul.mubr.f32.gmra.mxu0 %v734
    %v1808 = vpop.f32.mrf.mxu0
    %v1809 = vadd.f32 %v1424, %v1808
    %v1810 = vpop.f32.mrf.mxu0
    %1811 = vmatprep.mubr.f32.mxu0 %v743
    %1812 = vmatmul.mubr.f32.gmra.mxu0 %v742
    %v1813 = vpop.f32.mrf.mxu0
    %v1814 = vadd.f32 %v1429, %v1813
    %v1815 = vpop.f32.mrf.mxu0
    %1816 = vmatprep.mubr.f32.mxu0 %v751
    %1817 = vmatmul.mubr.f32.gmra.mxu0 %v750
    %v1818 = vpop.f32.mrf.mxu0
    %v1819 = vadd.f32 %v1434, %v1818
    %v1820 = vpop.f32.mrf.mxu0
    %1821 = vmatprep.mubr.f32.mxu0 %v759
    %1822 = vmatmul.mubr.f32.gmra.mxu0 %v758
    %v1823 = vpop.f32.mrf.mxu0
    %v1824 = vadd.f32 %v1439, %v1823
    %v1825 = vpop.f32.mrf.mxu0
    %1826 = vmatprep.mubr.f32.mxu0 %v767
    %1827 = vmatmul.mubr.f32.gmra.mxu0 %v766
    %v1828 = vpop.f32.mrf.mxu0
    %v1829 = vadd.f32 %v1444, %v1828
    %v1830 = vpop.f32.mrf.mxu0
    %1831 = vmatprep.mubr.f32.mxu0 %v775
    %1832 = vmatmul.mubr.f32.gmra.mxu0 %v774
    %v1833 = vpop.f32.mrf.mxu0
    %v1834 = vadd.f32 %v1449, %v1833
    %v1835 = vpop.f32.mrf.mxu0
    %1836 = vmatprep.mubr.f32.mxu0 %v783
    %1837 = vmatmul.mubr.f32.gmra.mxu0 %v782
    %v1838 = vpop.f32.mrf.mxu0
    %v1839 = vadd.f32 %v1454, %v1838
    %v1840 = vpop.f32.mrf.mxu0
    %1841 = vmatprep.mubr.f32.mxu0 %v791
    %1842 = vmatmul.mubr.f32.gmra.mxu0 %v790
    %v1843 = vpop.f32.mrf.mxu0
    %v1844 = vadd.f32 %v1459, %v1843
    %v1845 = vpop.f32.mrf.mxu0
    %1846 = vmatprep.mubr.f32.mxu0 %v799
    %1847 = vmatmul.mubr.f32.gmra.mxu0 %v798
    %v1848 = vpop.f32.mrf.mxu0
    %v1849 = vadd.f32 %v1464, %v1848
    %v1850 = vpop.f32.mrf.mxu0
    %1851 = vmatprep.mubr.f32.mxu0 %v807
    %1852 = vmatmul.mubr.f32.gmra.mxu0 %v806
    %v1853 = vpop.f32.mrf.mxu0
    %v1854 = vadd.f32 %v1469, %v1853
    %v1855 = vpop.f32.mrf.mxu0
    %1856 = vmatprep.mubr.f32.mxu0 %v815
    %1857 = vmatmul.mubr.f32.gmra.mxu0 %v814
    %v1858 = vpop.f32.mrf.mxu0
    %v1859 = vadd.f32 %v1474, %v1858
    %v1860 = vpop.f32.mrf.mxu0
    %1861 = vmatprep.mubr.f32.mxu0 %v823
    %1862 = vmatmul.mubr.f32.gmra.mxu0 %v822
    %v1863 = vpop.f32.mrf.mxu0
    %v1864 = vadd.f32 %v1479, %v1863
    %v1865 = vpop.f32.mrf.mxu0
    %1866 = vmatprep.mubr.f32.mxu0 %v831
    %1867 = vmatmul.mubr.f32.gmra.mxu0 %v830
    %v1868 = vpop.f32.mrf.mxu0
    %v1869 = vadd.f32 %v1484, %v1868
    %v1870 = vpop.f32.mrf.mxu0
    %1871 = vmatprep.mubr.f32.mxu0 %v839
    %1872 = vmatmul.mubr.f32.gmra.mxu0 %v838
    %v1873 = vpop.f32.mrf.mxu0
    %v1874 = vadd.f32 %v1489, %v1873
    %v1875 = vpop.f32.mrf.mxu0
    %1876 = vmatprep.mubr.f32.mxu0 %v847
    %1877 = vmatmul.mubr.f32.gmra.mxu0 %v846
    %v1878 = vpop.f32.mrf.mxu0
    %v1879 = vadd.f32 %v1494, %v1878
    %v1880 = vpop.f32.mrf.mxu0
    %1881 = vmatprep.mubr.f32.mxu0 %v855
    %1882 = vmatmul.mubr.f32.gmra.mxu0 %v854
    %v1883 = vpop.f32.mrf.mxu0
    %v1884 = vadd.f32 %v1499, %v1883
    %v1885 = vpop.f32.mrf.mxu0
    %1886 = vmatprep.mubr.f32.mxu0 %v863
    %1887 = vmatmul.mubr.f32.gmra.mxu0 %v862
    %v1888 = vpop.f32.mrf.mxu0
    %v1889 = vadd.f32 %v1504, %v1888
    %v1890 = vpop.f32.mrf.mxu0
    %1891 = vmatprep.mubr.f32.mxu0 %v871
    %1892 = vmatmul.mubr.f32.gmra.mxu0 %v870
    %v1893 = vpop.f32.mrf.mxu0
    %v1894 = vadd.f32 %v1509, %v1893
    %v1895 = vpop.f32.mrf.mxu0
    %1896 = vmatprep.mubr.f32.mxu0 %v879
    %1897 = vmatmul.mubr.f32.gmra.mxu0 %v878
    %v1898 = vpop.f32.mrf.mxu0
    %v1899 = vadd.f32 %v1514, %v1898
    %v1900 = vpop.f32.mrf.mxu0
    %1901 = vmatprep.mubr.f32.mxu0 %v887
    %1902 = vmatmul.mubr.f32.gmra.mxu0 %v886
    %v1903 = vpop.f32.mrf.mxu0
    %v1904 = vadd.f32 %v1519, %v1903
    %v1905 = vpop.f32.mrf.mxu0
    %1906 = vmatprep.mubr.f32.mxu0 %v895
    %1907 = vmatmul.mubr.f32.gmra.mxu0 %v894
    %v1908 = vpop.f32.mrf.mxu0
    %v1909 = vadd.f32 %v1524, %v1908
    %v1910 = vpop.f32.mrf.mxu0
    %1911 = vmatprep.mubr.f32.mxu0 %v903
    %1912 = vmatmul.mubr.f32.gmra.mxu0 %v902
    %v1913 = vpop.f32.mrf.mxu0
    %v1914 = vadd.f32 %v1529, %v1913
    %v1915 = vpop.f32.mrf.mxu0
    %1916 = vmatprep.mubr.f32.mxu0 %v911
    %1917 = vmatmul.mubr.f32.gmra.mxu0 %v910
    %v1918 = vpop.f32.mrf.mxu0
    %v1919 = vadd.f32 %v1534, %v1918
    %v1920 = vpop.f32.mrf.mxu0
    %1921 = vmatprep.mubr.f32.mxu0 %v919
    %1922 = vmatmul.mubr.f32.gmra.mxu0 %v918
    %v1923 = vpop.f32.mrf.mxu0
    %v1924 = vadd.f32 %v1539, %v1923
    %v1925 = vpop.f32.mrf.mxu0
    %1926 = vmatprep.mubr.f32.mxu0 %v927
    %1927 = vmatmul.mubr.f32.gmra.mxu0 %v926
    %v1928 = vpop.f32.mrf.mxu0
    %v1929 = vadd.f32 %v1544, %v1928
    %v1930 = vpop.f32.mrf.mxu0
    %1931 = vmatprep.mubr.f32.mxu0 %v935
    %1932 = vmatmul.mubr.f32.gmra.mxu0 %v934
    %v1933 = vpop.f32.mrf.mxu0
    %v1934 = vadd.f32 %v1549, %v1933
    %v1935 = vpop.f32.mrf.mxu0
    %1936 = vmatprep.mubr.f32.mxu0 %v943
    %1937 = vmatmul.mubr.f32.gmra.mxu0 %v942
    %v1938 = vpop.f32.mrf.mxu0
    %v1939 = vadd.f32 %v1554, %v1938
    %v1940 = vpop.f32.mrf.mxu0
    %1941 = vmatprep.mubr.f32.mxu0 %v951
    %1942 = vmatmul.mubr.f32.gmra.mxu0 %v950
    %v1943 = vpop.f32.mrf.mxu0
    %v1944 = vadd.f32 %v1559, %v1943
    %v1945 = vpop.f32.mrf.mxu0
    %1946 = vmatprep.mubr.f32.mxu0 %v959
    %1947 = vmatmul.mubr.f32.gmra.mxu0 %v958
    %v1948 = vpop.f32.mrf.mxu0
    %v1949 = vadd.f32 %v1564, %v1948
    %v1950 = vpop.f32.mrf.mxu0
    %1951 = vmatprep.mubr.f32.mxu0 %v967
    %1952 = vmatmul.mubr.f32.gmra.mxu0 %v966
    %v1953 = vpop.f32.mrf.mxu0
    %v1954 = vadd.f32 %v1569, %v1953
    %v1955 = vpop.f32.mrf.mxu0
    %1956 = vmatprep.mubr.f32.mxu0 %v975
    %1957 = vmatmul.mubr.f32.gmra.mxu0 %v974
    %v1958 = vpop.f32.mrf.mxu0
    %v1959 = vadd.f32 %v1574, %v1958
    %v1960 = vpop.f32.mrf.mxu0
    %1961 = vmatprep.mubr.f32.mxu0 %v983
    %1962 = vmatmul.mubr.f32.gmra.mxu0 %v982
    %v1963 = vpop.f32.mrf.mxu0
    %v1964 = vadd.f32 %v1579, %v1963
    %v1965 = vpop.f32.mrf.mxu0
    %1966 = vmatprep.mubr.f32.mxu0 %v991
    %1967 = vmatmul.mubr.f32.gmra.mxu0 %v990
    %v1968 = vpop.f32.mrf.mxu0
    %v1969 = vadd.f32 %v1584, %v1968
    %v1970 = vpop.f32.mrf.mxu0
    %1971 = vmatprep.mubr.f32.mxu0 %v999
    %1972 = vmatmul.mubr.f32.gmra.mxu0 %v998
    %v1973 = vpop.f32.mrf.mxu0
    %v1974 = vadd.f32 %v1589, %v1973
    %v1975 = vpop.f32.mrf.mxu0
    %1976 = vmatprep.mubr.f32.mxu0 %v1007
    %1977 = vmatmul.mubr.f32.gmra.mxu0 %v1006
    %v1978 = vpop.f32.mrf.mxu0
    %v1979 = vadd.f32 %v1594, %v1978
    %v1980 = vpop.f32.mrf.mxu0
    %1981 = vmatprep.mubr.f32.mxu0 %v1015
    %1982 = vmatmul.mubr.f32.gmra.mxu0 %v1014
    %v1983 = vpop.f32.mrf.mxu0
    %v1984 = vadd.f32 %v1599, %v1983
    %v1985 = vpop.f32.mrf.mxu0
    %1986 = vmatprep.mubr.f32.mxu0 %v1023
    %1987 = vmatmul.mubr.f32.gmra.mxu0 %v1022
    %v1988 = vpop.f32.mrf.mxu0
    %v1989 = vadd.f32 %v1604, %v1988
    %v1990 = vpop.f32.mrf.mxu0
    %1991 = vmatprep.mubr.f32.mxu0 %v1031
    %1992 = vmatmul.mubr.f32.gmra.mxu0 %v1030
    %v1993 = vpop.f32.mrf.mxu0
    %v1994 = vadd.f32 %v1609, %v1993
    %v1995 = vpop.f32.mrf.mxu0
    %1996 = vmatprep.mubr.f32.mxu0 %v1039
    %1997 = vmatmul.mubr.f32.gmra.mxu0 %v1038
    %v1998 = vpop.f32.mrf.mxu0
    %v1999 = vadd.f32 %v1614, %v1998
    %v2000 = vpop.f32.mrf.mxu0
    %2001 = vmatprep.mubr.f32.mxu0 %v1047
    %2002 = vmatmul.mubr.f32.gmra.mxu0 %v1046
    %v2003 = vpop.f32.mrf.mxu0
    %v2004 = vadd.f32 %v1619, %v2003
    %v2005 = vpop.f32.mrf.mxu0
    %2006 = vmatprep.mubr.f32.mxu0 %v1055
    %2007 = vmatmul.mubr.f32.gmra.mxu0 %v1054
    %v2008 = vpop.f32.mrf.mxu0
    %v2009 = vadd.f32 %v1624, %v2008
    %v2010 = vpop.f32.mrf.mxu0
    %2011 = vmatprep.mubr.f32.mxu0 %v1063
    %2012 = vmatmul.mubr.f32.gmra.mxu0 %v1062
    %v2013 = vpop.f32.mrf.mxu0
    %v2014 = vadd.f32 %v1629, %v2013
    %v2015 = vpop.f32.mrf.mxu0
    %2016 = vmatprep.mubr.f32.mxu0 %v1071
    %2017 = vmatmul.mubr.f32.gmra.mxu0 %v1070
    %v2018 = vpop.f32.mrf.mxu0
    %v2019 = vadd.f32 %v1634, %v2018
    %v2020 = vpop.f32.mrf.mxu0
    %2021 = vmatprep.mubr.f32.mxu0 %v1079
    %2022 = vmatmul.mubr.f32.gmra.mxu0 %v1078
    %v2023 = vpop.f32.mrf.mxu0
    %v2024 = vadd.f32 %v1639, %v2023
    %v2025 = vpop.f32.mrf.mxu0
    %2026 = vmatprep.mubr.f32.mxu0 %v1087
    %2027 = vmatmul.mubr.f32.gmra.mxu0 %v1086
    %v2028 = vpop.f32.mrf.mxu0
    %v2029 = vadd.f32 %v1644, %v2028
    %v2030 = vpop.f32.mrf.mxu0
    %2031 = vmatprep.mubr.f32.mxu0 %v1095
    %2032 = vmatmul.mubr.f32.gmra.mxu0 %v1094
    %v2033 = vpop.f32.mrf.mxu0
    %v2034 = vadd.f32 %v1649, %v2033
    %v2035 = vpop.f32.mrf.mxu0
    %2036 = vmatprep.mubr.f32.mxu0 %v1103
    %2037 = vmatmul.mubr.f32.gmra.mxu0 %v1102
    %v2038 = vpop.f32.mrf.mxu0
    %v2039 = vadd.f32 %v1654, %v2038
    %v2040 = vpop.f32.mrf.mxu0
    %2041 = vmatprep.mubr.f32.mxu0 %v1111
    %2042 = vmatmul.mubr.f32.gmra.mxu0 %v1110
    %v2043 = vpop.f32.mrf.mxu0
    %v2044 = vadd.f32 %v1659, %v2043
    %v2045 = vpop.f32.mrf.mxu0
    %2046 = vmatprep.mubr.f32.mxu0 %v1119
    %2047 = vmatmul.mubr.f32.gmra.mxu0 %v1118
    %v2048 = vpop.f32.mrf.mxu0
    %v2049 = vadd.f32 %v1664, %v2048
    %v2050 = vpop.f32.mrf.mxu0
    %2051 = vmatprep.mubr.f32.mxu0 %v1127
    %2052 = vmatmul.mubr.f32.gmra.mxu0 %v1126
    %v2053 = vpop.f32.mrf.mxu0
    %v2054 = vadd.f32 %v1669, %v2053
    %v2055 = vpop.f32.mrf.mxu0
    %2056 = vmatprep.mubr.f32.mxu0 %v1135
    %2057 = vmatmul.mubr.f32.gmra.mxu0 %v1134
    %v2058 = vpop.f32.mrf.mxu0
    %v2059 = vadd.f32 %v1674, %v2058
    %v2060 = vpop.f32.mrf.mxu0
    %2061 = vmatprep.mubr.f32.mxu0 %v1143
    %2062 = vmatmul.mubr.f32.gmra.mxu0 %v1142
    %v2063 = vpop.f32.mrf.mxu0
    %v2064 = vadd.f32 %v1679, %v2063
    %v2065 = vpop.f32.mrf.mxu0
    %2066 = vmatprep.mubr.f32.mxu0 %v1151
    %2067 = vmatmul.mubr.f32.gmra.mxu0 %v1150
    %v2068 = vpop.f32.mrf.mxu0
    %v2069 = vadd.f32 %v1684, %v2068
    %v2070 = vpop.f32.mrf.mxu0
    %2071 = vmatprep.mubr.f32.mxu0 %v1159
    %2072 = vmatmul.mubr.f32.gmra.mxu0 %v1158
    %v2073 = vpop.f32.mrf.mxu0
    %v2074 = vadd.f32 %v1689, %v2073
    %v2075 = vpop.f32.mrf.mxu0
    %2076 = vmatprep.mubr.f32.mxu0 %v1167
    %2077 = vmatmul.mubr.f32.gmra.mxu0 %v1166
    %v2078 = vpop.f32.mrf.mxu0
    %v2079 = vadd.f32 %v1694, %v2078
    %v2080 = vpop.f32.mrf.mxu0
    %2081 = vmatprep.mubr.f32.mxu0 %v1175
    %2082 = vmatmul.mubr.f32.gmra.mxu0 %v1174
    %v2083 = vpop.f32.mrf.mxu0
    %v2084 = vadd.f32 %v1699, %v2083
    %v2085 = vpop.f32.mrf.mxu0
    %2086 = vmatprep.mubr.f32.mxu0 %v1183
    %2087 = vmatmul.mubr.f32.gmra.mxu0 %v1182
    %v2088 = vpop.f32.mrf.mxu0
    %v2089 = vadd.f32 %v1704, %v2088
    %v2090 = vpop.f32.mrf.mxu0
    %2091 = vmatprep.mubr.f32.mxu0 %v1191
    %2092 = vmatmul.mubr.f32.gmra.mxu0 %v1190
    %v2093 = vpop.f32.mrf.mxu0
    %v2094 = vadd.f32 %v1709, %v2093
    %v2095 = vpop.f32.mrf.mxu0
    %2096 = vmatprep.mubr.f32.mxu0 %v1199
    %2097 = vmatmul.mubr.f32.gmra.mxu0 %v1198
    %v2098 = vpop.f32.mrf.mxu0
    %v2099 = vadd.f32 %v1714, %v2098
    %v2100 = vpop.f32.mrf.mxu0
    %2101 = vdwg.mxu0
    %2102 = vmatprep.subr.mxu0 0.0
    %2103 = vmatpush1.msra.mxu0 %v1283
    %2104 = vmatprep.subr.mxu0 0.0
    %2105 = vmatpush1.msra.mxu0 %v1282
    %2106 = vmatprep.subr.mxu0 0.0
    %2107 = vmatpush1.msra.mxu0 %v1281
    %2108 = vmatprep.subr.mxu0 0.0
    %2109 = vmatpush1.msra.mxu0 %v1280
    %2110 = vmatprep.subr.mxu0 0.0
    %2111 = vmatpush1.msra.mxu0 %v1279
    %2112 = vmatprep.subr.mxu0 0.0
    %2113 = vmatpush1.msra.mxu0 %v1278
    %2114 = vmatprep.subr.mxu0 0.0
    %2115 = vmatpush1.msra.mxu0 %v1277
    %2116 = vmatprep.subr.mxu0 0.0
    %2117 = vmatpush1.msra.mxu0 %v1276
    %2118 = vmatprep.subr.mxu0 0.0
    %2119 = vmatpush1.msra.mxu0 %v1275
    %2120 = vmatprep.subr.mxu0 0.0
    %2121 = vmatpush1.msra.mxu0 %v1274
    %2122 = vmatprep.subr.mxu0 0.0
    %2123 = vmatpush1.msra.mxu0 %v1273
    %2124 = vmatprep.subr.mxu0 0.0
    %2125 = vmatpush1.msra.mxu0 %v1272
    %2126 = vmatprep.subr.mxu0 0.0
    %2127 = vmatpush1.msra.mxu0 %v1271
    %2128 = vmatprep.subr.mxu0 0.0
    %2129 = vmatpush1.msra.mxu0 %v1270
    %2130 = vmatprep.subr.mxu0 0.0
    %2131 = vmatpush1.msra.mxu0 %v1269
    %2132 = vmatprep.subr.mxu0 0.0
    %2133 = vmatpush1.msra.mxu0 %v1268
    %2134 = vmatprep.subr.mxu0 0.0
    %2135 = vmatpush2.msra.mxu0 %v1299
    %2136 = vmatprep.subr.mxu0 0.0
    %2137 = vmatpush2.msra.mxu0 %v1298
    %2138 = vmatprep.subr.mxu0 0.0
    %2139 = vmatpush2.msra.mxu0 %v1297
    %2140 = vmatprep.subr.mxu0 0.0
    %2141 = vmatpush2.msra.mxu0 %v1296
    %2142 = vmatprep.subr.mxu0 0.0
    %2143 = vmatpush2.msra.mxu0 %v1295
    %2144 = vmatprep.subr.mxu0 0.0
    %2145 = vmatpush2.msra.mxu0 %v1294
    %2146 = vmatprep.subr.mxu0 0.0
    %2147 = vmatpush2.msra.mxu0 %v1293
    %2148 = vmatprep.subr.mxu0 0.0
    %2149 = vmatpush2.msra.mxu0 %v1292
    %2150 = vmatprep.subr.mxu0 0.0
    %2151 = vmatpush2.msra.mxu0 %v1291
    %2152 = vmatprep.subr.mxu0 0.0
    %2153 = vmatpush2.msra.mxu0 %v1290
    %2154 = vmatprep.subr.mxu0 0.0
    %2155 = vmatpush2.msra.mxu0 %v1289
    %2156 = vmatprep.subr.mxu0 0.0
    %2157 = vmatpush2.msra.mxu0 %v1288
    %2158 = vmatprep.subr.mxu0 0.0
    %2159 = vmatpush2.msra.mxu0 %v1287
    %2160 = vmatprep.subr.mxu0 0.0
    %2161 = vmatpush2.msra.mxu0 %v1286
    %2162 = vmatprep.subr.mxu0 0.0
    %2163 = vmatpush2.msra.mxu0 %v1285
    %2164 = vmatprep.subr.mxu0 0.0
    %2165 = vmatpush2.msra.mxu0 %v1284
    %2166 = vmatprep.mubr.f32.mxu0 %v697
    %2167 = vmatmul.mubr.f32.gmra.mxu0 %v696
    %v2168 = vpop.f32.mrf.mxu0
    %v2169 = vadd.f32 %v1784, %v2168
    %v2170 = vpop.f32.mrf.mxu0
    %2171 = vmatprep.mubr.f32.mxu0 %v705
    %2172 = vmatmul.mubr.f32.gmra.mxu0 %v704
    %v2173 = vpop.f32.mrf.mxu0
    %v2174 = vadd.f32 %v1789, %v2173
    %v2175 = vpop.f32.mrf.mxu0
    %2176 = vmatprep.mubr.f32.mxu0 %v713
    %2177 = vmatmul.mubr.f32.gmra.mxu0 %v712
    %v2178 = vpop.f32.mrf.mxu0
    %v2179 = vadd.f32 %v1794, %v2178
    %v2180 = vpop.f32.mrf.mxu0
    %2181 = vmatprep.mubr.f32.mxu0 %v721
    %2182 = vmatmul.mubr.f32.gmra.mxu0 %v720
    %v2183 = vpop.f32.mrf.mxu0
    %v2184 = vadd.f32 %v1799, %v2183
    %v2185 = vpop.f32.mrf.mxu0
    %2186 = vmatprep.mubr.f32.mxu0 %v729
    %2187 = vmatmul.mubr.f32.gmra.mxu0 %v728
    %v2188 = vpop.f32.mrf.mxu0
    %v2189 = vadd.f32 %v1804, %v2188
    %v2190 = vpop.f32.mrf.mxu0
    %2191 = vmatprep.mubr.f32.mxu0 %v737
    %2192 = vmatmul.mubr.f32.gmra.mxu0 %v736
    %v2193 = vpop.f32.mrf.mxu0
    %v2194 = vadd.f32 %v1809, %v2193
    %v2195 = vpop.f32.mrf.mxu0
    %2196 = vmatprep.mubr.f32.mxu0 %v745
    %2197 = vmatmul.mubr.f32.gmra.mxu0 %v744
    %v2198 = vpop.f32.mrf.mxu0
    %v2199 = vadd.f32 %v1814, %v2198
    %v2200 = vpop.f32.mrf.mxu0
    %2201 = vmatprep.mubr.f32.mxu0 %v753
    %2202 = vmatmul.mubr.f32.gmra.mxu0 %v752
    %v2203 = vpop.f32.mrf.mxu0
    %v2204 = vadd.f32 %v1819, %v2203
    %v2205 = vpop.f32.mrf.mxu0
    %2206 = vmatprep.mubr.f32.mxu0 %v761
    %2207 = vmatmul.mubr.f32.gmra.mxu0 %v760
    %v2208 = vpop.f32.mrf.mxu0
    %v2209 = vadd.f32 %v1824, %v2208
    %v2210 = vpop.f32.mrf.mxu0
    %2211 = vmatprep.mubr.f32.mxu0 %v769
    %2212 = vmatmul.mubr.f32.gmra.mxu0 %v768
    %v2213 = vpop.f32.mrf.mxu0
    %v2214 = vadd.f32 %v1829, %v2213
    %v2215 = vpop.f32.mrf.mxu0
    %2216 = vmatprep.mubr.f32.mxu0 %v777
    %2217 = vmatmul.mubr.f32.gmra.mxu0 %v776
    %v2218 = vpop.f32.mrf.mxu0
    %v2219 = vadd.f32 %v1834, %v2218
    %v2220 = vpop.f32.mrf.mxu0
    %2221 = vmatprep.mubr.f32.mxu0 %v785
    %2222 = vmatmul.mubr.f32.gmra.mxu0 %v784
    %v2223 = vpop.f32.mrf.mxu0
    %v2224 = vadd.f32 %v1839, %v2223
    %v2225 = vpop.f32.mrf.mxu0
    %2226 = vmatprep.mubr.f32.mxu0 %v793
    %2227 = vmatmul.mubr.f32.gmra.mxu0 %v792
    %v2228 = vpop.f32.mrf.mxu0
    %v2229 = vadd.f32 %v1844, %v2228
    %v2230 = vpop.f32.mrf.mxu0
    %2231 = vmatprep.mubr.f32.mxu0 %v801
    %2232 = vmatmul.mubr.f32.gmra.mxu0 %v800
    %v2233 = vpop.f32.mrf.mxu0
    %v2234 = vadd.f32 %v1849, %v2233
    %v2235 = vpop.f32.mrf.mxu0
    %2236 = vmatprep.mubr.f32.mxu0 %v809
    %2237 = vmatmul.mubr.f32.gmra.mxu0 %v808
    %v2238 = vpop.f32.mrf.mxu0
    %v2239 = vadd.f32 %v1854, %v2238
    %v2240 = vpop.f32.mrf.mxu0
    %2241 = vmatprep.mubr.f32.mxu0 %v817
    %2242 = vmatmul.mubr.f32.gmra.mxu0 %v816
    %v2243 = vpop.f32.mrf.mxu0
    %v2244 = vadd.f32 %v1859, %v2243
    %v2245 = vpop.f32.mrf.mxu0
    %2246 = vmatprep.mubr.f32.mxu0 %v825
    %2247 = vmatmul.mubr.f32.gmra.mxu0 %v824
    %v2248 = vpop.f32.mrf.mxu0
    %v2249 = vadd.f32 %v1864, %v2248
    %v2250 = vpop.f32.mrf.mxu0
    %2251 = vmatprep.mubr.f32.mxu0 %v833
    %2252 = vmatmul.mubr.f32.gmra.mxu0 %v832
    %v2253 = vpop.f32.mrf.mxu0
    %v2254 = vadd.f32 %v1869, %v2253
    %v2255 = vpop.f32.mrf.mxu0
    %2256 = vmatprep.mubr.f32.mxu0 %v841
    %2257 = vmatmul.mubr.f32.gmra.mxu0 %v840
    %v2258 = vpop.f32.mrf.mxu0
    %v2259 = vadd.f32 %v1874, %v2258
    %v2260 = vpop.f32.mrf.mxu0
    %2261 = vmatprep.mubr.f32.mxu0 %v849
    %2262 = vmatmul.mubr.f32.gmra.mxu0 %v848
    %v2263 = vpop.f32.mrf.mxu0
    %v2264 = vadd.f32 %v1879, %v2263
    %v2265 = vpop.f32.mrf.mxu0
    %2266 = vmatprep.mubr.f32.mxu0 %v857
    %2267 = vmatmul.mubr.f32.gmra.mxu0 %v856
    %v2268 = vpop.f32.mrf.mxu0
    %v2269 = vadd.f32 %v1884, %v2268
    %v2270 = vpop.f32.mrf.mxu0
    %2271 = vmatprep.mubr.f32.mxu0 %v865
    %2272 = vmatmul.mubr.f32.gmra.mxu0 %v864
    %v2273 = vpop.f32.mrf.mxu0
    %v2274 = vadd.f32 %v1889, %v2273
    %v2275 = vpop.f32.mrf.mxu0
    %2276 = vmatprep.mubr.f32.mxu0 %v873
    %2277 = vmatmul.mubr.f32.gmra.mxu0 %v872
    %v2278 = vpop.f32.mrf.mxu0
    %v2279 = vadd.f32 %v1894, %v2278
    %v2280 = vpop.f32.mrf.mxu0
    %2281 = vmatprep.mubr.f32.mxu0 %v881
    %2282 = vmatmul.mubr.f32.gmra.mxu0 %v880
    %v2283 = vpop.f32.mrf.mxu0
    %v2284 = vadd.f32 %v1899, %v2283
    %v2285 = vpop.f32.mrf.mxu0
    %2286 = vmatprep.mubr.f32.mxu0 %v889
    %2287 = vmatmul.mubr.f32.gmra.mxu0 %v888
    %v2288 = vpop.f32.mrf.mxu0
    %v2289 = vadd.f32 %v1904, %v2288
    %v2290 = vpop.f32.mrf.mxu0
    %2291 = vmatprep.mubr.f32.mxu0 %v897
    %2292 = vmatmul.mubr.f32.gmra.mxu0 %v896
    %v2293 = vpop.f32.mrf.mxu0
    %v2294 = vadd.f32 %v1909, %v2293
    %v2295 = vpop.f32.mrf.mxu0
    %2296 = vmatprep.mubr.f32.mxu0 %v905
    %2297 = vmatmul.mubr.f32.gmra.mxu0 %v904
    %v2298 = vpop.f32.mrf.mxu0
    %v2299 = vadd.f32 %v1914, %v2298
    %v2300 = vpop.f32.mrf.mxu0
    %2301 = vmatprep.mubr.f32.mxu0 %v913
    %2302 = vmatmul.mubr.f32.gmra.mxu0 %v912
    %v2303 = vpop.f32.mrf.mxu0
    %v2304 = vadd.f32 %v1919, %v2303
    %v2305 = vpop.f32.mrf.mxu0
    %2306 = vmatprep.mubr.f32.mxu0 %v921
    %2307 = vmatmul.mubr.f32.gmra.mxu0 %v920
    %v2308 = vpop.f32.mrf.mxu0
    %v2309 = vadd.f32 %v1924, %v2308
    %v2310 = vpop.f32.mrf.mxu0
    %2311 = vmatprep.mubr.f32.mxu0 %v929
    %2312 = vmatmul.mubr.f32.gmra.mxu0 %v928
    %v2313 = vpop.f32.mrf.mxu0
    %v2314 = vadd.f32 %v1929, %v2313
    %v2315 = vpop.f32.mrf.mxu0
    %2316 = vmatprep.mubr.f32.mxu0 %v937
    %2317 = vmatmul.mubr.f32.gmra.mxu0 %v936
    %v2318 = vpop.f32.mrf.mxu0
    %v2319 = vadd.f32 %v1934, %v2318
    %v2320 = vpop.f32.mrf.mxu0
    %2321 = vmatprep.mubr.f32.mxu0 %v945
    %2322 = vmatmul.mubr.f32.gmra.mxu0 %v944
    %v2323 = vpop.f32.mrf.mxu0
    %v2324 = vadd.f32 %v1939, %v2323
    %v2325 = vpop.f32.mrf.mxu0
    %2326 = vmatprep.mubr.f32.mxu0 %v953
    %2327 = vmatmul.mubr.f32.gmra.mxu0 %v952
    %v2328 = vpop.f32.mrf.mxu0
    %v2329 = vadd.f32 %v1944, %v2328
    %v2330 = vpop.f32.mrf.mxu0
    %2331 = vmatprep.mubr.f32.mxu0 %v961
    %2332 = vmatmul.mubr.f32.gmra.mxu0 %v960
    %v2333 = vpop.f32.mrf.mxu0
    %v2334 = vadd.f32 %v1949, %v2333
    %v2335 = vpop.f32.mrf.mxu0
    %2336 = vmatprep.mubr.f32.mxu0 %v969
    %2337 = vmatmul.mubr.f32.gmra.mxu0 %v968
    %v2338 = vpop.f32.mrf.mxu0
    %v2339 = vadd.f32 %v1954, %v2338
    %v2340 = vpop.f32.mrf.mxu0
    %2341 = vmatprep.mubr.f32.mxu0 %v977
    %2342 = vmatmul.mubr.f32.gmra.mxu0 %v976
    %v2343 = vpop.f32.mrf.mxu0
    %v2344 = vadd.f32 %v1959, %v2343
    %v2345 = vpop.f32.mrf.mxu0
    %2346 = vmatprep.mubr.f32.mxu0 %v985
    %2347 = vmatmul.mubr.f32.gmra.mxu0 %v984
    %v2348 = vpop.f32.mrf.mxu0
    %v2349 = vadd.f32 %v1964, %v2348
    %v2350 = vpop.f32.mrf.mxu0
    %2351 = vmatprep.mubr.f32.mxu0 %v993
    %2352 = vmatmul.mubr.f32.gmra.mxu0 %v992
    %v2353 = vpop.f32.mrf.mxu0
    %v2354 = vadd.f32 %v1969, %v2353
    %v2355 = vpop.f32.mrf.mxu0
    %2356 = vmatprep.mubr.f32.mxu0 %v1001
    %2357 = vmatmul.mubr.f32.gmra.mxu0 %v1000
    %v2358 = vpop.f32.mrf.mxu0
    %v2359 = vadd.f32 %v1974, %v2358
    %v2360 = vpop.f32.mrf.mxu0
    %2361 = vmatprep.mubr.f32.mxu0 %v1009
    %2362 = vmatmul.mubr.f32.gmra.mxu0 %v1008
    %v2363 = vpop.f32.mrf.mxu0
    %v2364 = vadd.f32 %v1979, %v2363
    %v2365 = vpop.f32.mrf.mxu0
    %2366 = vmatprep.mubr.f32.mxu0 %v1017
    %2367 = vmatmul.mubr.f32.gmra.mxu0 %v1016
    %v2368 = vpop.f32.mrf.mxu0
    %v2369 = vadd.f32 %v1984, %v2368
    %v2370 = vpop.f32.mrf.mxu0
    %2371 = vmatprep.mubr.f32.mxu0 %v1025
    %2372 = vmatmul.mubr.f32.gmra.mxu0 %v1024
    %v2373 = vpop.f32.mrf.mxu0
    %v2374 = vadd.f32 %v1989, %v2373
    %v2375 = vpop.f32.mrf.mxu0
    %2376 = vmatprep.mubr.f32.mxu0 %v1033
    %2377 = vmatmul.mubr.f32.gmra.mxu0 %v1032
    %v2378 = vpop.f32.mrf.mxu0
    %v2379 = vadd.f32 %v1994, %v2378
    %v2380 = vpop.f32.mrf.mxu0
    %2381 = vmatprep.mubr.f32.mxu0 %v1041
    %2382 = vmatmul.mubr.f32.gmra.mxu0 %v1040
    %v2383 = vpop.f32.mrf.mxu0
    %v2384 = vadd.f32 %v1999, %v2383
    %v2385 = vpop.f32.mrf.mxu0
    %2386 = vmatprep.mubr.f32.mxu0 %v1049
    %2387 = vmatmul.mubr.f32.gmra.mxu0 %v1048
    %v2388 = vpop.f32.mrf.mxu0
    %v2389 = vadd.f32 %v2004, %v2388
    %v2390 = vpop.f32.mrf.mxu0
    %2391 = vmatprep.mubr.f32.mxu0 %v1057
    %2392 = vmatmul.mubr.f32.gmra.mxu0 %v1056
    %v2393 = vpop.f32.mrf.mxu0
    %v2394 = vadd.f32 %v2009, %v2393
    %v2395 = vpop.f32.mrf.mxu0
    %2396 = vmatprep.mubr.f32.mxu0 %v1065
    %2397 = vmatmul.mubr.f32.gmra.mxu0 %v1064
    %v2398 = vpop.f32.mrf.mxu0
    %v2399 = vadd.f32 %v2014, %v2398
    %v2400 = vpop.f32.mrf.mxu0
    %2401 = vmatprep.mubr.f32.mxu0 %v1073
    %2402 = vmatmul.mubr.f32.gmra.mxu0 %v1072
    %v2403 = vpop.f32.mrf.mxu0
    %v2404 = vadd.f32 %v2019, %v2403
    %v2405 = vpop.f32.mrf.mxu0
    %2406 = vmatprep.mubr.f32.mxu0 %v1081
    %2407 = vmatmul.mubr.f32.gmra.mxu0 %v1080
    %v2408 = vpop.f32.mrf.mxu0
    %v2409 = vadd.f32 %v2024, %v2408
    %v2410 = vpop.f32.mrf.mxu0
    %2411 = vmatprep.mubr.f32.mxu0 %v1089
    %2412 = vmatmul.mubr.f32.gmra.mxu0 %v1088
    %v2413 = vpop.f32.mrf.mxu0
    %v2414 = vadd.f32 %v2029, %v2413
    %v2415 = vpop.f32.mrf.mxu0
    %2416 = vmatprep.mubr.f32.mxu0 %v1097
    %2417 = vmatmul.mubr.f32.gmra.mxu0 %v1096
    %v2418 = vpop.f32.mrf.mxu0
    %v2419 = vadd.f32 %v2034, %v2418
    %v2420 = vpop.f32.mrf.mxu0
    %2421 = vmatprep.mubr.f32.mxu0 %v1105
    %2422 = vmatmul.mubr.f32.gmra.mxu0 %v1104
    %v2423 = vpop.f32.mrf.mxu0
    %v2424 = vadd.f32 %v2039, %v2423
    %v2425 = vpop.f32.mrf.mxu0
    %2426 = vmatprep.mubr.f32.mxu0 %v1113
    %2427 = vmatmul.mubr.f32.gmra.mxu0 %v1112
    %v2428 = vpop.f32.mrf.mxu0
    %v2429 = vadd.f32 %v2044, %v2428
    %v2430 = vpop.f32.mrf.mxu0
    %2431 = vmatprep.mubr.f32.mxu0 %v1121
    %2432 = vmatmul.mubr.f32.gmra.mxu0 %v1120
    %v2433 = vpop.f32.mrf.mxu0
    %v2434 = vadd.f32 %v2049, %v2433
    %v2435 = vpop.f32.mrf.mxu0
    %2436 = vmatprep.mubr.f32.mxu0 %v1129
    %2437 = vmatmul.mubr.f32.gmra.mxu0 %v1128
    %v2438 = vpop.f32.mrf.mxu0
    %v2439 = vadd.f32 %v2054, %v2438
    %v2440 = vpop.f32.mrf.mxu0
    %2441 = vmatprep.mubr.f32.mxu0 %v1137
    %2442 = vmatmul.mubr.f32.gmra.mxu0 %v1136
    %v2443 = vpop.f32.mrf.mxu0
    %v2444 = vadd.f32 %v2059, %v2443
    %v2445 = vpop.f32.mrf.mxu0
    %2446 = vmatprep.mubr.f32.mxu0 %v1145
    %2447 = vmatmul.mubr.f32.gmra.mxu0 %v1144
    %v2448 = vpop.f32.mrf.mxu0
    %v2449 = vadd.f32 %v2064, %v2448
    %v2450 = vpop.f32.mrf.mxu0
    %2451 = vmatprep.mubr.f32.mxu0 %v1153
    %2452 = vmatmul.mubr.f32.gmra.mxu0 %v1152
    %v2453 = vpop.f32.mrf.mxu0
    %v2454 = vadd.f32 %v2069, %v2453
    %v2455 = vpop.f32.mrf.mxu0
    %2456 = vmatprep.mubr.f32.mxu0 %v1161
    %2457 = vmatmul.mubr.f32.gmra.mxu0 %v1160
    %v2458 = vpop.f32.mrf.mxu0
    %v2459 = vadd.f32 %v2074, %v2458
    %v2460 = vpop.f32.mrf.mxu0
    %2461 = vmatprep.mubr.f32.mxu0 %v1169
    %2462 = vmatmul.mubr.f32.gmra.mxu0 %v1168
    %v2463 = vpop.f32.mrf.mxu0
    %v2464 = vadd.f32 %v2079, %v2463
    %v2465 = vpop.f32.mrf.mxu0
    %2466 = vmatprep.mubr.f32.mxu0 %v1177
    %2467 = vmatmul.mubr.f32.gmra.mxu0 %v1176
    %v2468 = vpop.f32.mrf.mxu0
    %v2469 = vadd.f32 %v2084, %v2468
    %v2470 = vpop.f32.mrf.mxu0
    %2471 = vmatprep.mubr.f32.mxu0 %v1185
    %2472 = vmatmul.mubr.f32.gmra.mxu0 %v1184
    %v2473 = vpop.f32.mrf.mxu0
    %v2474 = vadd.f32 %v2089, %v2473
    %v2475 = vpop.f32.mrf.mxu0
    %2476 = vmatprep.mubr.f32.mxu0 %v1193
    %2477 = vmatmul.mubr.f32.gmra.mxu0 %v1192
    %v2478 = vpop.f32.mrf.mxu0
    %v2479 = vadd.f32 %v2094, %v2478
    %v2480 = vpop.f32.mrf.mxu0
    %2481 = vmatprep.mubr.f32.mxu0 %v1201
    %2482 = vmatmul.mubr.f32.gmra.mxu0 %v1200
    %v2483 = vpop.f32.mrf.mxu0
    %v2484 = vadd.f32 %v2099, %v2483
    %v2485 = vpop.f32.mrf.mxu0
    %2486 = vdwg.mxu0
    %2487 = vmatprep.subr.mxu0 0.0
    %2488 = vmatpush1.msra.mxu0 %v1315
    %2489 = vmatprep.subr.mxu0 0.0
    %2490 = vmatpush1.msra.mxu0 %v1314
    %2491 = vmatprep.subr.mxu0 0.0
    %2492 = vmatpush1.msra.mxu0 %v1313
    %2493 = vmatprep.subr.mxu0 0.0
    %2494 = vmatpush1.msra.mxu0 %v1312
    %2495 = vmatprep.subr.mxu0 0.0
    %2496 = vmatpush1.msra.mxu0 %v1311
    %2497 = vmatprep.subr.mxu0 0.0
    %2498 = vmatpush1.msra.mxu0 %v1310
    %2499 = vmatprep.subr.mxu0 0.0
    %2500 = vmatpush1.msra.mxu0 %v1309
    %2501 = vmatprep.subr.mxu0 0.0
    %2502 = vmatpush1.msra.mxu0 %v1308
    %2503 = vmatprep.subr.mxu0 0.0
    %2504 = vmatpush1.msra.mxu0 %v1307
    %2505 = vmatprep.subr.mxu0 0.0
    %2506 = vmatpush1.msra.mxu0 %v1306
    %2507 = vmatprep.subr.mxu0 0.0
    %2508 = vmatpush1.msra.mxu0 %v1305
    %2509 = vmatprep.subr.mxu0 0.0
    %2510 = vmatpush1.msra.mxu0 %v1304
    %2511 = vmatprep.subr.mxu0 0.0
    %2512 = vmatpush1.msra.mxu0 %v1303
    %2513 = vmatprep.subr.mxu0 0.0
    %2514 = vmatpush1.msra.mxu0 %v1302
    %2515 = vmatprep.subr.mxu0 0.0
    %2516 = vmatpush1.msra.mxu0 %v1301
    %2517 = vmatprep.subr.mxu0 0.0
    %2518 = vmatpush1.msra.mxu0 %v1300
    %2519 = vmatprep.subr.mxu0 0.0
    %2520 = vmatpush2.msra.mxu0 %v1331
    %2521 = vmatprep.subr.mxu0 0.0
    %2522 = vmatpush2.msra.mxu0 %v1330
    %2523 = vmatprep.subr.mxu0 0.0
    %2524 = vmatpush2.msra.mxu0 %v1329
    %2525 = vmatprep.subr.mxu0 0.0
    %2526 = vmatpush2.msra.mxu0 %v1328
    %2527 = vmatprep.subr.mxu0 0.0
    %2528 = vmatpush2.msra.mxu0 %v1327
    %2529 = vmatprep.subr.mxu0 0.0
    %2530 = vmatpush2.msra.mxu0 %v1326
    %2531 = vmatprep.subr.mxu0 0.0
    %2532 = vmatpush2.msra.mxu0 %v1325
    %2533 = vmatprep.subr.mxu0 0.0
    %2534 = vmatpush2.msra.mxu0 %v1324
    %2535 = vmatprep.subr.mxu0 0.0
    %2536 = vmatpush2.msra.mxu0 %v1323
    %2537 = vmatprep.subr.mxu0 0.0
    %2538 = vmatpush2.msra.mxu0 %v1322
    %2539 = vmatprep.subr.mxu0 0.0
    %2540 = vmatpush2.msra.mxu0 %v1321
    %2541 = vmatprep.subr.mxu0 0.0
    %2542 = vmatpush2.msra.mxu0 %v1320
    %2543 = vmatprep.subr.mxu0 0.0
    %2544 = vmatpush2.msra.mxu0 %v1319
    %2545 = vmatprep.subr.mxu0 0.0
    %2546 = vmatpush2.msra.mxu0 %v1318
    %2547 = vmatprep.subr.mxu0 0.0
    %2548 = vmatpush2.msra.mxu0 %v1317
    %2549 = vmatprep.subr.mxu0 0.0
    %2550 = vmatpush2.msra.mxu0 %v1316
    %2551 = vmatprep.mubr.f32.mxu0 %v699
    %2552 = vmatmul.mubr.f32.gmra.mxu0 %v698
    %v2553 = vpop.f32.mrf.mxu0
    %v2554 = vadd.f32 %v2169, %v2553
    %v2555 = vpop.f32.mrf.mxu0
    %2556 = vmatprep.mubr.f32.mxu0 %v707
    %2557 = vmatmul.mubr.f32.gmra.mxu0 %v706
    %v2558 = vpop.f32.mrf.mxu0
    %v2559 = vadd.f32 %v2174, %v2558
    %v2560 = vpop.f32.mrf.mxu0
    %2561 = vmatprep.mubr.f32.mxu0 %v715
    %2562 = vmatmul.mubr.f32.gmra.mxu0 %v714
    %v2563 = vpop.f32.mrf.mxu0
    %v2564 = vadd.f32 %v2179, %v2563
    %v2565 = vpop.f32.mrf.mxu0
    %2566 = vmatprep.mubr.f32.mxu0 %v723
    %2567 = vmatmul.mubr.f32.gmra.mxu0 %v722
    %v2568 = vpop.f32.mrf.mxu0
    %v2569 = vadd.f32 %v2184, %v2568
    %v2570 = vpop.f32.mrf.mxu0
    %2571 = vmatprep.mubr.f32.mxu0 %v731
    %2572 = vmatmul.mubr.f32.gmra.mxu0 %v730
    %v2573 = vpop.f32.mrf.mxu0
    %v2574 = vadd.f32 %v2189, %v2573
    %v2575 = vpop.f32.mrf.mxu0
    %2576 = vmatprep.mubr.f32.mxu0 %v739
    %2577 = vmatmul.mubr.f32.gmra.mxu0 %v738
    %v2578 = vpop.f32.mrf.mxu0
    %v2579 = vadd.f32 %v2194, %v2578
    %v2580 = vpop.f32.mrf.mxu0
    %2581 = vmatprep.mubr.f32.mxu0 %v747
    %2582 = vmatmul.mubr.f32.gmra.mxu0 %v746
    %v2583 = vpop.f32.mrf.mxu0
    %v2584 = vadd.f32 %v2199, %v2583
    %v2585 = vpop.f32.mrf.mxu0
    %2586 = vmatprep.mubr.f32.mxu0 %v755
    %2587 = vmatmul.mubr.f32.gmra.mxu0 %v754
    %v2588 = vpop.f32.mrf.mxu0
    %v2589 = vadd.f32 %v2204, %v2588
    %v2590 = vpop.f32.mrf.mxu0
    %2591 = vmatprep.mubr.f32.mxu0 %v763
    %2592 = vmatmul.mubr.f32.gmra.mxu0 %v762
    %v2593 = vpop.f32.mrf.mxu0
    %v2594 = vadd.f32 %v2209, %v2593
    %v2595 = vpop.f32.mrf.mxu0
    %2596 = vmatprep.mubr.f32.mxu0 %v771
    %2597 = vmatmul.mubr.f32.gmra.mxu0 %v770
    %v2598 = vpop.f32.mrf.mxu0
    %v2599 = vadd.f32 %v2214, %v2598
    %v2600 = vpop.f32.mrf.mxu0
    %2601 = vmatprep.mubr.f32.mxu0 %v779
    %2602 = vmatmul.mubr.f32.gmra.mxu0 %v778
    %v2603 = vpop.f32.mrf.mxu0
    %v2604 = vadd.f32 %v2219, %v2603
    %v2605 = vpop.f32.mrf.mxu0
    %2606 = vmatprep.mubr.f32.mxu0 %v787
    %2607 = vmatmul.mubr.f32.gmra.mxu0 %v786
    %v2608 = vpop.f32.mrf.mxu0
    %v2609 = vadd.f32 %v2224, %v2608
    %v2610 = vpop.f32.mrf.mxu0
    %2611 = vmatprep.mubr.f32.mxu0 %v795
    %2612 = vmatmul.mubr.f32.gmra.mxu0 %v794
    %v2613 = vpop.f32.mrf.mxu0
    %v2614 = vadd.f32 %v2229, %v2613
    %v2615 = vpop.f32.mrf.mxu0
    %2616 = vmatprep.mubr.f32.mxu0 %v803
    %2617 = vmatmul.mubr.f32.gmra.mxu0 %v802
    %v2618 = vpop.f32.mrf.mxu0
    %v2619 = vadd.f32 %v2234, %v2618
    %v2620 = vpop.f32.mrf.mxu0
    %2621 = vmatprep.mubr.f32.mxu0 %v811
    %2622 = vmatmul.mubr.f32.gmra.mxu0 %v810
    %v2623 = vpop.f32.mrf.mxu0
    %v2624 = vadd.f32 %v2239, %v2623
    %v2625 = vpop.f32.mrf.mxu0
    %2626 = vmatprep.mubr.f32.mxu0 %v819
    %2627 = vmatmul.mubr.f32.gmra.mxu0 %v818
    %v2628 = vpop.f32.mrf.mxu0
    %v2629 = vadd.f32 %v2244, %v2628
    %v2630 = vpop.f32.mrf.mxu0
    %2631 = vmatprep.mubr.f32.mxu0 %v827
    %2632 = vmatmul.mubr.f32.gmra.mxu0 %v826
    %v2633 = vpop.f32.mrf.mxu0
    %v2634 = vadd.f32 %v2249, %v2633
    %v2635 = vpop.f32.mrf.mxu0
    %2636 = vmatprep.mubr.f32.mxu0 %v835
    %2637 = vmatmul.mubr.f32.gmra.mxu0 %v834
    %v2638 = vpop.f32.mrf.mxu0
    %v2639 = vadd.f32 %v2254, %v2638
    %v2640 = vpop.f32.mrf.mxu0
    %2641 = vmatprep.mubr.f32.mxu0 %v843
    %2642 = vmatmul.mubr.f32.gmra.mxu0 %v842
    %v2643 = vpop.f32.mrf.mxu0
    %v2644 = vadd.f32 %v2259, %v2643
    %v2645 = vpop.f32.mrf.mxu0
    %2646 = vmatprep.mubr.f32.mxu0 %v851
    %2647 = vmatmul.mubr.f32.gmra.mxu0 %v850
    %v2648 = vpop.f32.mrf.mxu0
    %v2649 = vadd.f32 %v2264, %v2648
    %v2650 = vpop.f32.mrf.mxu0
    %2651 = vmatprep.mubr.f32.mxu0 %v859
    %2652 = vmatmul.mubr.f32.gmra.mxu0 %v858
    %v2653 = vpop.f32.mrf.mxu0
    %v2654 = vadd.f32 %v2269, %v2653
    %v2655 = vpop.f32.mrf.mxu0
    %2656 = vmatprep.mubr.f32.mxu0 %v867
    %2657 = vmatmul.mubr.f32.gmra.mxu0 %v866
    %v2658 = vpop.f32.mrf.mxu0
    %v2659 = vadd.f32 %v2274, %v2658
    %v2660 = vpop.f32.mrf.mxu0
    %2661 = vmatprep.mubr.f32.mxu0 %v875
    %2662 = vmatmul.mubr.f32.gmra.mxu0 %v874
    %v2663 = vpop.f32.mrf.mxu0
    %v2664 = vadd.f32 %v2279, %v2663
    %v2665 = vpop.f32.mrf.mxu0
    %2666 = vmatprep.mubr.f32.mxu0 %v883
    %2667 = vmatmul.mubr.f32.gmra.mxu0 %v882
    %v2668 = vpop.f32.mrf.mxu0
    %v2669 = vadd.f32 %v2284, %v2668
    %v2670 = vpop.f32.mrf.mxu0
    %2671 = vmatprep.mubr.f32.mxu0 %v891
    %2672 = vmatmul.mubr.f32.gmra.mxu0 %v890
    %v2673 = vpop.f32.mrf.mxu0
    %v2674 = vadd.f32 %v2289, %v2673
    %v2675 = vpop.f32.mrf.mxu0
    %2676 = vmatprep.mubr.f32.mxu0 %v899
    %2677 = vmatmul.mubr.f32.gmra.mxu0 %v898
    %v2678 = vpop.f32.mrf.mxu0
    %v2679 = vadd.f32 %v2294, %v2678
    %v2680 = vpop.f32.mrf.mxu0
    %2681 = vmatprep.mubr.f32.mxu0 %v907
    %2682 = vmatmul.mubr.f32.gmra.mxu0 %v906
    %v2683 = vpop.f32.mrf.mxu0
    %v2684 = vadd.f32 %v2299, %v2683
    %v2685 = vpop.f32.mrf.mxu0
    %2686 = vmatprep.mubr.f32.mxu0 %v915
    %2687 = vmatmul.mubr.f32.gmra.mxu0 %v914
    %v2688 = vpop.f32.mrf.mxu0
    %v2689 = vadd.f32 %v2304, %v2688
    %v2690 = vpop.f32.mrf.mxu0
    %2691 = vmatprep.mubr.f32.mxu0 %v923
    %2692 = vmatmul.mubr.f32.gmra.mxu0 %v922
    %v2693 = vpop.f32.mrf.mxu0
    %v2694 = vadd.f32 %v2309, %v2693
    %v2695 = vpop.f32.mrf.mxu0
    %2696 = vmatprep.mubr.f32.mxu0 %v931
    %2697 = vmatmul.mubr.f32.gmra.mxu0 %v930
    %v2698 = vpop.f32.mrf.mxu0
    %v2699 = vadd.f32 %v2314, %v2698
    %v2700 = vpop.f32.mrf.mxu0
    %2701 = vmatprep.mubr.f32.mxu0 %v939
    %2702 = vmatmul.mubr.f32.gmra.mxu0 %v938
    %v2703 = vpop.f32.mrf.mxu0
    %v2704 = vadd.f32 %v2319, %v2703
    %v2705 = vpop.f32.mrf.mxu0
    %2706 = vmatprep.mubr.f32.mxu0 %v947
    %2707 = vmatmul.mubr.f32.gmra.mxu0 %v946
    %v2708 = vpop.f32.mrf.mxu0
    %v2709 = vadd.f32 %v2324, %v2708
    %v2710 = vpop.f32.mrf.mxu0
    %2711 = vmatprep.mubr.f32.mxu0 %v955
    %2712 = vmatmul.mubr.f32.gmra.mxu0 %v954
    %v2713 = vpop.f32.mrf.mxu0
    %v2714 = vadd.f32 %v2329, %v2713
    %v2715 = vpop.f32.mrf.mxu0
    %2716 = vmatprep.mubr.f32.mxu0 %v963
    %2717 = vmatmul.mubr.f32.gmra.mxu0 %v962
    %v2718 = vpop.f32.mrf.mxu0
    %v2719 = vadd.f32 %v2334, %v2718
    %v2720 = vpop.f32.mrf.mxu0
    %2721 = vmatprep.mubr.f32.mxu0 %v971
    %2722 = vmatmul.mubr.f32.gmra.mxu0 %v970
    %v2723 = vpop.f32.mrf.mxu0
    %v2724 = vadd.f32 %v2339, %v2723
    %v2725 = vpop.f32.mrf.mxu0
    %2726 = vmatprep.mubr.f32.mxu0 %v979
    %2727 = vmatmul.mubr.f32.gmra.mxu0 %v978
    %v2728 = vpop.f32.mrf.mxu0
    %v2729 = vadd.f32 %v2344, %v2728
    %v2730 = vpop.f32.mrf.mxu0
    %2731 = vmatprep.mubr.f32.mxu0 %v987
    %2732 = vmatmul.mubr.f32.gmra.mxu0 %v986
    %v2733 = vpop.f32.mrf.mxu0
    %v2734 = vadd.f32 %v2349, %v2733
    %v2735 = vpop.f32.mrf.mxu0
    %2736 = vmatprep.mubr.f32.mxu0 %v995
    %2737 = vmatmul.mubr.f32.gmra.mxu0 %v994
    %v2738 = vpop.f32.mrf.mxu0
    %v2739 = vadd.f32 %v2354, %v2738
    %v2740 = vpop.f32.mrf.mxu0
    %2741 = vmatprep.mubr.f32.mxu0 %v1003
    %2742 = vmatmul.mubr.f32.gmra.mxu0 %v1002
    %v2743 = vpop.f32.mrf.mxu0
    %v2744 = vadd.f32 %v2359, %v2743
    %v2745 = vpop.f32.mrf.mxu0
    %2746 = vmatprep.mubr.f32.mxu0 %v1011
    %2747 = vmatmul.mubr.f32.gmra.mxu0 %v1010
    %v2748 = vpop.f32.mrf.mxu0
    %v2749 = vadd.f32 %v2364, %v2748
    %v2750 = vpop.f32.mrf.mxu0
    %2751 = vmatprep.mubr.f32.mxu0 %v1019
    %2752 = vmatmul.mubr.f32.gmra.mxu0 %v1018
    %v2753 = vpop.f32.mrf.mxu0
    %v2754 = vadd.f32 %v2369, %v2753
    %v2755 = vpop.f32.mrf.mxu0
    %2756 = vmatprep.mubr.f32.mxu0 %v1027
    %2757 = vmatmul.mubr.f32.gmra.mxu0 %v1026
    %v2758 = vpop.f32.mrf.mxu0
    %v2759 = vadd.f32 %v2374, %v2758
    %v2760 = vpop.f32.mrf.mxu0
    %2761 = vmatprep.mubr.f32.mxu0 %v1035
    %2762 = vmatmul.mubr.f32.gmra.mxu0 %v1034
    %v2763 = vpop.f32.mrf.mxu0
    %v2764 = vadd.f32 %v2379, %v2763
    %v2765 = vpop.f32.mrf.mxu0
    %2766 = vmatprep.mubr.f32.mxu0 %v1043
    %2767 = vmatmul.mubr.f32.gmra.mxu0 %v1042
    %v2768 = vpop.f32.mrf.mxu0
    %v2769 = vadd.f32 %v2384, %v2768
    %v2770 = vpop.f32.mrf.mxu0
    %2771 = vmatprep.mubr.f32.mxu0 %v1051
    %2772 = vmatmul.mubr.f32.gmra.mxu0 %v1050
    %v2773 = vpop.f32.mrf.mxu0
    %v2774 = vadd.f32 %v2389, %v2773
    %v2775 = vpop.f32.mrf.mxu0
    %2776 = vmatprep.mubr.f32.mxu0 %v1059
    %2777 = vmatmul.mubr.f32.gmra.mxu0 %v1058
    %v2778 = vpop.f32.mrf.mxu0
    %v2779 = vadd.f32 %v2394, %v2778
    %v2780 = vpop.f32.mrf.mxu0
    %2781 = vmatprep.mubr.f32.mxu0 %v1067
    %2782 = vmatmul.mubr.f32.gmra.mxu0 %v1066
    %v2783 = vpop.f32.mrf.mxu0
    %v2784 = vadd.f32 %v2399, %v2783
    %v2785 = vpop.f32.mrf.mxu0
    %2786 = vmatprep.mubr.f32.mxu0 %v1075
    %2787 = vmatmul.mubr.f32.gmra.mxu0 %v1074
    %v2788 = vpop.f32.mrf.mxu0
    %v2789 = vadd.f32 %v2404, %v2788
    %v2790 = vpop.f32.mrf.mxu0
    %2791 = vmatprep.mubr.f32.mxu0 %v1083
    %2792 = vmatmul.mubr.f32.gmra.mxu0 %v1082
    %v2793 = vpop.f32.mrf.mxu0
    %v2794 = vadd.f32 %v2409, %v2793
    %v2795 = vpop.f32.mrf.mxu0
    %2796 = vmatprep.mubr.f32.mxu0 %v1091
    %2797 = vmatmul.mubr.f32.gmra.mxu0 %v1090
    %v2798 = vpop.f32.mrf.mxu0
    %v2799 = vadd.f32 %v2414, %v2798
    %v2800 = vpop.f32.mrf.mxu0
    %2801 = vmatprep.mubr.f32.mxu0 %v1099
    %2802 = vmatmul.mubr.f32.gmra.mxu0 %v1098
    %v2803 = vpop.f32.mrf.mxu0
    %v2804 = vadd.f32 %v2419, %v2803
    %v2805 = vpop.f32.mrf.mxu0
    %2806 = vmatprep.mubr.f32.mxu0 %v1107
    %2807 = vmatmul.mubr.f32.gmra.mxu0 %v1106
    %v2808 = vpop.f32.mrf.mxu0
    %v2809 = vadd.f32 %v2424, %v2808
    %v2810 = vpop.f32.mrf.mxu0
    %2811 = vmatprep.mubr.f32.mxu0 %v1115
    %2812 = vmatmul.mubr.f32.gmra.mxu0 %v1114
    %v2813 = vpop.f32.mrf.mxu0
    %v2814 = vadd.f32 %v2429, %v2813
    %v2815 = vpop.f32.mrf.mxu0
    %2816 = vmatprep.mubr.f32.mxu0 %v1123
    %2817 = vmatmul.mubr.f32.gmra.mxu0 %v1122
    %v2818 = vpop.f32.mrf.mxu0
    %v2819 = vadd.f32 %v2434, %v2818
    %v2820 = vpop.f32.mrf.mxu0
    %2821 = vmatprep.mubr.f32.mxu0 %v1131
    %2822 = vmatmul.mubr.f32.gmra.mxu0 %v1130
    %v2823 = vpop.f32.mrf.mxu0
    %v2824 = vadd.f32 %v2439, %v2823
    %v2825 = vpop.f32.mrf.mxu0
    %2826 = vmatprep.mubr.f32.mxu0 %v1139
    %2827 = vmatmul.mubr.f32.gmra.mxu0 %v1138
    %v2828 = vpop.f32.mrf.mxu0
    %v2829 = vadd.f32 %v2444, %v2828
    %v2830 = vpop.f32.mrf.mxu0
    %2831 = vmatprep.mubr.f32.mxu0 %v1147
    %2832 = vmatmul.mubr.f32.gmra.mxu0 %v1146
    %v2833 = vpop.f32.mrf.mxu0
    %v2834 = vadd.f32 %v2449, %v2833
    %v2835 = vpop.f32.mrf.mxu0
    %2836 = vmatprep.mubr.f32.mxu0 %v1155
    %2837 = vmatmul.mubr.f32.gmra.mxu0 %v1154
    %v2838 = vpop.f32.mrf.mxu0
    %v2839 = vadd.f32 %v2454, %v2838
    %v2840 = vpop.f32.mrf.mxu0
    %2841 = vmatprep.mubr.f32.mxu0 %v1163
    %2842 = vmatmul.mubr.f32.gmra.mxu0 %v1162
    %v2843 = vpop.f32.mrf.mxu0
    %v2844 = vadd.f32 %v2459, %v2843
    %v2845 = vpop.f32.mrf.mxu0
    %2846 = vmatprep.mubr.f32.mxu0 %v1171
    %2847 = vmatmul.mubr.f32.gmra.mxu0 %v1170
    %v2848 = vpop.f32.mrf.mxu0
    %v2849 = vadd.f32 %v2464, %v2848
    %v2850 = vpop.f32.mrf.mxu0
    %2851 = vmatprep.mubr.f32.mxu0 %v1179
    %2852 = vmatmul.mubr.f32.gmra.mxu0 %v1178
    %v2853 = vpop.f32.mrf.mxu0
    %v2854 = vadd.f32 %v2469, %v2853
    %v2855 = vpop.f32.mrf.mxu0
    %2856 = vmatprep.mubr.f32.mxu0 %v1187
    %2857 = vmatmul.mubr.f32.gmra.mxu0 %v1186
    %v2858 = vpop.f32.mrf.mxu0
    %v2859 = vadd.f32 %v2474, %v2858
    %v2860 = vpop.f32.mrf.mxu0
    %2861 = vmatprep.mubr.f32.mxu0 %v1195
    %2862 = vmatmul.mubr.f32.gmra.mxu0 %v1194
    %v2863 = vpop.f32.mrf.mxu0
    %v2864 = vadd.f32 %v2479, %v2863
    %v2865 = vpop.f32.mrf.mxu0
    %2866 = vmatprep.mubr.f32.mxu0 %v1203
    %2867 = vmatmul.mubr.f32.gmra.mxu0 %v1202
    %v2868 = vpop.f32.mrf.mxu0
    %v2869 = vadd.f32 %v2484, %v2868
    %v2870 = vpop.f32.mrf.mxu0
    %2871 = vdwg.mxu0
    %v2872 = vld [vmem:[%s1] sm:$0xff]
    %v2873 = vld [vmem:[%s1 + $0x8] sm:$0xff]
    %v2874 = vld [vmem:[%s1 + $0x10] sm:$0xff]
    %v2875 = vld [vmem:[%s1 + $0x18] sm:$0xff]
    %v2876 = vld [vmem:[%s1 + $0x20] sm:$0xff]
    %v2877 = vld [vmem:[%s1 + $0x28] sm:$0xff]
    %v2878 = vld [vmem:[%s1 + $0x30] sm:$0xff]
    %v2879 = vld [vmem:[%s1 + $0x38] sm:$0xff]
    %v2880 = vld [vmem:[%s1 + $0x40] sm:$0xff]
    %v2881 = vld [vmem:[%s1 + $0x48] sm:$0xff]
    %v2882 = vld [vmem:[%s1 + $0x50] sm:$0xff]
    %v2883 = vld [vmem:[%s1 + $0x58] sm:$0xff]
    %v2884 = vld [vmem:[%s1 + $0x60] sm:$0xff]
    %v2885 = vld [vmem:[%s1 + $0x68] sm:$0xff]
    %v2886 = vld [vmem:[%s1 + $0x70] sm:$0xff]
    %v2887 = vld [vmem:[%s1 + $0x78] sm:$0xff]
    %v2888 = vld [vmem:[%s1 + $0x80] sm:$0xff]
    %v2889 = vld [vmem:[%s1 + $0x88] sm:$0xff]
    %v2890 = vld [vmem:[%s1 + $0x90] sm:$0xff]
    %v2891 = vld [vmem:[%s1 + $0x98] sm:$0xff]
    %v2892 = vld [vmem:[%s1 + $0xa0] sm:$0xff]
    %v2893 = vld [vmem:[%s1 + $0xa8] sm:$0xff]
    %v2894 = vld [vmem:[%s1 + $0xb0] sm:$0xff]
    %v2895 = vld [vmem:[%s1 + $0xb8] sm:$0xff]
    %v2896 = vld [vmem:[%s1 + $0xc0] sm:$0xff]
    %v2897 = vld [vmem:[%s1 + $0xc8] sm:$0xff]
    %v2898 = vld [vmem:[%s1 + $0xd0] sm:$0xff]
    %v2899 = vld [vmem:[%s1 + $0xd8] sm:$0xff]
    %v2900 = vld [vmem:[%s1 + $0xe0] sm:$0xff]
    %v2901 = vld [vmem:[%s1 + $0xe8] sm:$0xff]
    %v2902 = vld [vmem:[%s1 + $0xf0] sm:$0xff]
    %v2903 = vld [vmem:[%s1 + $0xf8] sm:$0xff]
    %v2904 = vld [vmem:[%s1 + $0x100] sm:$0xff]
    %v2905 = vld [vmem:[%s1 + $0x108] sm:$0xff]
    %v2906 = vld [vmem:[%s1 + $0x110] sm:$0xff]
    %v2907 = vld [vmem:[%s1 + $0x118] sm:$0xff]
    %v2908 = vld [vmem:[%s1 + $0x120] sm:$0xff]
    %v2909 = vld [vmem:[%s1 + $0x128] sm:$0xff]
    %v2910 = vld [vmem:[%s1 + $0x130] sm:$0xff]
    %v2911 = vld [vmem:[%s1 + $0x138] sm:$0xff]
    %v2912 = vld [vmem:[%s1 + $0x140] sm:$0xff]
    %v2913 = vld [vmem:[%s1 + $0x148] sm:$0xff]
    %v2914 = vld [vmem:[%s1 + $0x150] sm:$0xff]
    %v2915 = vld [vmem:[%s1 + $0x158] sm:$0xff]
    %v2916 = vld [vmem:[%s1 + $0x160] sm:$0xff]
    %v2917 = vld [vmem:[%s1 + $0x168] sm:$0xff]
    %v2918 = vld [vmem:[%s1 + $0x170] sm:$0xff]
    %v2919 = vld [vmem:[%s1 + $0x178] sm:$0xff]
    %v2920 = vld [vmem:[%s1 + $0x180] sm:$0xff]
    %v2921 = vld [vmem:[%s1 + $0x188] sm:$0xff]
    %v2922 = vld [vmem:[%s1 + $0x190] sm:$0xff]
    %v2923 = vld [vmem:[%s1 + $0x198] sm:$0xff]
    %v2924 = vld [vmem:[%s1 + $0x1a0] sm:$0xff]
    %v2925 = vld [vmem:[%s1 + $0x1a8] sm:$0xff]
    %v2926 = vld [vmem:[%s1 + $0x1b0] sm:$0xff]
    %v2927 = vld [vmem:[%s1 + $0x1b8] sm:$0xff]
    %v2928 = vld [vmem:[%s1 + $0x1c0] sm:$0xff]
    %v2929 = vld [vmem:[%s1 + $0x1c8] sm:$0xff]
    %v2930 = vld [vmem:[%s1 + $0x1d0] sm:$0xff]
    %v2931 = vld [vmem:[%s1 + $0x1d8] sm:$0xff]
    %v2932 = vld [vmem:[%s1 + $0x1e0] sm:$0xff]
    %v2933 = vld [vmem:[%s1 + $0x1e8] sm:$0xff]
    %v2934 = vld [vmem:[%s1 + $0x1f0] sm:$0xff]
    %v2935 = vld [vmem:[%s1 + $0x1f8] sm:$0xff]
    %2937 = vset.pattern.permute.xlu0 0
    %2938 = vperm.xlu0 %2937, %v2872
    %v2939 = vpop.permute.xlu0 %2938
    %2942 = vset.pattern.permute.xlu0 0
    %2943 = vperm.xlu0 %2942, %v2873
    %v2944 = vpop.permute.xlu0 %2943
    %2947 = vset.pattern.permute.xlu0 0
    %2948 = vperm.xlu0 %2947, %v2874
    %v2949 = vpop.permute.xlu0 %2948
    %2952 = vset.pattern.permute.xlu0 0
    %2953 = vperm.xlu0 %2952, %v2875
    %v2954 = vpop.permute.xlu0 %2953
    %2957 = vset.pattern.permute.xlu0 0
    %2958 = vperm.xlu0 %2957, %v2876
    %v2959 = vpop.permute.xlu0 %2958
    %2962 = vset.pattern.permute.xlu0 0
    %2963 = vperm.xlu0 %2962, %v2877
    %v2964 = vpop.permute.xlu0 %2963
    %2967 = vset.pattern.permute.xlu0 0
    %2968 = vperm.xlu0 %2967, %v2878
    %v2969 = vpop.permute.xlu0 %2968
    %2972 = vset.pattern.permute.xlu0 0
    %2973 = vperm.xlu0 %2972, %v2879
    %v2974 = vpop.permute.xlu0 %2973
    %2977 = vset.pattern.permute.xlu0 0
    %2978 = vperm.xlu0 %2977, %v2880
    %v2979 = vpop.permute.xlu0 %2978
    %2982 = vset.pattern.permute.xlu0 0
    %2983 = vperm.xlu0 %2982, %v2881
    %v2984 = vpop.permute.xlu0 %2983
    %2987 = vset.pattern.permute.xlu0 0
    %2988 = vperm.xlu0 %2987, %v2882
    %v2989 = vpop.permute.xlu0 %2988
    %2992 = vset.pattern.permute.xlu0 0
    %2993 = vperm.xlu0 %2992, %v2883
    %v2994 = vpop.permute.xlu0 %2993
    %2997 = vset.pattern.permute.xlu0 0
    %2998 = vperm.xlu0 %2997, %v2884
    %v2999 = vpop.permute.xlu0 %2998
    %3002 = vset.pattern.permute.xlu0 0
    %3003 = vperm.xlu0 %3002, %v2885
    %v3004 = vpop.permute.xlu0 %3003
    %3007 = vset.pattern.permute.xlu0 0
    %3008 = vperm.xlu0 %3007, %v2886
    %v3009 = vpop.permute.xlu0 %3008
    %3012 = vset.pattern.permute.xlu0 0
    %3013 = vperm.xlu0 %3012, %v2887
    %v3014 = vpop.permute.xlu0 %3013
    %3017 = vset.pattern.permute.xlu0 0
    %3018 = vperm.xlu0 %3017, %v2888
    %v3019 = vpop.permute.xlu0 %3018
    %3022 = vset.pattern.permute.xlu0 0
    %3023 = vperm.xlu0 %3022, %v2889
    %v3024 = vpop.permute.xlu0 %3023
    %3027 = vset.pattern.permute.xlu0 0
    %3028 = vperm.xlu0 %3027, %v2890
    %v3029 = vpop.permute.xlu0 %3028
    %3032 = vset.pattern.permute.xlu0 0
    %3033 = vperm.xlu0 %3032, %v2891
    %v3034 = vpop.permute.xlu0 %3033
    %3037 = vset.pattern.permute.xlu0 0
    %3038 = vperm.xlu0 %3037, %v2892
    %v3039 = vpop.permute.xlu0 %3038
    %3042 = vset.pattern.permute.xlu0 0
    %3043 = vperm.xlu0 %3042, %v2893
    %v3044 = vpop.permute.xlu0 %3043
    %3047 = vset.pattern.permute.xlu0 0
    %3048 = vperm.xlu0 %3047, %v2894
    %v3049 = vpop.permute.xlu0 %3048
    %3052 = vset.pattern.permute.xlu0 0
    %3053 = vperm.xlu0 %3052, %v2895
    %v3054 = vpop.permute.xlu0 %3053
    %3057 = vset.pattern.permute.xlu0 0
    %3058 = vperm.xlu0 %3057, %v2896
    %v3059 = vpop.permute.xlu0 %3058
    %3062 = vset.pattern.permute.xlu0 0
    %3063 = vperm.xlu0 %3062, %v2897
    %v3064 = vpop.permute.xlu0 %3063
    %3067 = vset.pattern.permute.xlu0 0
    %3068 = vperm.xlu0 %3067, %v2898
    %v3069 = vpop.permute.xlu0 %3068
    %3072 = vset.pattern.permute.xlu0 0
    %3073 = vperm.xlu0 %3072, %v2899
    %v3074 = vpop.permute.xlu0 %3073
    %3077 = vset.pattern.permute.xlu0 0
    %3078 = vperm.xlu0 %3077, %v2900
    %v3079 = vpop.permute.xlu0 %3078
    %3082 = vset.pattern.permute.xlu0 0
    %3083 = vperm.xlu0 %3082, %v2901
    %v3084 = vpop.permute.xlu0 %3083
    %3087 = vset.pattern.permute.xlu0 0
    %3088 = vperm.xlu0 %3087, %v2902
    %v3089 = vpop.permute.xlu0 %3088
    %3092 = vset.pattern.permute.xlu0 0
    %3093 = vperm.xlu0 %3092, %v2903
    %v3094 = vpop.permute.xlu0 %3093
    %3097 = vset.pattern.permute.xlu0 0
    %3098 = vperm.xlu0 %3097, %v2904
    %v3099 = vpop.permute.xlu0 %3098
    %3102 = vset.pattern.permute.xlu0 0
    %3103 = vperm.xlu0 %3102, %v2905
    %v3104 = vpop.permute.xlu0 %3103
    %3107 = vset.pattern.permute.xlu0 0
    %3108 = vperm.xlu0 %3107, %v2906
    %v3109 = vpop.permute.xlu0 %3108
    %3112 = vset.pattern.permute.xlu0 0
    %3113 = vperm.xlu0 %3112, %v2907
    %v3114 = vpop.permute.xlu0 %3113
    %3117 = vset.pattern.permute.xlu0 0
    %3118 = vperm.xlu0 %3117, %v2908
    %v3119 = vpop.permute.xlu0 %3118
    %3122 = vset.pattern.permute.xlu0 0
    %3123 = vperm.xlu0 %3122, %v2909
    %v3124 = vpop.permute.xlu0 %3123
    %3127 = vset.pattern.permute.xlu0 0
    %3128 = vperm.xlu0 %3127, %v2910
    %v3129 = vpop.permute.xlu0 %3128
    %3132 = vset.pattern.permute.xlu0 0
    %3133 = vperm.xlu0 %3132, %v2911
    %v3134 = vpop.permute.xlu0 %3133
    %3137 = vset.pattern.permute.xlu0 0
    %3138 = vperm.xlu0 %3137, %v2912
    %v3139 = vpop.permute.xlu0 %3138
    %3142 = vset.pattern.permute.xlu0 0
    %3143 = vperm.xlu0 %3142, %v2913
    %v3144 = vpop.permute.xlu0 %3143
    %3147 = vset.pattern.permute.xlu0 0
    %3148 = vperm.xlu0 %3147, %v2914
    %v3149 = vpop.permute.xlu0 %3148
    %3152 = vset.pattern.permute.xlu0 0
    %3153 = vperm.xlu0 %3152, %v2915
    %v3154 = vpop.permute.xlu0 %3153
    %3157 = vset.pattern.permute.xlu0 0
    %3158 = vperm.xlu0 %3157, %v2916
    %v3159 = vpop.permute.xlu0 %3158
    %3162 = vset.pattern.permute.xlu0 0
    %3163 = vperm.xlu0 %3162, %v2917
    %v3164 = vpop.permute.xlu0 %3163
    %3167 = vset.pattern.permute.xlu0 0
    %3168 = vperm.xlu0 %3167, %v2918
    %v3169 = vpop.permute.xlu0 %3168
    %3172 = vset.pattern.permute.xlu0 0
    %3173 = vperm.xlu0 %3172, %v2919
    %v3174 = vpop.permute.xlu0 %3173
    %3177 = vset.pattern.permute.xlu0 0
    %3178 = vperm.xlu0 %3177, %v2920
    %v3179 = vpop.permute.xlu0 %3178
    %3182 = vset.pattern.permute.xlu0 0
    %3183 = vperm.xlu0 %3182, %v2921
    %v3184 = vpop.permute.xlu0 %3183
    %3187 = vset.pattern.permute.xlu0 0
    %3188 = vperm.xlu0 %3187, %v2922
    %v3189 = vpop.permute.xlu0 %3188
    %3192 = vset.pattern.permute.xlu0 0
    %3193 = vperm.xlu0 %3192, %v2923
    %v3194 = vpop.permute.xlu0 %3193
    %3197 = vset.pattern.permute.xlu0 0
    %3198 = vperm.xlu0 %3197, %v2924
    %v3199 = vpop.permute.xlu0 %3198
    %3202 = vset.pattern.permute.xlu0 0
    %3203 = vperm.xlu0 %3202, %v2925
    %v3204 = vpop.permute.xlu0 %3203
    %3207 = vset.pattern.permute.xlu0 0
    %3208 = vperm.xlu0 %3207, %v2926
    %v3209 = vpop.permute.xlu0 %3208
    %3212 = vset.pattern.permute.xlu0 0
    %3213 = vperm.xlu0 %3212, %v2927
    %v3214 = vpop.permute.xlu0 %3213
    %3217 = vset.pattern.permute.xlu0 0
    %3218 = vperm.xlu0 %3217, %v2928
    %v3219 = vpop.permute.xlu0 %3218
    %3222 = vset.pattern.permute.xlu0 0
    %3223 = vperm.xlu0 %3222, %v2929
    %v3224 = vpop.permute.xlu0 %3223
    %3227 = vset.pattern.permute.xlu0 0
    %3228 = vperm.xlu0 %3227, %v2930
    %v3229 = vpop.permute.xlu0 %3228
    %3232 = vset.pattern.permute.xlu0 0
    %3233 = vperm.xlu0 %3232, %v2931
    %v3234 = vpop.permute.xlu0 %3233
    %3237 = vset.pattern.permute.xlu0 0
    %3238 = vperm.xlu0 %3237, %v2932
    %v3239 = vpop.permute.xlu0 %3238
    %3242 = vset.pattern.permute.xlu0 0
    %3243 = vperm.xlu0 %3242, %v2933
    %v3244 = vpop.permute.xlu0 %3243
    %3247 = vset.pattern.permute.xlu0 0
    %3248 = vperm.xlu0 %3247, %v2934
    %v3249 = vpop.permute.xlu0 %3248
    %3252 = vset.pattern.permute.xlu0 0
    %3253 = vperm.xlu0 %3252, %v2935
    %v3254 = vpop.permute.xlu0 %3253
    %v3256 = vmul.f32 %v2554, %v2939
    %v3257 = vmul.f32 %v2559, %v2944
    %v3258 = vmul.f32 %v2564, %v2949
    %v3259 = vmul.f32 %v2569, %v2954
    %v3260 = vmul.f32 %v2574, %v2959
    %v3261 = vmul.f32 %v2579, %v2964
    %v3262 = vmul.f32 %v2584, %v2969
    %v3263 = vmul.f32 %v2589, %v2974
    %v3264 = vmul.f32 %v2594, %v2979
    %v3265 = vmul.f32 %v2599, %v2984
    %v3266 = vmul.f32 %v2604, %v2989
    %v3267 = vmul.f32 %v2609, %v2994
    %v3268 = vmul.f32 %v2614, %v2999
    %v3269 = vmul.f32 %v2619, %v3004
    %v3270 = vmul.f32 %v2624, %v3009
    %v3271 = vmul.f32 %v2629, %v3014
    %v3272 = vmul.f32 %v2634, %v3019
    %v3273 = vmul.f32 %v2639, %v3024
    %v3274 = vmul.f32 %v2644, %v3029
    %v3275 = vmul.f32 %v2649, %v3034
    %v3276 = vmul.f32 %v2654, %v3039
    %v3277 = vmul.f32 %v2659, %v3044
    %v3278 = vmul.f32 %v2664, %v3049
    %v3279 = vmul.f32 %v2669, %v3054
    %v3280 = vmul.f32 %v2674, %v3059
    %v3281 = vmul.f32 %v2679, %v3064
    %v3282 = vmul.f32 %v2684, %v3069
    %v3283 = vmul.f32 %v2689, %v3074
    %v3284 = vmul.f32 %v2694, %v3079
    %v3285 = vmul.f32 %v2699, %v3084
    %v3286 = vmul.f32 %v2704, %v3089
    %v3287 = vmul.f32 %v2709, %v3094
    %v3288 = vmul.f32 %v2714, %v3099
    %v3289 = vmul.f32 %v2719, %v3104
    %v3290 = vmul.f32 %v2724, %v3109
    %v3291 = vmul.f32 %v2729, %v3114
    %v3292 = vmul.f32 %v2734, %v3119
    %v3293 = vmul.f32 %v2739, %v3124
    %v3294 = vmul.f32 %v2744, %v3129
    %v3295 = vmul.f32 %v2749, %v3134
    %v3296 = vmul.f32 %v2754, %v3139
    %v3297 = vmul.f32 %v2759, %v3144
    %v3298 = vmul.f32 %v2764, %v3149
    %v3299 = vmul.f32 %v2769, %v3154
    %v3300 = vmul.f32 %v2774, %v3159
    %v3301 = vmul.f32 %v2779, %v3164
    %v3302 = vmul.f32 %v2784, %v3169
    %v3303 = vmul.f32 %v2789, %v3174
    %v3304 = vmul.f32 %v2794, %v3179
    %v3305 = vmul.f32 %v2799, %v3184
    %v3306 = vmul.f32 %v2804, %v3189
    %v3307 = vmul.f32 %v2809, %v3194
    %v3308 = vmul.f32 %v2814, %v3199
    %v3309 = vmul.f32 %v2819, %v3204
    %v3310 = vmul.f32 %v2824, %v3209
    %v3311 = vmul.f32 %v2829, %v3214
    %v3312 = vmul.f32 %v2834, %v3219
    %v3313 = vmul.f32 %v2839, %v3224
    %v3314 = vmul.f32 %v2844, %v3229
    %v3315 = vmul.f32 %v2849, %v3234
    %v3316 = vmul.f32 %v2854, %v3239
    %v3317 = vmul.f32 %v2859, %v3244
    %v3318 = vmul.f32 %v2864, %v3249
    %v3319 = vmul.f32 %v2869, %v3254
    %3320 = vst [vmem:[#allocation7] sm:$0xff] %v3256
    %3321 = vst [vmem:[#allocation7 + $0x8] sm:$0xff] %v3257
    %3322 = vst [vmem:[#allocation7 + $0x10] sm:$0xff] %v3258
    %3323 = vst [vmem:[#allocation7 + $0x18] sm:$0xff] %v3259
    %3324 = vst [vmem:[#allocation7 + $0x20] sm:$0xff] %v3260
    %3325 = vst [vmem:[#allocation7 + $0x28] sm:$0xff] %v3261
    %3326 = vst [vmem:[#allocation7 + $0x30] sm:$0xff] %v3262
    %3327 = vst [vmem:[#allocation7 + $0x38] sm:$0xff] %v3263
    %3328 = vst [vmem:[#allocation7 + $0x40] sm:$0xff] %v3264
    %3329 = vst [vmem:[#allocation7 + $0x48] sm:$0xff] %v3265
    %3330 = vst [vmem:[#allocation7 + $0x50] sm:$0xff] %v3266
    %3331 = vst [vmem:[#allocation7 + $0x58] sm:$0xff] %v3267
    %3332 = vst [vmem:[#allocation7 + $0x60] sm:$0xff] %v3268
    %3333 = vst [vmem:[#allocation7 + $0x68] sm:$0xff] %v3269
    %3334 = vst [vmem:[#allocation7 + $0x70] sm:$0xff] %v3270
    %3335 = vst [vmem:[#allocation7 + $0x78] sm:$0xff] %v3271
    %3336 = vst [vmem:[#allocation7 + $0x80] sm:$0xff] %v3272
    %3337 = vst [vmem:[#allocation7 + $0x88] sm:$0xff] %v3273
    %3338 = vst [vmem:[#allocation7 + $0x90] sm:$0xff] %v3274
    %3339 = vst [vmem:[#allocation7 + $0x98] sm:$0xff] %v3275
    %3340 = vst [vmem:[#allocation7 + $0xa0] sm:$0xff] %v3276
    %3341 = vst [vmem:[#allocation7 + $0xa8] sm:$0xff] %v3277
    %3342 = vst [vmem:[#allocation7 + $0xb0] sm:$0xff] %v3278
    %3343 = vst [vmem:[#allocation7 + $0xb8] sm:$0xff] %v3279
    %3344 = vst [vmem:[#allocation7 + $0xc0] sm:$0xff] %v3280
    %3345 = vst [vmem:[#allocation7 + $0xc8] sm:$0xff] %v3281
    %3346 = vst [vmem:[#allocation7 + $0xd0] sm:$0xff] %v3282
    %3347 = vst [vmem:[#allocation7 + $0xd8] sm:$0xff] %v3283
    %3348 = vst [vmem:[#allocation7 + $0xe0] sm:$0xff] %v3284
    %3349 = vst [vmem:[#allocation7 + $0xe8] sm:$0xff] %v3285
    %3350 = vst [vmem:[#allocation7 + $0xf0] sm:$0xff] %v3286
    %3351 = vst [vmem:[#allocation7 + $0xf8] sm:$0xff] %v3287
    %3352 = vst [vmem:[#allocation7 + $0x100] sm:$0xff] %v3288
    %3353 = vst [vmem:[#allocation7 + $0x108] sm:$0xff] %v3289
    %3354 = vst [vmem:[#allocation7 + $0x110] sm:$0xff] %v3290
    %3355 = vst [vmem:[#allocation7 + $0x118] sm:$0xff] %v3291
    %3356 = vst [vmem:[#allocation7 + $0x120] sm:$0xff] %v3292
    %3357 = vst [vmem:[#allocation7 + $0x128] sm:$0xff] %v3293
    %3358 = vst [vmem:[#allocation7 + $0x130] sm:$0xff] %v3294
    %3359 = vst [vmem:[#allocation7 + $0x138] sm:$0xff] %v3295
    %3360 = vst [vmem:[#allocation7 + $0x140] sm:$0xff] %v3296
    %3361 = vst [vmem:[#allocation7 + $0x148] sm:$0xff] %v3297
    %3362 = vst [vmem:[#allocation7 + $0x150] sm:$0xff] %v3298
    %3363 = vst [vmem:[#allocation7 + $0x158] sm:$0xff] %v3299
    %3364 = vst [vmem:[#allocation7 + $0x160] sm:$0xff] %v3300
    %3365 = vst [vmem:[#allocation7 + $0x168] sm:$0xff] %v3301
    %3366 = vst [vmem:[#allocation7 + $0x170] sm:$0xff] %v3302
    %3367 = vst [vmem:[#allocation7 + $0x178] sm:$0xff] %v3303
    %3368 = vst [vmem:[#allocation7 + $0x180] sm:$0xff] %v3304
    %3369 = vst [vmem:[#allocation7 + $0x188] sm:$0xff] %v3305
    %3370 = vst [vmem:[#allocation7 + $0x190] sm:$0xff] %v3306
    %3371 = vst [vmem:[#allocation7 + $0x198] sm:$0xff] %v3307
    %3372 = vst [vmem:[#allocation7 + $0x1a0] sm:$0xff] %v3308
    %3373 = vst [vmem:[#allocation7 + $0x1a8] sm:$0xff] %v3309
    %3374 = vst [vmem:[#allocation7 + $0x1b0] sm:$0xff] %v3310
    %3375 = vst [vmem:[#allocation7 + $0x1b8] sm:$0xff] %v3311
    %3376 = vst [vmem:[#allocation7 + $0x1c0] sm:$0xff] %v3312
    %3377 = vst [vmem:[#allocation7 + $0x1c8] sm:$0xff] %v3313
    %3378 = vst [vmem:[#allocation7 + $0x1d0] sm:$0xff] %v3314
    %3379 = vst [vmem:[#allocation7 + $0x1d8] sm:$0xff] %v3315
    %3380 = vst [vmem:[#allocation7 + $0x1e0] sm:$0xff] %v3316
    %3381 = vst [vmem:[#allocation7 + $0x1e8] sm:$0xff] %v3317
    %3382 = vst [vmem:[#allocation7 + $0x1f0] sm:$0xff] %v3318
    %3383 = vst [vmem:[#allocation7 + $0x1f8] sm:$0xff] %v3319
    %v3384 = vld [vmem:[%s2] sm:$0xff]
    %v3385 = vld [vmem:[%s2 + $0x8] sm:$0xff]
    %v3386 = vld [vmem:[%s2 + $0x10] sm:$0xff]
    %v3387 = vld [vmem:[%s2 + $0x18] sm:$0xff]
    %v3388 = vld [vmem:[%s2 + $0x20] sm:$0xff]
    %v3389 = vld [vmem:[%s2 + $0x28] sm:$0xff]
    %v3390 = vld [vmem:[%s2 + $0x30] sm:$0xff]
    %v3391 = vld [vmem:[%s2 + $0x38] sm:$0xff]
    %v3392 = vld [vmem:[%s2 + $0x40] sm:$0xff]
    %v3393 = vld [vmem:[%s2 + $0x48] sm:$0xff]
    %v3394 = vld [vmem:[%s2 + $0x50] sm:$0xff]
    %v3395 = vld [vmem:[%s2 + $0x58] sm:$0xff]
    %v3396 = vld [vmem:[%s2 + $0x60] sm:$0xff]
    %v3397 = vld [vmem:[%s2 + $0x68] sm:$0xff]
    %v3398 = vld [vmem:[%s2 + $0x70] sm:$0xff]
    %v3399 = vld [vmem:[%s2 + $0x78] sm:$0xff]
    %v3400 = vld [vmem:[%s2 + $0x80] sm:$0xff]
    %v3401 = vld [vmem:[%s2 + $0x88] sm:$0xff]
    %v3402 = vld [vmem:[%s2 + $0x90] sm:$0xff]
    %v3403 = vld [vmem:[%s2 + $0x98] sm:$0xff]
    %v3404 = vld [vmem:[%s2 + $0xa0] sm:$0xff]
    %v3405 = vld [vmem:[%s2 + $0xa8] sm:$0xff]
    %v3406 = vld [vmem:[%s2 + $0xb0] sm:$0xff]
    %v3407 = vld [vmem:[%s2 + $0xb8] sm:$0xff]
    %v3408 = vld [vmem:[%s2 + $0xc0] sm:$0xff]
    %v3409 = vld [vmem:[%s2 + $0xc8] sm:$0xff]
    %v3410 = vld [vmem:[%s2 + $0xd0] sm:$0xff]
    %v3411 = vld [vmem:[%s2 + $0xd8] sm:$0xff]
    %v3412 = vld [vmem:[%s2 + $0xe0] sm:$0xff]
    %v3413 = vld [vmem:[%s2 + $0xe8] sm:$0xff]
    %v3414 = vld [vmem:[%s2 + $0xf0] sm:$0xff]
    %v3415 = vld [vmem:[%s2 + $0xf8] sm:$0xff]
    %v3416 = vunpack.c.0.s8 %v3384
    %v3417 = vunpack.c.0.s8 %v3385
    %v3418 = vunpack.c.0.s8 %v3386
    %v3419 = vunpack.c.0.s8 %v3387
    %v3420 = vunpack.c.1.s8 %v3384
    %v3421 = vunpack.c.1.s8 %v3385
    %v3422 = vunpack.c.1.s8 %v3386
    %v3423 = vunpack.c.1.s8 %v3387
    %v3424 = vunpack.c.2.s8 %v3384
    %v3425 = vunpack.c.2.s8 %v3385
    %v3426 = vunpack.c.2.s8 %v3386
    %v3427 = vunpack.c.2.s8 %v3387
    %v3428 = vunpack.c.3.s8 %v3384
    %v3429 = vunpack.c.3.s8 %v3385
    %v3430 = vunpack.c.3.s8 %v3386
    %v3431 = vunpack.c.3.s8 %v3387
    %v3432 = vunpack.c.0.s8 %v3388
    %v3433 = vunpack.c.0.s8 %v3389
    %v3434 = vunpack.c.0.s8 %v3390
    %v3435 = vunpack.c.0.s8 %v3391
    %v3436 = vunpack.c.1.s8 %v3388
    %v3437 = vunpack.c.1.s8 %v3389
    %v3438 = vunpack.c.1.s8 %v3390
    %v3439 = vunpack.c.1.s8 %v3391
    %v3440 = vunpack.c.2.s8 %v3388
    %v3441 = vunpack.c.2.s8 %v3389
    %v3442 = vunpack.c.2.s8 %v3390
    %v3443 = vunpack.c.2.s8 %v3391
    %v3444 = vunpack.c.3.s8 %v3388
    %v3445 = vunpack.c.3.s8 %v3389
    %v3446 = vunpack.c.3.s8 %v3390
    %v3447 = vunpack.c.3.s8 %v3391
    %v3448 = vunpack.c.0.s8 %v3392
    %v3449 = vunpack.c.0.s8 %v3393
    %v3450 = vunpack.c.0.s8 %v3394
    %v3451 = vunpack.c.0.s8 %v3395
    %v3452 = vunpack.c.1.s8 %v3392
    %v3453 = vunpack.c.1.s8 %v3393
    %v3454 = vunpack.c.1.s8 %v3394
    %v3455 = vunpack.c.1.s8 %v3395
    %v3456 = vunpack.c.2.s8 %v3392
    %v3457 = vunpack.c.2.s8 %v3393
    %v3458 = vunpack.c.2.s8 %v3394
    %v3459 = vunpack.c.2.s8 %v3395
    %v3460 = vunpack.c.3.s8 %v3392
    %v3461 = vunpack.c.3.s8 %v3393
    %v3462 = vunpack.c.3.s8 %v3394
    %v3463 = vunpack.c.3.s8 %v3395
    %v3464 = vunpack.c.0.s8 %v3396
    %v3465 = vunpack.c.0.s8 %v3397
    %v3466 = vunpack.c.0.s8 %v3398
    %v3467 = vunpack.c.0.s8 %v3399
    %v3468 = vunpack.c.1.s8 %v3396
    %v3469 = vunpack.c.1.s8 %v3397
    %v3470 = vunpack.c.1.s8 %v3398
    %v3471 = vunpack.c.1.s8 %v3399
    %v3472 = vunpack.c.2.s8 %v3396
    %v3473 = vunpack.c.2.s8 %v3397
    %v3474 = vunpack.c.2.s8 %v3398
    %v3475 = vunpack.c.2.s8 %v3399
    %v3476 = vunpack.c.3.s8 %v3396
    %v3477 = vunpack.c.3.s8 %v3397
    %v3478 = vunpack.c.3.s8 %v3398
    %v3479 = vunpack.c.3.s8 %v3399
    %v3480 = vunpack.c.0.s8 %v3400
    %v3481 = vunpack.c.0.s8 %v3401
    %v3482 = vunpack.c.0.s8 %v3402
    %v3483 = vunpack.c.0.s8 %v3403
    %v3484 = vunpack.c.1.s8 %v3400
    %v3485 = vunpack.c.1.s8 %v3401
    %v3486 = vunpack.c.1.s8 %v3402
    %v3487 = vunpack.c.1.s8 %v3403
    %v3488 = vunpack.c.2.s8 %v3400
    %v3489 = vunpack.c.2.s8 %v3401
    %v3490 = vunpack.c.2.s8 %v3402
    %v3491 = vunpack.c.2.s8 %v3403
    %v3492 = vunpack.c.3.s8 %v3400
    %v3493 = vunpack.c.3.s8 %v3401
    %v3494 = vunpack.c.3.s8 %v3402
    %v3495 = vunpack.c.3.s8 %v3403
    %v3496 = vunpack.c.0.s8 %v3404
    %v3497 = vunpack.c.0.s8 %v3405
    %v3498 = vunpack.c.0.s8 %v3406
    %v3499 = vunpack.c.0.s8 %v3407
    %v3500 = vunpack.c.1.s8 %v3404
    %v3501 = vunpack.c.1.s8 %v3405
    %v3502 = vunpack.c.1.s8 %v3406
    %v3503 = vunpack.c.1.s8 %v3407
    %v3504 = vunpack.c.2.s8 %v3404
    %v3505 = vunpack.c.2.s8 %v3405
    %v3506 = vunpack.c.2.s8 %v3406
    %v3507 = vunpack.c.2.s8 %v3407
    %v3508 = vunpack.c.3.s8 %v3404
    %v3509 = vunpack.c.3.s8 %v3405
    %v3510 = vunpack.c.3.s8 %v3406
    %v3511 = vunpack.c.3.s8 %v3407
    %v3512 = vunpack.c.0.s8 %v3408
    %v3513 = vunpack.c.0.s8 %v3409
    %v3514 = vunpack.c.0.s8 %v3410
    %v3515 = vunpack.c.0.s8 %v3411
    %v3516 = vunpack.c.1.s8 %v3408
    %v3517 = vunpack.c.1.s8 %v3409
    %v3518 = vunpack.c.1.s8 %v3410
    %v3519 = vunpack.c.1.s8 %v3411
    %v3520 = vunpack.c.2.s8 %v3408
    %v3521 = vunpack.c.2.s8 %v3409
    %v3522 = vunpack.c.2.s8 %v3410
    %v3523 = vunpack.c.2.s8 %v3411
    %v3524 = vunpack.c.3.s8 %v3408
    %v3525 = vunpack.c.3.s8 %v3409
    %v3526 = vunpack.c.3.s8 %v3410
    %v3527 = vunpack.c.3.s8 %v3411
    %v3528 = vunpack.c.0.s8 %v3412
    %v3529 = vunpack.c.0.s8 %v3413
    %v3530 = vunpack.c.0.s8 %v3414
    %v3531 = vunpack.c.0.s8 %v3415
    %v3532 = vunpack.c.1.s8 %v3412
    %v3533 = vunpack.c.1.s8 %v3413
    %v3534 = vunpack.c.1.s8 %v3414
    %v3535 = vunpack.c.1.s8 %v3415
    %v3536 = vunpack.c.2.s8 %v3412
    %v3537 = vunpack.c.2.s8 %v3413
    %v3538 = vunpack.c.2.s8 %v3414
    %v3539 = vunpack.c.2.s8 %v3415
    %v3540 = vunpack.c.3.s8 %v3412
    %v3541 = vunpack.c.3.s8 %v3413
    %v3542 = vunpack.c.3.s8 %v3414
    %v3543 = vunpack.c.3.s8 %v3415
    %v3544 = vcvt.s32.f32 %v3416
    %v3545 = vcvt.s32.f32 %v3417
    %v3546 = vcvt.s32.f32 %v3418
    %v3547 = vcvt.s32.f32 %v3419
    %v3548 = vcvt.s32.f32 %v3420
    %v3549 = vcvt.s32.f32 %v3421
    %v3550 = vcvt.s32.f32 %v3422
    %v3551 = vcvt.s32.f32 %v3423
    %v3552 = vcvt.s32.f32 %v3424
    %v3553 = vcvt.s32.f32 %v3425
    %v3554 = vcvt.s32.f32 %v3426
    %v3555 = vcvt.s32.f32 %v3427
    %v3556 = vcvt.s32.f32 %v3428
    %v3557 = vcvt.s32.f32 %v3429
    %v3558 = vcvt.s32.f32 %v3430
    %v3559 = vcvt.s32.f32 %v3431
    %v3560 = vcvt.s32.f32 %v3432
    %v3561 = vcvt.s32.f32 %v3433
    %v3562 = vcvt.s32.f32 %v3434
    %v3563 = vcvt.s32.f32 %v3435
    %v3564 = vcvt.s32.f32 %v3436
    %v3565 = vcvt.s32.f32 %v3437
    %v3566 = vcvt.s32.f32 %v3438
    %v3567 = vcvt.s32.f32 %v3439
    %v3568 = vcvt.s32.f32 %v3440
    %v3569 = vcvt.s32.f32 %v3441
    %v3570 = vcvt.s32.f32 %v3442
    %v3571 = vcvt.s32.f32 %v3443
    %v3572 = vcvt.s32.f32 %v3444
    %v3573 = vcvt.s32.f32 %v3445
    %v3574 = vcvt.s32.f32 %v3446
    %v3575 = vcvt.s32.f32 %v3447
    %v3576 = vcvt.s32.f32 %v3448
    %v3577 = vcvt.s32.f32 %v3449
    %v3578 = vcvt.s32.f32 %v3450
    %v3579 = vcvt.s32.f32 %v3451
    %v3580 = vcvt.s32.f32 %v3452
    %v3581 = vcvt.s32.f32 %v3453
    %v3582 = vcvt.s32.f32 %v3454
    %v3583 = vcvt.s32.f32 %v3455
    %v3584 = vcvt.s32.f32 %v3456
    %v3585 = vcvt.s32.f32 %v3457
    %v3586 = vcvt.s32.f32 %v3458
    %v3587 = vcvt.s32.f32 %v3459
    %v3588 = vcvt.s32.f32 %v3460
    %v3589 = vcvt.s32.f32 %v3461
    %v3590 = vcvt.s32.f32 %v3462
    %v3591 = vcvt.s32.f32 %v3463
    %v3592 = vcvt.s32.f32 %v3464
    %v3593 = vcvt.s32.f32 %v3465
    %v3594 = vcvt.s32.f32 %v3466
    %v3595 = vcvt.s32.f32 %v3467
    %v3596 = vcvt.s32.f32 %v3468
    %v3597 = vcvt.s32.f32 %v3469
    %v3598 = vcvt.s32.f32 %v3470
    %v3599 = vcvt.s32.f32 %v3471
    %v3600 = vcvt.s32.f32 %v3472
    %v3601 = vcvt.s32.f32 %v3473
    %v3602 = vcvt.s32.f32 %v3474
    %v3603 = vcvt.s32.f32 %v3475
    %v3604 = vcvt.s32.f32 %v3476
    %v3605 = vcvt.s32.f32 %v3477
    %v3606 = vcvt.s32.f32 %v3478
    %v3607 = vcvt.s32.f32 %v3479
    %v3608 = vcvt.s32.f32 %v3480
    %v3609 = vcvt.s32.f32 %v3481
    %v3610 = vcvt.s32.f32 %v3482
    %v3611 = vcvt.s32.f32 %v3483
    %v3612 = vcvt.s32.f32 %v3484
    %v3613 = vcvt.s32.f32 %v3485
    %v3614 = vcvt.s32.f32 %v3486
    %v3615 = vcvt.s32.f32 %v3487
    %v3616 = vcvt.s32.f32 %v3488
    %v3617 = vcvt.s32.f32 %v3489
    %v3618 = vcvt.s32.f32 %v3490
    %v3619 = vcvt.s32.f32 %v3491
    %v3620 = vcvt.s32.f32 %v3492
    %v3621 = vcvt.s32.f32 %v3493
    %v3622 = vcvt.s32.f32 %v3494
    %v3623 = vcvt.s32.f32 %v3495
    %v3624 = vcvt.s32.f32 %v3496
    %v3625 = vcvt.s32.f32 %v3497
    %v3626 = vcvt.s32.f32 %v3498
    %v3627 = vcvt.s32.f32 %v3499
    %v3628 = vcvt.s32.f32 %v3500
    %v3629 = vcvt.s32.f32 %v3501
    %v3630 = vcvt.s32.f32 %v3502
    %v3631 = vcvt.s32.f32 %v3503
    %v3632 = vcvt.s32.f32 %v3504
    %v3633 = vcvt.s32.f32 %v3505
    %v3634 = vcvt.s32.f32 %v3506
    %v3635 = vcvt.s32.f32 %v3507
    %v3636 = vcvt.s32.f32 %v3508
    %v3637 = vcvt.s32.f32 %v3509
    %v3638 = vcvt.s32.f32 %v3510
    %v3639 = vcvt.s32.f32 %v3511
    %v3640 = vcvt.s32.f32 %v3512
    %v3641 = vcvt.s32.f32 %v3513
    %v3642 = vcvt.s32.f32 %v3514
    %v3643 = vcvt.s32.f32 %v3515
    %v3644 = vcvt.s32.f32 %v3516
    %v3645 = vcvt.s32.f32 %v3517
    %v3646 = vcvt.s32.f32 %v3518
    %v3647 = vcvt.s32.f32 %v3519
    %v3648 = vcvt.s32.f32 %v3520
    %v3649 = vcvt.s32.f32 %v3521
    %v3650 = vcvt.s32.f32 %v3522
    %v3651 = vcvt.s32.f32 %v3523
    %v3652 = vcvt.s32.f32 %v3524
    %v3653 = vcvt.s32.f32 %v3525
    %v3654 = vcvt.s32.f32 %v3526
    %v3655 = vcvt.s32.f32 %v3527
    %v3656 = vcvt.s32.f32 %v3528
    %v3657 = vcvt.s32.f32 %v3529
    %v3658 = vcvt.s32.f32 %v3530
    %v3659 = vcvt.s32.f32 %v3531
    %v3660 = vcvt.s32.f32 %v3532
    %v3661 = vcvt.s32.f32 %v3533
    %v3662 = vcvt.s32.f32 %v3534
    %v3663 = vcvt.s32.f32 %v3535
    %v3664 = vcvt.s32.f32 %v3536
    %v3665 = vcvt.s32.f32 %v3537
    %v3666 = vcvt.s32.f32 %v3538
    %v3667 = vcvt.s32.f32 %v3539
    %v3668 = vcvt.s32.f32 %v3540
    %v3669 = vcvt.s32.f32 %v3541
    %v3670 = vcvt.s32.f32 %v3542
    %v3671 = vcvt.s32.f32 %v3543
    %3672 = vmatprep.subr.mxu0 0.0
    %3673 = vmatpush1.msra.mxu0 %v3271
    %3674 = vmatprep.subr.mxu0 0.0
    %3675 = vmatpush1.msra.mxu0 %v3270
    %3676 = vmatprep.subr.mxu0 0.0
    %3677 = vmatpush1.msra.mxu0 %v3269
    %3678 = vmatprep.subr.mxu0 0.0
    %3679 = vmatpush1.msra.mxu0 %v3268
    %3680 = vmatprep.subr.mxu0 0.0
    %3681 = vmatpush1.msra.mxu0 %v3267
    %3682 = vmatprep.subr.mxu0 0.0
    %3683 = vmatpush1.msra.mxu0 %v3266
    %3684 = vmatprep.subr.mxu0 0.0
    %3685 = vmatpush1.msra.mxu0 %v3265
    %3686 = vmatprep.subr.mxu0 0.0
    %3687 = vmatpush1.msra.mxu0 %v3264
    %3688 = vmatprep.subr.mxu0 0.0
    %3689 = vmatpush1.msra.mxu0 %v3263
    %3690 = vmatprep.subr.mxu0 0.0
    %3691 = vmatpush1.msra.mxu0 %v3262
    %3692 = vmatprep.subr.mxu0 0.0
    %3693 = vmatpush1.msra.mxu0 %v3261
    %3694 = vmatprep.subr.mxu0 0.0
    %3695 = vmatpush1.msra.mxu0 %v3260
    %3696 = vmatprep.subr.mxu0 0.0
    %3697 = vmatpush1.msra.mxu0 %v3259
    %3698 = vmatprep.subr.mxu0 0.0
    %3699 = vmatpush1.msra.mxu0 %v3258
    %3700 = vmatprep.subr.mxu0 0.0
    %3701 = vmatpush1.msra.mxu0 %v3257
    %3702 = vmatprep.subr.mxu0 0.0
    %3703 = vmatpush1.msra.mxu0 %v3256
    %3704 = vmatprep.subr.mxu0 0.0
    %3705 = vmatpush2.msra.mxu0 %v3287
    %3706 = vmatprep.subr.mxu0 0.0
    %3707 = vmatpush2.msra.mxu0 %v3286
    %3708 = vmatprep.subr.mxu0 0.0
    %3709 = vmatpush2.msra.mxu0 %v3285
    %3710 = vmatprep.subr.mxu0 0.0
    %3711 = vmatpush2.msra.mxu0 %v3284
    %3712 = vmatprep.subr.mxu0 0.0
    %3713 = vmatpush2.msra.mxu0 %v3283
    %3714 = vmatprep.subr.mxu0 0.0
    %3715 = vmatpush2.msra.mxu0 %v3282
    %3716 = vmatprep.subr.mxu0 0.0
    %3717 = vmatpush2.msra.mxu0 %v3281
    %3718 = vmatprep.subr.mxu0 0.0
    %3719 = vmatpush2.msra.mxu0 %v3280
    %3720 = vmatprep.subr.mxu0 0.0
    %3721 = vmatpush2.msra.mxu0 %v3279
    %3722 = vmatprep.subr.mxu0 0.0
    %3723 = vmatpush2.msra.mxu0 %v3278
    %3724 = vmatprep.subr.mxu0 0.0
    %3725 = vmatpush2.msra.mxu0 %v3277
    %3726 = vmatprep.subr.mxu0 0.0
    %3727 = vmatpush2.msra.mxu0 %v3276
    %3728 = vmatprep.subr.mxu0 0.0
    %3729 = vmatpush2.msra.mxu0 %v3275
    %3730 = vmatprep.subr.mxu0 0.0
    %3731 = vmatpush2.msra.mxu0 %v3274
    %3732 = vmatprep.subr.mxu0 0.0
    %3733 = vmatpush2.msra.mxu0 %v3273
    %3734 = vmatprep.subr.mxu0 0.0
    %3735 = vmatpush2.msra.mxu0 %v3272
    %3736 = vmatprep.mubr.f32.mxu0 %v3545
    %3737 = vmatmul.mubr.f32.gmra.mxu0 %v3544
    %v3738 = vpop.f32.mrf.mxu0
    %v3739 = vadd.f32 0.0, %v3738
    %v3740 = vpop.f32.mrf.mxu0
    %3741 = vmatprep.mubr.f32.mxu0 %v3549
    %3742 = vmatmul.mubr.f32.gmra.mxu0 %v3548
    %v3743 = vpop.f32.mrf.mxu0
    %v3744 = vadd.f32 0.0, %v3743
    %v3745 = vpop.f32.mrf.mxu0
    %3746 = vmatprep.mubr.f32.mxu0 %v3553
    %3747 = vmatmul.mubr.f32.gmra.mxu0 %v3552
    %v3748 = vpop.f32.mrf.mxu0
    %v3749 = vadd.f32 0.0, %v3748
    %v3750 = vpop.f32.mrf.mxu0
    %3751 = vmatprep.mubr.f32.mxu0 %v3557
    %3752 = vmatmul.mubr.f32.gmra.mxu0 %v3556
    %v3753 = vpop.f32.mrf.mxu0
    %v3754 = vadd.f32 0.0, %v3753
    %v3755 = vpop.f32.mrf.mxu0
    %3756 = vmatprep.mubr.f32.mxu0 %v3561
    %3757 = vmatmul.mubr.f32.gmra.mxu0 %v3560
    %v3758 = vpop.f32.mrf.mxu0
    %v3759 = vadd.f32 0.0, %v3758
    %v3760 = vpop.f32.mrf.mxu0
    %3761 = vmatprep.mubr.f32.mxu0 %v3565
    %3762 = vmatmul.mubr.f32.gmra.mxu0 %v3564
    %v3763 = vpop.f32.mrf.mxu0
    %v3764 = vadd.f32 0.0, %v3763
    %v3765 = vpop.f32.mrf.mxu0
    %3766 = vmatprep.mubr.f32.mxu0 %v3569
    %3767 = vmatmul.mubr.f32.gmra.mxu0 %v3568
    %v3768 = vpop.f32.mrf.mxu0
    %v3769 = vadd.f32 0.0, %v3768
    %v3770 = vpop.f32.mrf.mxu0
    %3771 = vmatprep.mubr.f32.mxu0 %v3573
    %3772 = vmatmul.mubr.f32.gmra.mxu0 %v3572
    %v3773 = vpop.f32.mrf.mxu0
    %v3774 = vadd.f32 0.0, %v3773
    %v3775 = vpop.f32.mrf.mxu0
    %3776 = vmatprep.mubr.f32.mxu0 %v3577
    %3777 = vmatmul.mubr.f32.gmra.mxu0 %v3576
    %v3778 = vpop.f32.mrf.mxu0
    %v3779 = vadd.f32 0.0, %v3778
    %v3780 = vpop.f32.mrf.mxu0
    %3781 = vmatprep.mubr.f32.mxu0 %v3581
    %3782 = vmatmul.mubr.f32.gmra.mxu0 %v3580
    %v3783 = vpop.f32.mrf.mxu0
    %v3784 = vadd.f32 0.0, %v3783
    %v3785 = vpop.f32.mrf.mxu0
    %3786 = vmatprep.mubr.f32.mxu0 %v3585
    %3787 = vmatmul.mubr.f32.gmra.mxu0 %v3584
    %v3788 = vpop.f32.mrf.mxu0
    %v3789 = vadd.f32 0.0, %v3788
    %v3790 = vpop.f32.mrf.mxu0
    %3791 = vmatprep.mubr.f32.mxu0 %v3589
    %3792 = vmatmul.mubr.f32.gmra.mxu0 %v3588
    %v3793 = vpop.f32.mrf.mxu0
    %v3794 = vadd.f32 0.0, %v3793
    %v3795 = vpop.f32.mrf.mxu0
    %3796 = vmatprep.mubr.f32.mxu0 %v3593
    %3797 = vmatmul.mubr.f32.gmra.mxu0 %v3592
    %v3798 = vpop.f32.mrf.mxu0
    %v3799 = vadd.f32 0.0, %v3798
    %v3800 = vpop.f32.mrf.mxu0
    %3801 = vmatprep.mubr.f32.mxu0 %v3597
    %3802 = vmatmul.mubr.f32.gmra.mxu0 %v3596
    %v3803 = vpop.f32.mrf.mxu0
    %v3804 = vadd.f32 0.0, %v3803
    %v3805 = vpop.f32.mrf.mxu0
    %3806 = vmatprep.mubr.f32.mxu0 %v3601
    %3807 = vmatmul.mubr.f32.gmra.mxu0 %v3600
    %v3808 = vpop.f32.mrf.mxu0
    %v3809 = vadd.f32 0.0, %v3808
    %v3810 = vpop.f32.mrf.mxu0
    %3811 = vmatprep.mubr.f32.mxu0 %v3605
    %3812 = vmatmul.mubr.f32.gmra.mxu0 %v3604
    %v3813 = vpop.f32.mrf.mxu0
    %v3814 = vadd.f32 0.0, %v3813
    %v3815 = vpop.f32.mrf.mxu0
    %3816 = vmatprep.mubr.f32.mxu0 %v3609
    %3817 = vmatmul.mubr.f32.gmra.mxu0 %v3608
    %v3818 = vpop.f32.mrf.mxu0
    %v3819 = vadd.f32 0.0, %v3818
    %v3820 = vpop.f32.mrf.mxu0
    %3821 = vmatprep.mubr.f32.mxu0 %v3613
    %3822 = vmatmul.mubr.f32.gmra.mxu0 %v3612
    %v3823 = vpop.f32.mrf.mxu0
    %v3824 = vadd.f32 0.0, %v3823
    %v3825 = vpop.f32.mrf.mxu0
    %3826 = vmatprep.mubr.f32.mxu0 %v3617
    %3827 = vmatmul.mubr.f32.gmra.mxu0 %v3616
    %v3828 = vpop.f32.mrf.mxu0
    %v3829 = vadd.f32 0.0, %v3828
    %v3830 = vpop.f32.mrf.mxu0
    %3831 = vmatprep.mubr.f32.mxu0 %v3621
    %3832 = vmatmul.mubr.f32.gmra.mxu0 %v3620
    %v3833 = vpop.f32.mrf.mxu0
    %v3834 = vadd.f32 0.0, %v3833
    %v3835 = vpop.f32.mrf.mxu0
    %3836 = vmatprep.mubr.f32.mxu0 %v3625
    %3837 = vmatmul.mubr.f32.gmra.mxu0 %v3624
    %v3838 = vpop.f32.mrf.mxu0
    %v3839 = vadd.f32 0.0, %v3838
    %v3840 = vpop.f32.mrf.mxu0
    %3841 = vmatprep.mubr.f32.mxu0 %v3629
    %3842 = vmatmul.mubr.f32.gmra.mxu0 %v3628
    %v3843 = vpop.f32.mrf.mxu0
    %v3844 = vadd.f32 0.0, %v3843
    %v3845 = vpop.f32.mrf.mxu0
    %3846 = vmatprep.mubr.f32.mxu0 %v3633
    %3847 = vmatmul.mubr.f32.gmra.mxu0 %v3632
    %v3848 = vpop.f32.mrf.mxu0
    %v3849 = vadd.f32 0.0, %v3848
    %v3850 = vpop.f32.mrf.mxu0
    %3851 = vmatprep.mubr.f32.mxu0 %v3637
    %3852 = vmatmul.mubr.f32.gmra.mxu0 %v3636
    %v3853 = vpop.f32.mrf.mxu0
    %v3854 = vadd.f32 0.0, %v3853
    %v3855 = vpop.f32.mrf.mxu0
    %3856 = vmatprep.mubr.f32.mxu0 %v3641
    %3857 = vmatmul.mubr.f32.gmra.mxu0 %v3640
    %v3858 = vpop.f32.mrf.mxu0
    %v3859 = vadd.f32 0.0, %v3858
    %v3860 = vpop.f32.mrf.mxu0
    %3861 = vmatprep.mubr.f32.mxu0 %v3645
    %3862 = vmatmul.mubr.f32.gmra.mxu0 %v3644
    %v3863 = vpop.f32.mrf.mxu0
    %v3864 = vadd.f32 0.0, %v3863
    %v3865 = vpop.f32.mrf.mxu0
    %3866 = vmatprep.mubr.f32.mxu0 %v3649
    %3867 = vmatmul.mubr.f32.gmra.mxu0 %v3648
    %v3868 = vpop.f32.mrf.mxu0
    %v3869 = vadd.f32 0.0, %v3868
    %v3870 = vpop.f32.mrf.mxu0
    %3871 = vmatprep.mubr.f32.mxu0 %v3653
    %3872 = vmatmul.mubr.f32.gmra.mxu0 %v3652
    %v3873 = vpop.f32.mrf.mxu0
    %v3874 = vadd.f32 0.0, %v3873
    %v3875 = vpop.f32.mrf.mxu0
    %3876 = vmatprep.mubr.f32.mxu0 %v3657
    %3877 = vmatmul.mubr.f32.gmra.mxu0 %v3656
    %v3878 = vpop.f32.mrf.mxu0
    %v3879 = vadd.f32 0.0, %v3878
    %v3880 = vpop.f32.mrf.mxu0
    %3881 = vmatprep.mubr.f32.mxu0 %v3661
    %3882 = vmatmul.mubr.f32.gmra.mxu0 %v3660
    %v3883 = vpop.f32.mrf.mxu0
    %v3884 = vadd.f32 0.0, %v3883
    %v3885 = vpop.f32.mrf.mxu0
    %3886 = vmatprep.mubr.f32.mxu0 %v3665
    %3887 = vmatmul.mubr.f32.gmra.mxu0 %v3664
    %v3888 = vpop.f32.mrf.mxu0
    %v3889 = vadd.f32 0.0, %v3888
    %v3890 = vpop.f32.mrf.mxu0
    %3891 = vmatprep.mubr.f32.mxu0 %v3669
    %3892 = vmatmul.mubr.f32.gmra.mxu0 %v3668
    %v3893 = vpop.f32.mrf.mxu0
    %v3894 = vadd.f32 0.0, %v3893
    %v3895 = vpop.f32.mrf.mxu0
    %3896 = vdwg.mxu0
    %3897 = vmatprep.subr.mxu0 0.0
    %3898 = vmatpush1.msra.mxu0 %v3303
    %3899 = vmatprep.subr.mxu0 0.0
    %3900 = vmatpush1.msra.mxu0 %v3302
    %3901 = vmatprep.subr.mxu0 0.0
    %3902 = vmatpush1.msra.mxu0 %v3301
    %3903 = vmatprep.subr.mxu0 0.0
    %3904 = vmatpush1.msra.mxu0 %v3300
    %3905 = vmatprep.subr.mxu0 0.0
    %3906 = vmatpush1.msra.mxu0 %v3299
    %3907 = vmatprep.subr.mxu0 0.0
    %3908 = vmatpush1.msra.mxu0 %v3298
    %3909 = vmatprep.subr.mxu0 0.0
    %3910 = vmatpush1.msra.mxu0 %v3297
    %3911 = vmatprep.subr.mxu0 0.0
    %3912 = vmatpush1.msra.mxu0 %v3296
    %3913 = vmatprep.subr.mxu0 0.0
    %3914 = vmatpush1.msra.mxu0 %v3295
    %3915 = vmatprep.subr.mxu0 0.0
    %3916 = vmatpush1.msra.mxu0 %v3294
    %3917 = vmatprep.subr.mxu0 0.0
    %3918 = vmatpush1.msra.mxu0 %v3293
    %3919 = vmatprep.subr.mxu0 0.0
    %3920 = vmatpush1.msra.mxu0 %v3292
    %3921 = vmatprep.subr.mxu0 0.0
    %3922 = vmatpush1.msra.mxu0 %v3291
    %3923 = vmatprep.subr.mxu0 0.0
    %3924 = vmatpush1.msra.mxu0 %v3290
    %3925 = vmatprep.subr.mxu0 0.0
    %3926 = vmatpush1.msra.mxu0 %v3289
    %3927 = vmatprep.subr.mxu0 0.0
    %3928 = vmatpush1.msra.mxu0 %v3288
    %3929 = vmatprep.subr.mxu0 0.0
    %3930 = vmatpush2.msra.mxu0 %v3319
    %3931 = vmatprep.subr.mxu0 0.0
    %3932 = vmatpush2.msra.mxu0 %v3318
    %3933 = vmatprep.subr.mxu0 0.0
    %3934 = vmatpush2.msra.mxu0 %v3317
    %3935 = vmatprep.subr.mxu0 0.0
    %3936 = vmatpush2.msra.mxu0 %v3316
    %3937 = vmatprep.subr.mxu0 0.0
    %3938 = vmatpush2.msra.mxu0 %v3315
    %3939 = vmatprep.subr.mxu0 0.0
    %3940 = vmatpush2.msra.mxu0 %v3314
    %3941 = vmatprep.subr.mxu0 0.0
    %3942 = vmatpush2.msra.mxu0 %v3313
    %3943 = vmatprep.subr.mxu0 0.0
    %3944 = vmatpush2.msra.mxu0 %v3312
    %3945 = vmatprep.subr.mxu0 0.0
    %3946 = vmatpush2.msra.mxu0 %v3311
    %3947 = vmatprep.subr.mxu0 0.0
    %3948 = vmatpush2.msra.mxu0 %v3310
    %3949 = vmatprep.subr.mxu0 0.0
    %3950 = vmatpush2.msra.mxu0 %v3309
    %3951 = vmatprep.subr.mxu0 0.0
    %3952 = vmatpush2.msra.mxu0 %v3308
    %3953 = vmatprep.subr.mxu0 0.0
    %3954 = vmatpush2.msra.mxu0 %v3307
    %3955 = vmatprep.subr.mxu0 0.0
    %3956 = vmatpush2.msra.mxu0 %v3306
    %3957 = vmatprep.subr.mxu0 0.0
    %3958 = vmatpush2.msra.mxu0 %v3305
    %3959 = vmatprep.subr.mxu0 0.0
    %3960 = vmatpush2.msra.mxu0 %v3304
    %3961 = vmatprep.mubr.f32.mxu0 %v3547
    %3962 = vmatmul.mubr.f32.gmra.mxu0 %v3546
    %v3963 = vpop.f32.mrf.mxu0
    %v3964 = vadd.f32 %v3739, %v3963
    %v3965 = vpop.f32.mrf.mxu0
    %3966 = vmatprep.mubr.f32.mxu0 %v3551
    %3967 = vmatmul.mubr.f32.gmra.mxu0 %v3550
    %v3968 = vpop.f32.mrf.mxu0
    %v3969 = vadd.f32 %v3744, %v3968
    %v3970 = vpop.f32.mrf.mxu0
    %3971 = vmatprep.mubr.f32.mxu0 %v3555
    %3972 = vmatmul.mubr.f32.gmra.mxu0 %v3554
    %v3973 = vpop.f32.mrf.mxu0
    %v3974 = vadd.f32 %v3749, %v3973
    %v3975 = vpop.f32.mrf.mxu0
    %3976 = vmatprep.mubr.f32.mxu0 %v3559
    %3977 = vmatmul.mubr.f32.gmra.mxu0 %v3558
    %v3978 = vpop.f32.mrf.mxu0
    %v3979 = vadd.f32 %v3754, %v3978
    %v3980 = vpop.f32.mrf.mxu0
    %3981 = vmatprep.mubr.f32.mxu0 %v3563
    %3982 = vmatmul.mubr.f32.gmra.mxu0 %v3562
    %v3983 = vpop.f32.mrf.mxu0
    %v3984 = vadd.f32 %v3759, %v3983
    %v3985 = vpop.f32.mrf.mxu0
    %3986 = vmatprep.mubr.f32.mxu0 %v3567
    %3987 = vmatmul.mubr.f32.gmra.mxu0 %v3566
    %v3988 = vpop.f32.mrf.mxu0
    %v3989 = vadd.f32 %v3764, %v3988
    %v3990 = vpop.f32.mrf.mxu0
    %3991 = vmatprep.mubr.f32.mxu0 %v3571
    %3992 = vmatmul.mubr.f32.gmra.mxu0 %v3570
    %v3993 = vpop.f32.mrf.mxu0
    %v3994 = vadd.f32 %v3769, %v3993
    %v3995 = vpop.f32.mrf.mxu0
    %3996 = vmatprep.mubr.f32.mxu0 %v3575
    %3997 = vmatmul.mubr.f32.gmra.mxu0 %v3574
    %v3998 = vpop.f32.mrf.mxu0
    %v3999 = vadd.f32 %v3774, %v3998
    %v4000 = vpop.f32.mrf.mxu0
    %4001 = vmatprep.mubr.f32.mxu0 %v3579
    %4002 = vmatmul.mubr.f32.gmra.mxu0 %v3578
    %v4003 = vpop.f32.mrf.mxu0
    %v4004 = vadd.f32 %v3779, %v4003
    %v4005 = vpop.f32.mrf.mxu0
    %4006 = vmatprep.mubr.f32.mxu0 %v3583
    %4007 = vmatmul.mubr.f32.gmra.mxu0 %v3582
    %v4008 = vpop.f32.mrf.mxu0
    %v4009 = vadd.f32 %v3784, %v4008
    %v4010 = vpop.f32.mrf.mxu0
    %4011 = vmatprep.mubr.f32.mxu0 %v3587
    %4012 = vmatmul.mubr.f32.gmra.mxu0 %v3586
    %v4013 = vpop.f32.mrf.mxu0
    %v4014 = vadd.f32 %v3789, %v4013
    %v4015 = vpop.f32.mrf.mxu0
    %4016 = vmatprep.mubr.f32.mxu0 %v3591
    %4017 = vmatmul.mubr.f32.gmra.mxu0 %v3590
    %v4018 = vpop.f32.mrf.mxu0
    %v4019 = vadd.f32 %v3794, %v4018
    %v4020 = vpop.f32.mrf.mxu0
    %4021 = vmatprep.mubr.f32.mxu0 %v3595
    %4022 = vmatmul.mubr.f32.gmra.mxu0 %v3594
    %v4023 = vpop.f32.mrf.mxu0
    %v4024 = vadd.f32 %v3799, %v4023
    %v4025 = vpop.f32.mrf.mxu0
    %4026 = vmatprep.mubr.f32.mxu0 %v3599
    %4027 = vmatmul.mubr.f32.gmra.mxu0 %v3598
    %v4028 = vpop.f32.mrf.mxu0
    %v4029 = vadd.f32 %v3804, %v4028
    %v4030 = vpop.f32.mrf.mxu0
    %4031 = vmatprep.mubr.f32.mxu0 %v3603
    %4032 = vmatmul.mubr.f32.gmra.mxu0 %v3602
    %v4033 = vpop.f32.mrf.mxu0
    %v4034 = vadd.f32 %v3809, %v4033
    %v4035 = vpop.f32.mrf.mxu0
    %4036 = vmatprep.mubr.f32.mxu0 %v3607
    %4037 = vmatmul.mubr.f32.gmra.mxu0 %v3606
    %v4038 = vpop.f32.mrf.mxu0
    %v4039 = vadd.f32 %v3814, %v4038
    %v4040 = vpop.f32.mrf.mxu0
    %4041 = vmatprep.mubr.f32.mxu0 %v3611
    %4042 = vmatmul.mubr.f32.gmra.mxu0 %v3610
    %v4043 = vpop.f32.mrf.mxu0
    %v4044 = vadd.f32 %v3819, %v4043
    %v4045 = vpop.f32.mrf.mxu0
    %4046 = vmatprep.mubr.f32.mxu0 %v3615
    %4047 = vmatmul.mubr.f32.gmra.mxu0 %v3614
    %v4048 = vpop.f32.mrf.mxu0
    %v4049 = vadd.f32 %v3824, %v4048
    %v4050 = vpop.f32.mrf.mxu0
    %4051 = vmatprep.mubr.f32.mxu0 %v3619
    %4052 = vmatmul.mubr.f32.gmra.mxu0 %v3618
    %v4053 = vpop.f32.mrf.mxu0
    %v4054 = vadd.f32 %v3829, %v4053
    %v4055 = vpop.f32.mrf.mxu0
    %4056 = vmatprep.mubr.f32.mxu0 %v3623
    %4057 = vmatmul.mubr.f32.gmra.mxu0 %v3622
    %v4058 = vpop.f32.mrf.mxu0
    %v4059 = vadd.f32 %v3834, %v4058
    %v4060 = vpop.f32.mrf.mxu0
    %4061 = vmatprep.mubr.f32.mxu0 %v3627
    %4062 = vmatmul.mubr.f32.gmra.mxu0 %v3626
    %v4063 = vpop.f32.mrf.mxu0
    %v4064 = vadd.f32 %v3839, %v4063
    %v4065 = vpop.f32.mrf.mxu0
    %4066 = vmatprep.mubr.f32.mxu0 %v3631
    %4067 = vmatmul.mubr.f32.gmra.mxu0 %v3630
    %v4068 = vpop.f32.mrf.mxu0
    %v4069 = vadd.f32 %v3844, %v4068
    %v4070 = vpop.f32.mrf.mxu0
    %4071 = vmatprep.mubr.f32.mxu0 %v3635
    %4072 = vmatmul.mubr.f32.gmra.mxu0 %v3634
    %v4073 = vpop.f32.mrf.mxu0
    %v4074 = vadd.f32 %v3849, %v4073
    %v4075 = vpop.f32.mrf.mxu0
    %4076 = vmatprep.mubr.f32.mxu0 %v3639
    %4077 = vmatmul.mubr.f32.gmra.mxu0 %v3638
    %v4078 = vpop.f32.mrf.mxu0
    %v4079 = vadd.f32 %v3854, %v4078
    %v4080 = vpop.f32.mrf.mxu0
    %4081 = vmatprep.mubr.f32.mxu0 %v3643
    %4082 = vmatmul.mubr.f32.gmra.mxu0 %v3642
    %v4083 = vpop.f32.mrf.mxu0
    %v4084 = vadd.f32 %v3859, %v4083
    %v4085 = vpop.f32.mrf.mxu0
    %4086 = vmatprep.mubr.f32.mxu0 %v3647
    %4087 = vmatmul.mubr.f32.gmra.mxu0 %v3646
    %v4088 = vpop.f32.mrf.mxu0
    %v4089 = vadd.f32 %v3864, %v4088
    %v4090 = vpop.f32.mrf.mxu0
    %4091 = vmatprep.mubr.f32.mxu0 %v3651
    %4092 = vmatmul.mubr.f32.gmra.mxu0 %v3650
    %v4093 = vpop.f32.mrf.mxu0
    %v4094 = vadd.f32 %v3869, %v4093
    %v4095 = vpop.f32.mrf.mxu0
    %4096 = vmatprep.mubr.f32.mxu0 %v3655
    %4097 = vmatmul.mubr.f32.gmra.mxu0 %v3654
    %v4098 = vpop.f32.mrf.mxu0
    %v4099 = vadd.f32 %v3874, %v4098
    %v4100 = vpop.f32.mrf.mxu0
    %4101 = vmatprep.mubr.f32.mxu0 %v3659
    %4102 = vmatmul.mubr.f32.gmra.mxu0 %v3658
    %v4103 = vpop.f32.mrf.mxu0
    %v4104 = vadd.f32 %v3879, %v4103
    %v4105 = vpop.f32.mrf.mxu0
    %4106 = vmatprep.mubr.f32.mxu0 %v3663
    %4107 = vmatmul.mubr.f32.gmra.mxu0 %v3662
    %v4108 = vpop.f32.mrf.mxu0
    %v4109 = vadd.f32 %v3884, %v4108
    %v4110 = vpop.f32.mrf.mxu0
    %4111 = vmatprep.mubr.f32.mxu0 %v3667
    %4112 = vmatmul.mubr.f32.gmra.mxu0 %v3666
    %v4113 = vpop.f32.mrf.mxu0
    %v4114 = vadd.f32 %v3889, %v4113
    %v4115 = vpop.f32.mrf.mxu0
    %4116 = vmatprep.mubr.f32.mxu0 %v3671
    %4117 = vmatmul.mubr.f32.gmra.mxu0 %v3670
    %v4118 = vpop.f32.mrf.mxu0
    %v4119 = vadd.f32 %v3894, %v4118
    %v4120 = vpop.f32.mrf.mxu0
    %4121 = vdwg.mxu0
    %v4122 = vld [vmem:[%s3] sm:$0xff]
    %v4123 = vld [vmem:[%s3 + $0x8] sm:$0xff]
    %v4124 = vld [vmem:[%s3 + $0x10] sm:$0xff]
    %v4125 = vld [vmem:[%s3 + $0x18] sm:$0xff]
    %v4126 = vld [vmem:[%s3 + $0x20] sm:$0xff]
    %v4127 = vld [vmem:[%s3 + $0x28] sm:$0xff]
    %v4128 = vld [vmem:[%s3 + $0x30] sm:$0xff]
    %v4129 = vld [vmem:[%s3 + $0x38] sm:$0xff]
    %v4130 = vld [vmem:[%s3 + $0x40] sm:$0xff]
    %v4131 = vld [vmem:[%s3 + $0x48] sm:$0xff]
    %v4132 = vld [vmem:[%s3 + $0x50] sm:$0xff]
    %v4133 = vld [vmem:[%s3 + $0x58] sm:$0xff]
    %v4134 = vld [vmem:[%s3 + $0x60] sm:$0xff]
    %v4135 = vld [vmem:[%s3 + $0x68] sm:$0xff]
    %v4136 = vld [vmem:[%s3 + $0x70] sm:$0xff]
    %v4137 = vld [vmem:[%s3 + $0x78] sm:$0xff]
    %v4138 = vld [vmem:[%s3 + $0x80] sm:$0xff]
    %v4139 = vld [vmem:[%s3 + $0x88] sm:$0xff]
    %v4140 = vld [vmem:[%s3 + $0x90] sm:$0xff]
    %v4141 = vld [vmem:[%s3 + $0x98] sm:$0xff]
    %v4142 = vld [vmem:[%s3 + $0xa0] sm:$0xff]
    %v4143 = vld [vmem:[%s3 + $0xa8] sm:$0xff]
    %v4144 = vld [vmem:[%s3 + $0xb0] sm:$0xff]
    %v4145 = vld [vmem:[%s3 + $0xb8] sm:$0xff]
    %v4146 = vld [vmem:[%s3 + $0xc0] sm:$0xff]
    %v4147 = vld [vmem:[%s3 + $0xc8] sm:$0xff]
    %v4148 = vld [vmem:[%s3 + $0xd0] sm:$0xff]
    %v4149 = vld [vmem:[%s3 + $0xd8] sm:$0xff]
    %v4150 = vld [vmem:[%s3 + $0xe0] sm:$0xff]
    %v4151 = vld [vmem:[%s3 + $0xe8] sm:$0xff]
    %v4152 = vld [vmem:[%s3 + $0xf0] sm:$0xff]
    %v4153 = vld [vmem:[%s3 + $0xf8] sm:$0xff]
    %4155 = vset.pattern.permute.xlu0 0
    %4156 = vperm.xlu0 %4155, %v4122
    %v4157 = vpop.permute.xlu0 %4156
    %4160 = vset.pattern.permute.xlu0 0
    %4161 = vperm.xlu0 %4160, %v4123
    %v4162 = vpop.permute.xlu0 %4161
    %4165 = vset.pattern.permute.xlu0 0
    %4166 = vperm.xlu0 %4165, %v4124
    %v4167 = vpop.permute.xlu0 %4166
    %4170 = vset.pattern.permute.xlu0 0
    %4171 = vperm.xlu0 %4170, %v4125
    %v4172 = vpop.permute.xlu0 %4171
    %4175 = vset.pattern.permute.xlu0 0
    %4176 = vperm.xlu0 %4175, %v4126
    %v4177 = vpop.permute.xlu0 %4176
    %4180 = vset.pattern.permute.xlu0 0
    %4181 = vperm.xlu0 %4180, %v4127
    %v4182 = vpop.permute.xlu0 %4181
    %4185 = vset.pattern.permute.xlu0 0
    %4186 = vperm.xlu0 %4185, %v4128
    %v4187 = vpop.permute.xlu0 %4186
    %4190 = vset.pattern.permute.xlu0 0
    %4191 = vperm.xlu0 %4190, %v4129
    %v4192 = vpop.permute.xlu0 %4191
    %4195 = vset.pattern.permute.xlu0 0
    %4196 = vperm.xlu0 %4195, %v4130
    %v4197 = vpop.permute.xlu0 %4196
    %4200 = vset.pattern.permute.xlu0 0
    %4201 = vperm.xlu0 %4200, %v4131
    %v4202 = vpop.permute.xlu0 %4201
    %4205 = vset.pattern.permute.xlu0 0
    %4206 = vperm.xlu0 %4205, %v4132
    %v4207 = vpop.permute.xlu0 %4206
    %4210 = vset.pattern.permute.xlu0 0
    %4211 = vperm.xlu0 %4210, %v4133
    %v4212 = vpop.permute.xlu0 %4211
    %4215 = vset.pattern.permute.xlu0 0
    %4216 = vperm.xlu0 %4215, %v4134
    %v4217 = vpop.permute.xlu0 %4216
    %4220 = vset.pattern.permute.xlu0 0
    %4221 = vperm.xlu0 %4220, %v4135
    %v4222 = vpop.permute.xlu0 %4221
    %4225 = vset.pattern.permute.xlu0 0
    %4226 = vperm.xlu0 %4225, %v4136
    %v4227 = vpop.permute.xlu0 %4226
    %4230 = vset.pattern.permute.xlu0 0
    %4231 = vperm.xlu0 %4230, %v4137
    %v4232 = vpop.permute.xlu0 %4231
    %4235 = vset.pattern.permute.xlu0 0
    %4236 = vperm.xlu0 %4235, %v4138
    %v4237 = vpop.permute.xlu0 %4236
    %4240 = vset.pattern.permute.xlu0 0
    %4241 = vperm.xlu0 %4240, %v4139
    %v4242 = vpop.permute.xlu0 %4241
    %4245 = vset.pattern.permute.xlu0 0
    %4246 = vperm.xlu0 %4245, %v4140
    %v4247 = vpop.permute.xlu0 %4246
    %4250 = vset.pattern.permute.xlu0 0
    %4251 = vperm.xlu0 %4250, %v4141
    %v4252 = vpop.permute.xlu0 %4251
    %4255 = vset.pattern.permute.xlu0 0
    %4256 = vperm.xlu0 %4255, %v4142
    %v4257 = vpop.permute.xlu0 %4256
    %4260 = vset.pattern.permute.xlu0 0
    %4261 = vperm.xlu0 %4260, %v4143
    %v4262 = vpop.permute.xlu0 %4261
    %4265 = vset.pattern.permute.xlu0 0
    %4266 = vperm.xlu0 %4265, %v4144
    %v4267 = vpop.permute.xlu0 %4266
    %4270 = vset.pattern.permute.xlu0 0
    %4271 = vperm.xlu0 %4270, %v4145
    %v4272 = vpop.permute.xlu0 %4271
    %4275 = vset.pattern.permute.xlu0 0
    %4276 = vperm.xlu0 %4275, %v4146
    %v4277 = vpop.permute.xlu0 %4276
    %4280 = vset.pattern.permute.xlu0 0
    %4281 = vperm.xlu0 %4280, %v4147
    %v4282 = vpop.permute.xlu0 %4281
    %4285 = vset.pattern.permute.xlu0 0
    %4286 = vperm.xlu0 %4285, %v4148
    %v4287 = vpop.permute.xlu0 %4286
    %4290 = vset.pattern.permute.xlu0 0
    %4291 = vperm.xlu0 %4290, %v4149
    %v4292 = vpop.permute.xlu0 %4291
    %4295 = vset.pattern.permute.xlu0 0
    %4296 = vperm.xlu0 %4295, %v4150
    %v4297 = vpop.permute.xlu0 %4296
    %4300 = vset.pattern.permute.xlu0 0
    %4301 = vperm.xlu0 %4300, %v4151
    %v4302 = vpop.permute.xlu0 %4301
    %4305 = vset.pattern.permute.xlu0 0
    %4306 = vperm.xlu0 %4305, %v4152
    %v4307 = vpop.permute.xlu0 %4306
    %4310 = vset.pattern.permute.xlu0 0
    %4311 = vperm.xlu0 %4310, %v4153
    %v4312 = vpop.permute.xlu0 %4311
    %v4314 = vmul.f32 %v3964, %v4157
    %v4315 = vmul.f32 %v3969, %v4162
    %v4316 = vmul.f32 %v3974, %v4167
    %v4317 = vmul.f32 %v3979, %v4172
    %v4318 = vmul.f32 %v3984, %v4177
    %v4319 = vmul.f32 %v3989, %v4182
    %v4320 = vmul.f32 %v3994, %v4187
    %v4321 = vmul.f32 %v3999, %v4192
    %v4322 = vmul.f32 %v4004, %v4197
    %v4323 = vmul.f32 %v4009, %v4202
    %v4324 = vmul.f32 %v4014, %v4207
    %v4325 = vmul.f32 %v4019, %v4212
    %v4326 = vmul.f32 %v4024, %v4217
    %v4327 = vmul.f32 %v4029, %v4222
    %v4328 = vmul.f32 %v4034, %v4227
    %v4329 = vmul.f32 %v4039, %v4232
    %v4330 = vmul.f32 %v4044, %v4237
    %v4331 = vmul.f32 %v4049, %v4242
    %v4332 = vmul.f32 %v4054, %v4247
    %v4333 = vmul.f32 %v4059, %v4252
    %v4334 = vmul.f32 %v4064, %v4257
    %v4335 = vmul.f32 %v4069, %v4262
    %v4336 = vmul.f32 %v4074, %v4267
    %v4337 = vmul.f32 %v4079, %v4272
    %v4338 = vmul.f32 %v4084, %v4277
    %v4339 = vmul.f32 %v4089, %v4282
    %v4340 = vmul.f32 %v4094, %v4287
    %v4341 = vmul.f32 %v4099, %v4292
    %v4342 = vmul.f32 %v4104, %v4297
    %v4343 = vmul.f32 %v4109, %v4302
    %v4344 = vmul.f32 %v4114, %v4307
    %v4345 = vmul.f32 %v4119, %v4312
    %4346 = vst [vmem:[#allocation8] sm:$0xff] %v4314
    %4347 = vst [vmem:[#allocation8 + $0x8] sm:$0xff] %v4315
    %4348 = vst [vmem:[#allocation8 + $0x10] sm:$0xff] %v4316
    %4349 = vst [vmem:[#allocation8 + $0x18] sm:$0xff] %v4317
    %4350 = vst [vmem:[#allocation8 + $0x20] sm:$0xff] %v4318
    %4351 = vst [vmem:[#allocation8 + $0x28] sm:$0xff] %v4319
    %4352 = vst [vmem:[#allocation8 + $0x30] sm:$0xff] %v4320
    %4353 = vst [vmem:[#allocation8 + $0x38] sm:$0xff] %v4321
    %4354 = vst [vmem:[#allocation8 + $0x40] sm:$0xff] %v4322
    %4355 = vst [vmem:[#allocation8 + $0x48] sm:$0xff] %v4323
    %4356 = vst [vmem:[#allocation8 + $0x50] sm:$0xff] %v4324
    %4357 = vst [vmem:[#allocation8 + $0x58] sm:$0xff] %v4325
    %4358 = vst [vmem:[#allocation8 + $0x60] sm:$0xff] %v4326
    %4359 = vst [vmem:[#allocation8 + $0x68] sm:$0xff] %v4327
    %4360 = vst [vmem:[#allocation8 + $0x70] sm:$0xff] %v4328
    %4361 = vst [vmem:[#allocation8 + $0x78] sm:$0xff] %v4329
    %4362 = vst [vmem:[#allocation8 + $0x80] sm:$0xff] %v4330
    %4363 = vst [vmem:[#allocation8 + $0x88] sm:$0xff] %v4331
    %4364 = vst [vmem:[#allocation8 + $0x90] sm:$0xff] %v4332
    %4365 = vst [vmem:[#allocation8 + $0x98] sm:$0xff] %v4333
    %4366 = vst [vmem:[#allocation8 + $0xa0] sm:$0xff] %v4334
    %4367 = vst [vmem:[#allocation8 + $0xa8] sm:$0xff] %v4335
    %4368 = vst [vmem:[#allocation8 + $0xb0] sm:$0xff] %v4336
    %4369 = vst [vmem:[#allocation8 + $0xb8] sm:$0xff] %v4337
    %4370 = vst [vmem:[#allocation8 + $0xc0] sm:$0xff] %v4338
    %4371 = vst [vmem:[#allocation8 + $0xc8] sm:$0xff] %v4339
    %4372 = vst [vmem:[#allocation8 + $0xd0] sm:$0xff] %v4340
    %4373 = vst [vmem:[#allocation8 + $0xd8] sm:$0xff] %v4341
    %4374 = vst [vmem:[#allocation8 + $0xe0] sm:$0xff] %v4342
    %4375 = vst [vmem:[#allocation8 + $0xe8] sm:$0xff] %v4343
    %4376 = vst [vmem:[#allocation8 + $0xf0] sm:$0xff] %v4344
    %4377 = vst [vmem:[#allocation8 + $0xf8] sm:$0xff] %v4345
    // Predicated region
    $region30: #{nodeflow_forward.1} parent=1 // pred_check
      _
    $region31: #{nodeflow_forward.1} parent=1 // pred_check_branch
      %4379 = sbr.rel (0) target = $region33
    $region32: #{nodeflow_forward.1} parent=1 // pred_region
      %s4381 = ssub.s32 8192, 8192
      %4382 = vsyncadd [#allocation4], %s4381
      %s4383 = sshll.u32 [#allocation7], 4
      %s4384 = int_to_ptr.vmem [resolvable:$true] %s4383
      %4389 = dma.vmem_to_hbm [thread:$0]  %s4384, 8192, %s5, [#allocation4], 128, 128, 8
    $region33: #{nodeflow_forward.1} parent=1 // pred_fallthru
      _
    // Predicated region
    $region34: #{nodeflow_forward.1} parent=1 // pred_check
      _
    $region35: #{nodeflow_forward.1} parent=1 // pred_check_branch
      %4391 = sbr.rel (0) target = $region37
    $region36: #{nodeflow_forward.1} parent=1 // pred_region
      %s4393 = ssub.s32 4096, 4096
      %4394 = vsyncadd [#allocation9], %s4393
      %s4395 = sshll.u32 [#allocation8], 4
      %s4396 = int_to_ptr.vmem [resolvable:$true] %s4395
      %4401 = dma.vmem_to_hbm [thread:$0]  %s4396, 4096, %s6, [#allocation9], 128, 128, 8
    $region37: #{nodeflow_forward.1} parent=1 // pred_fallthru
      _
    // Predicated region
    $region38: #{nodeflow_forward.1} parent=1 // pred_check
      _
    $region39: #{nodeflow_forward.1} parent=1 // pred_check_branch
      %4403 = sbr.rel (0) target = $region41
    $region40: #{nodeflow_forward.1} parent=1 // pred_region
      %4404 = dma.done [#allocation4], 8192
    $region41: #{nodeflow_forward.1} parent=1 // pred_fallthru
      _
    // Predicated region
    $region42: #{nodeflow_forward.1} parent=1 // pred_check
      _
    $region43: #{nodeflow_forward.1} parent=1 // pred_check_branch
      %4406 = sbr.rel (0) target = $region45
    $region44: #{nodeflow_forward.1} parent=1 // pred_region
      %4407 = dma.done [#allocation9], 4096
    $region45: #{nodeflow_forward.1} parent=1 // pred_fallthru
      _
    %4408 = vsyncpa [#allocation3], 1
    %4409 = vsyncpa [#allocation6], 1
    %4410 = vsyncpa [#allocation4], 1
    %4411 = vsyncpa [#allocation9], 1

</llo_original>
